<compile_context>
chip_gen: v5e
topology: v5e:2x2
jax: 0.10.0
libtpu: 0.0.40
codegen_flags: <defaults>
</compile_context>

<pallas_src>
import numpy as np
import jax
import jax.numpy as jnp
from jax.experimental import pallas as pl
from jax.experimental.pallas import tpu as pltpu

EPS = 1e-5                       # torch.nn.GroupNorm default
MXU_CONV_DTYPE = jnp.bfloat16    # conv MXU operands; flip to jnp.float32 for a tight f32 check


# ------------------------------ Pallas kernel --------------------------------
def _fused_upsample_kernel(xcat_ref, w0_ref, t_ref, b_ref, gamma_ref, beta_ref,
                           q_ref, out_ref):
    """UNET_Upsample forward for Bt batch elements in a lane-dense layout.

    xcat_ref  : (Bt, Hs, Ws*C)  channel-concat(x, skip) flattened NHWC, f32
    w0_ref    : (4, Ws*C, W*C)  stage-0 weights with concat + nearest-x2 width
                                upsample folded in (even-up, even-center,
                                odd-center, odd-down parity blocks), MXU dtype
    t_ref     : (9, W*C, W*C)   stages 1..3 Toeplitz blocks (3 per stage: kernel
                                rows kh=0,1,2; SAME width pad in the band)
    b_ref     : (4, W*C)        conv bias tiled onto the flat lane layout, f32
    gamma_ref : (4, W*C)        GroupNorm scale (tiled), f32
    beta_ref  : (4, W*C)        GroupNorm shift (tiled), f32
    q_ref     : (W*C, W*C)      group membership / (H*W*(C//G)), f32
    out_ref   : (Bt, H, W*C)
    """
    f32 = jnp.float32
    wdt = t_ref.dtype
    Bt, Hs, WsC = xcat_ref.shape
    _, H, WC = out_ref.shape
    Mlo = Bt * Hs                 # low-res rows in flight
    M = Bt * H                    # full-res rows in flight

    def gn_silu(acc, s):
        # Per-sample GroupNorm + SiLU, all in f32.  One stacked (2*Bt, WC) stat
        # matmul against the pre-scaled group-membership matrix broadcasts each
        # group's mean / E[x^2] back onto every lane of that group.
        acc3 = acc.reshape(Bt, H, WC)
        s1 = jnp.sum(acc3, axis=1)                       # (Bt, WC)
        s2 = jnp.sum(acc3 * acc3, axis=1)                # (Bt, WC)
        g = jnp.dot(jnp.concatenate([s1, s2], axis=0), q_ref[...],
                    preferred_element_type=f32)          # (2*Bt, WC)
        mean = g[:Bt].reshape(Bt, 1, WC)
        ex2 = g[Bt:].reshape(Bt, 1, WC)
        inv = jax.lax.rsqrt(ex2 - mean * mean + EPS)     # biased var, as torch
        y = (acc3 - mean) * (inv * gamma_ref[s]) + beta_ref[s]
        y = y * jax.nn.sigmoid(y)                        # SiLU (EUP)
        return y.reshape(M, WC)

    # --- stage 0: concat + nearest x2 upsample folded into the conv-0 weights -
    a0 = xcat_ref[...].reshape(Mlo, WsC)                               # f32
    rlo = jax.lax.broadcasted_iota(jnp.int32, (Mlo, 1), 0)
    up0 = jnp.where((rlo % Hs) != 0,
                    pltpu.roll(a0, 1, axis=0), 0.0).astype(wdt)        # row m-1
    dn0 = jnp.where((rlo % Hs) != Hs - 1,
                    pltpu.roll(a0, Mlo - 1, axis=0), 0.0).astype(wdt)  # row m+1
    c0 = a0.astype(wdt)
    even = (jnp.dot(up0, w0_ref[0], preferred_element_type=f32)
            + jnp.dot(c0, w0_ref[1], preferred_element_type=f32))      # rows 2m
    odd = (jnp.dot(c0, w0_ref[2], preferred_element_type=f32)
           + jnp.dot(dn0, w0_ref[3], preferred_element_type=f32))      # rows 2m+1
    # Height interleave (the x2 row upsample) as two exact 0/1 matmuls (no
    # sublane reshuffle); pe[r, m] = [r == 2m], po[r, m] = [r == 2m+1].
    ri = jax.lax.broadcasted_iota(jnp.int32, (M, Mlo), 0)
    ci = jax.lax.broadcasted_iota(jnp.int32, (M, Mlo), 1)
    pe = (ri == 2 * ci).astype(f32)
    po = (ri == 2 * ci + 1).astype(f32)
    acc = (jnp.dot(pe, even, preferred_element_type=f32)
           + jnp.dot(po, odd, preferred_element_type=f32) + b_ref[0])
    a = gn_silu(acc, 0)

    # --- stages 1..3: 3x3 SAME conv as three accumulating band matmuls --------
    rhi = jax.lax.broadcasted_iota(jnp.int32, (M, 1), 0)
    keep_up = (rhi % H) != 0           # zero halo at every sample's first row
    keep_dn = (rhi % H) != H - 1       # ... and at every sample's last row
    for s in range(3):
        up = jnp.where(keep_up, pltpu.roll(a, 1, axis=0), 0.0).astype(wdt)
        dn = jnp.where(keep_dn, pltpu.roll(a, M - 1, axis=0), 0.0).astype(wdt)
        ctr = a.astype(wdt)
        acc = (jnp.dot(up, t_ref[3 * s + 0], preferred_element_type=f32)
               + jnp.dot(ctr, t_ref[3 * s + 1], preferred_element_type=f32)
               + jnp.dot(dn, t_ref[3 * s + 2], preferred_element_type=f32)
               + b_ref[s + 1])
        a = gn_silu(acc, s + 1)

    out_ref[...] = a.reshape(Bt, H, WC).astype(out_ref.dtype)   # lane-dense store


# ------------------------------- wrapper --------------------------------------
def _pick_batch_tile(B, H, WC):
    """Largest divisor of B whose resident activation (~6 live f32 copies of a
    (H, W*C) slab per sample) stays within a few MiB of VMEM."""
    per_sample = 6 * H * WC * 4
    cap = max(1, (8 << 20) // per_sample)
    bt = 1
    for d in range(1, B + 1):
        if B % d == 0 and d <= cap:
            bt = d
    return bt


@jax.jit
def unet_upsample_forward(x, skip, params):
    """x, skip: (B, Hs, Ws, C//2) NHWC float32 -> (B, 2*Hs, 2*Ws, C)."""
    B, Hs, Ws, Ch = x.shape
    C, H, W = 2 * Ch, 2 * Hs, 2 * Ws
    WC, WsC = W * C, Ws * C
    Bt = _pick_batch_tile(B, H, WC)

    # Channel concat is pure data layout; done once in XLA so the kernel sees a
    # single lane-dense (B, Hs, Ws*C) input.  All compute is in the pallas_call.
    xcat = jnp.concatenate([x, skip], axis=-1).reshape(B, Hs, WsC)

    out_flat = pl.pallas_call(
        _fused_upsample_kernel,
        out_shape=jax.ShapeDtypeStruct((B, H, WC), jnp.float32),
        grid_spec=pltpu.PrefetchScalarGridSpec(
            num_scalar_prefetch=0,
            grid=(B // Bt,),
            in_specs=[
                pl.BlockSpec((Bt, Hs, WsC), lambda b: (b, 0, 0)),       # x||skip
                pl.BlockSpec(params["w0"].shape, lambda b: (0, 0, 0)),  # stage-0 fold
                pl.BlockSpec(params["t"].shape, lambda b: (0, 0, 0)),   # Toeplitz blocks
                pl.BlockSpec(params["b"].shape, lambda b: (0, 0)),      # bias
                pl.BlockSpec(params["gamma"].shape, lambda b: (0, 0)),  # gamma
                pl.BlockSpec(params["beta"].shape, lambda b: (0, 0)),   # beta
                pl.BlockSpec(params["q"].shape, lambda b: (0, 0)),      # group mat
            ],
            out_specs=pl.BlockSpec((Bt, H, WC), lambda b: (b, 0, 0)),
        ),
        compiler_params=pltpu.CompilerParams(
            dimension_semantics=("parallel",),     # v7x: grid steps split across TCs
            vmem_limit_bytes=32 * 1024 * 1024),
    )(xcat, params["w0"], params["t"], params["b"], params["gamma"],
      params["beta"], params["q"])

    return out_flat.reshape(B, H, W, C)            # free view: split minor dim


# ---------------------------- parameter packing -------------------------------
def _toeplitz_blocks(w, W):
    """w: (3,3,Cin,Cout) HWIO -> (3, W*Cin, W*Cout); block kh maps input row
    (i+kh-1) to output row i.  SAME width padding is encoded in the band."""
    Ci, Co = w.shape[2], w.shape[3]
    T = np.zeros((3, W * Ci, W * Co), np.float32)
    for kh in range(3):
        for kw in range(3):
            for jo in range(W):
                jin = jo + kw - 1
                if 0 <= jin < W:
                    T[kh, jin * Ci:(jin + 1) * Ci, jo * Co:(jo + 1) * Co] = w[kh, kw]
    return T


def _width_upsample_matrix(Ws, C):
    """0/1 matrix: (Ws*C, 2*Ws*C); nearest x2 width upsample of a channel-concat
    flat row (lane = j*C + c)."""
    W = 2 * Ws
    U = np.zeros((Ws * C, W * C), np.float32)
    for j in range(Ws):
        for c in range(C):
            for dj in range(2):
                U[j * C + c, (2 * j + dj) * C + c] = 1.0
    return U


def _fold_stage0(w0, Ws, C):
    """Fold width-nearest-x2-upsample into the first conv's Toeplitz blocks and
    pre-combine the height-parity taps:
      even rows 2m :  up_row(m-1) @ A + row(m) @ B
      odd  rows 2m+1: row(m) @ Cm + dn_row(m+1) @ D
    Returns (4, Ws*C, W*C) = [A, B, Cm, D]."""
    W = 2 * Ws
    U = _width_upsample_matrix(Ws, C)
    T0 = _toeplitz_blocks(w0, W)                      # (3, W*C, W*C)
    return np.stack([U @ T0[0],
                     U @ (T0[1] + T0[2]),
                     U @ (T0[0] + T0[1]),
                     U @ T0[2]])


def init_params(key, channels, Hs, Ws, groups=8):
    C = channels
    H, W = 2 * Hs, 2 * Ws
    assert C % groups == 0 and C % 2 == 0

    raw = []
    for _ in range(4):            # 2 ConvBlocks x 2 (conv + GN + SiLU) layers
        key, kcw, kcb, kg, kbt = jax.random.split(key, 5)
        w = jax.random.normal(kcw, (3, 3, C, C), jnp.float32) * 0.1     # HWIO
        b = jax.random.normal(kcb, (C,), jnp.float32) * 0.1
        gamma = 1.0 + 0.1 * jax.random.normal(kg, (C,), jnp.float32)
        beta = 0.1 * jax.random.normal(kbt, (C,), jnp.float32)
        raw.append((w, b, gamma, beta))

    w0_fold = _fold_stage0(np.asarray(raw[0][0]), Ws, C)             # (4, Ws*C, W*C)
    t = np.stack([_toeplitz_blocks(np.asarray(raw[s][0]), W)
                  for s in range(1, 4)]).reshape(9, W * C, W * C)    # (9, W*C, W*C)
    bflat = np.stack([np.tile(np.asarray(b), W) for (_, b, _, _) in raw])
    gflat = np.stack([np.tile(np.asarray(g), W) for (_, _, g, _) in raw])
    betaflat = np.stack([np.tile(np.asarray(bt), W) for (_, _, _, bt) in raw])

    per = C // groups
    gid = (np.arange(W * C) % C) // per
    Q = (gid[:, None] == gid[None, :]).astype(np.float32) / float(H * W * per)

    params = {
        "w0": jnp.asarray(w0_fold, dtype=MXU_CONV_DTYPE),   # bf16 MXU operands
        "t": jnp.asarray(t, dtype=MXU_CONV_DTYPE),
        "b": jnp.asarray(bflat),                             # f32
        "gamma": jnp.asarray(gflat),
        "beta": jnp.asarray(betaflat),
        "q": jnp.asarray(Q),                                 # f32: exact GN stats
    }
    return params, raw


# ------------------------------ JAX reference ---------------------------------
def reference_forward(x, skip, raw_stages, groups=8):
    h = jnp.concatenate([x, skip], axis=-1)
    h = jnp.repeat(jnp.repeat(h, 2, axis=1), 2, axis=2)     # nearest x2
    for (w, b, gamma, beta) in raw_stages:
        h = jax.lax.conv_general_dilated(
            h, w, (1, 1), 'SAME',
            dimension_numbers=('NHWC', 'HWIO', 'NHWC')) + b
        B, H, W, C = h.shape
        hg = h.reshape(B, H, W, groups, C // groups)
        mean = jnp.mean(hg, axis=(1, 2, 4), keepdims=True)
        var = jnp.mean((hg - mean) ** 2, axis=(1, 2, 4), keepdims=True)
        hg = (hg - mean) * jax.lax.rsqrt(var + EPS)
        h = hg.reshape(B, H, W, C) * gamma + beta
        h = h * jax.nn.sigmoid(h)
    return h


if __name__ == "__main__":
    channels, groups = 16, 8     # UNET_Upsample(16) -> GroupNorm(8, 16)
    B, Hs, Ws = 2, 8, 8          # x / skip spatial size (pre-upsample)
    Ch = channels // 2           # concat(x, skip) must yield `channels` chans

    key = jax.random.PRNGKey(0)
    kx, ks, kp = jax.random.split(key, 3)
    x = jax.random.normal(kx, (B, Hs, Ws, Ch), jnp.float32)
    skip = jax.random.normal(ks, (B, Hs, Ws, Ch), jnp.float32)
    params, raw = init_params(kp, channels, Hs, Ws, groups)

    out = jax.block_until_ready(unet_upsample_forward(x, skip, params))
    assert out.shape == (B, 2 * Hs, 2 * Ws, channels), out.shape

    ref = jax.block_until_ready(reference_forward(x, skip, raw, groups))
    err = float(jnp.max(jnp.abs(out - ref)))
    scale = float(jnp.max(jnp.abs(ref)))
    # f32 reference; bf16 MXU operands loosen the max-abs tolerance (~1% of peak).
    tol = 2e-3 if MXU_CONV_DTYPE == jnp.float32 else (2e-3 + 2e-2 * scale)
    assert err < tol, (err, tol)

    print("KERNEL_OK")
</pallas_src>

<mosaic_0001>
module attributes {stable_mosaic.version = 11 : i64} {
  func.func @_fused_upsample_kernel(%arg0: i32, %arg1: memref<2x8x128xf32, #tpu.memory_space<vmem>>, %arg2: memref<4x128x256xbf16, #tpu.memory_space<vmem>>, %arg3: memref<9x256x256xbf16, #tpu.memory_space<vmem>>, %arg4: memref<4x256xf32, #tpu.memory_space<vmem>>, %arg5: memref<4x256xf32, #tpu.memory_space<vmem>>, %arg6: memref<4x256xf32, #tpu.memory_space<vmem>>, %arg7: memref<256x256xf32, #tpu.memory_space<vmem>>, %arg8: memref<2x16x256xf32, #tpu.memory_space<vmem>>) attributes {dimension_semantics = [#tpu.dimension_semantics<parallel>], iteration_bounds = array<i64: 1>, scalar_prefetch = 0 : i64, scratch_operands = 0 : i64, tpu.core_type = #tpu.core_type<tc>, window_params = [{transform_indices = @transform_0, window_bounds = array<i64: 2, 8, 128>}, {pipeline_mode = #tpu.pipeline_mode<synchronous>, transform_indices = @transform_1, window_bounds = array<i64: 4, 128, 256>}, {pipeline_mode = #tpu.pipeline_mode<synchronous>, transform_indices = @transform_2, window_bounds = array<i64: 9, 256, 256>}, {pipeline_mode = #tpu.pipeline_mode<synchronous>, transform_indices = @transform_3, window_bounds = array<i64: 4, 256>}, {pipeline_mode = #tpu.pipeline_mode<synchronous>, transform_indices = @transform_4, window_bounds = array<i64: 4, 256>}, {pipeline_mode = #tpu.pipeline_mode<synchronous>, transform_indices = @transform_5, window_bounds = array<i64: 4, 256>}, {pipeline_mode = #tpu.pipeline_mode<synchronous>, transform_indices = @transform_6, window_bounds = array<i64: 256, 256>}, {transform_indices = @transform_7, window_bounds = array<i64: 2, 16, 256>}]} {
    %c0 = arith.constant 0 : index
    %c0_0 = arith.constant 0 : index
    %c0_1 = arith.constant 0 : index
    %0 = vector.load %arg1[%c0, %c0_0, %c0_1] : memref<2x8x128xf32, #tpu.memory_space<vmem>>, vector<2x8x128xf32>
    %1 = vector.shape_cast %0 : vector<2x8x128xf32> to vector<16x128xf32>
    %2 = tpu.iota {dimensions = array<i32: 0>} : vector<16x1xi32>
    %c8_i32 = arith.constant 8 : i32
    %c0_i32 = arith.constant 0 : i32
    %3 = arith.cmpi eq, %c8_i32, %c0_i32 : i32
    %c1_i32 = arith.constant 1 : i32
    %4 = arith.select %3, %c1_i32, %c8_i32 : i32
    %5 = vector.broadcast %4 : i32 to vector<16x1xi32>
    %6 = arith.remsi %2, %5 : vector<16x1xi32>
    %c0_i32_2 = arith.constant 0 : i32
    %7 = vector.broadcast %c0_i32_2 : i32 to vector<16x1xi32>
    %8 = arith.cmpi ne, %6, %7 : vector<16x1xi32>
    %c0_i32_3 = arith.constant 0 : i32
    %9 = vector.broadcast %c0_i32_3 : i32 to vector<16x1xi32>
    %10 = arith.cmpi slt, %6, %9 : vector<16x1xi32>
    %c0_i32_4 = arith.constant 0 : i32
    %11 = arith.cmpi slt, %4, %c0_i32_4 : i32
    %12 = vector.broadcast %11 : i1 to vector<16x1xi1>
    %13 = vector.broadcast %12 : vector<16x1xi1> to vector<16x1xi1>
    %14 = arith.xori %10, %13 : vector<16x1xi1>
    %15 = arith.andi %14, %8 : vector<16x1xi1>
    %16 = vector.broadcast %4 : i32 to vector<16x1xi32>
    %17 = arith.addi %6, %16 : vector<16x1xi32>
    %18 = arith.select %15, %17, %6 : vector<16x1xi1>, vector<16x1xi32>
    %c0_i32_5 = arith.constant 0 : i32
    %19 = vector.broadcast %c0_i32_5 : i32 to vector<16x1xi32>
    %20 = arith.cmpi ne, %18, %19 : vector<16x1xi32>
    %c1_i32_6 = arith.constant 1 : i32
    %21 = tpu.dynamic_rotate %1 by %c1_i32_6 dim 0 : vector<16x128xf32>, i32 -> vector<16x128xf32>
    %cst = arith.constant 0.000000e+00 : f32
    %22 = vector.shape_cast %20 : vector<16x1xi1> to vector<16x1xi1>
    %23 = vector.broadcast %22 : vector<16x1xi1> to vector<16x128xi1>
    %24 = vector.broadcast %cst : f32 to vector<16x128xf32>
    %25 = arith.select %23, %21, %24 : vector<16x128xi1>, vector<16x128xf32>
    %26 = arith.truncf %25 : vector<16x128xf32> to vector<16x128xbf16>
    %c8_i32_7 = arith.constant 8 : i32
    %c0_i32_8 = arith.constant 0 : i32
    %27 = arith.cmpi eq, %c8_i32_7, %c0_i32_8 : i32
    %c1_i32_9 = arith.constant 1 : i32
    %28 = arith.select %27, %c1_i32_9, %c8_i32_7 : i32
    %29 = vector.broadcast %28 : i32 to vector<16x1xi32>
    %30 = arith.remsi %2, %29 : vector<16x1xi32>
    %c0_i32_10 = arith.constant 0 : i32
    %31 = vector.broadcast %c0_i32_10 : i32 to vector<16x1xi32>
    %32 = arith.cmpi ne, %30, %31 : vector<16x1xi32>
    %c0_i32_11 = arith.constant 0 : i32
    %33 = vector.broadcast %c0_i32_11 : i32 to vector<16x1xi32>
    %34 = arith.cmpi slt, %30, %33 : vector<16x1xi32>
    %c0_i32_12 = arith.constant 0 : i32
    %35 = arith.cmpi slt, %28, %c0_i32_12 : i32
    %36 = vector.broadcast %35 : i1 to vector<16x1xi1>
    %37 = vector.broadcast %36 : vector<16x1xi1> to vector<16x1xi1>
    %38 = arith.xori %34, %37 : vector<16x1xi1>
    %39 = arith.andi %38, %32 : vector<16x1xi1>
    %40 = vector.broadcast %28 : i32 to vector<16x1xi32>
    %41 = arith.addi %30, %40 : vector<16x1xi32>
    %42 = arith.select %39, %41, %30 : vector<16x1xi1>, vector<16x1xi32>
    %c7_i32 = arith.constant 7 : i32
    %43 = vector.broadcast %c7_i32 : i32 to vector<16x1xi32>
    %44 = arith.cmpi ne, %42, %43 : vector<16x1xi32>
    %c15_i32 = arith.constant 15 : i32
    %45 = tpu.dynamic_rotate %1 by %c15_i32 dim 0 : vector<16x128xf32>, i32 -> vector<16x128xf32>
    %cst_13 = arith.constant 0.000000e+00 : f32
    %46 = vector.shape_cast %44 : vector<16x1xi1> to vector<16x1xi1>
    %47 = vector.broadcast %46 : vector<16x1xi1> to vector<16x128xi1>
    %48 = vector.broadcast %cst_13 : f32 to vector<16x128xf32>
    %49 = arith.select %47, %45, %48 : vector<16x128xi1>, vector<16x128xf32>
    %50 = arith.truncf %49 : vector<16x128xf32> to vector<16x128xbf16>
    %51 = arith.truncf %1 : vector<16x128xf32> to vector<16x128xbf16>
    %c0_14 = arith.constant 0 : index
    %c0_15 = arith.constant 0 : index
    %c0_16 = arith.constant 0 : index
    %52 = vector.load %arg2[%c0_14, %c0_15, %c0_16] : memref<4x128x256xbf16, #tpu.memory_space<vmem>>, vector<1x128x256xbf16>
    %53 = vector.shape_cast %52 : vector<1x128x256xbf16> to vector<128x256xbf16>
    %cst_17 = arith.constant dense<0.000000e+00> : vector<16x256xf32>
    %54 = tpu.matmul %26, %53, %cst_17 {dimension_numbers = #tpu.dot_dimension_numbers<[1], [0], [0], [1], [0, 0, 1, 1], [], []>} : vector<16x128xbf16>, vector<128x256xbf16>, vector<16x256xf32> -> vector<16x256xf32>
    %c1 = arith.constant 1 : index
    %c0_18 = arith.constant 0 : index
    %c0_19 = arith.constant 0 : index
    %55 = vector.load %arg2[%c1, %c0_18, %c0_19] : memref<4x128x256xbf16, #tpu.memory_space<vmem>>, vector<1x128x256xbf16>
    %56 = vector.shape_cast %55 : vector<1x128x256xbf16> to vector<128x256xbf16>
    %cst_20 = arith.constant dense<0.000000e+00> : vector<16x256xf32>
    %57 = tpu.matmul %51, %56, %cst_20 {dimension_numbers = #tpu.dot_dimension_numbers<[1], [0], [0], [1], [0, 0, 1, 1], [], []>} : vector<16x128xbf16>, vector<128x256xbf16>, vector<16x256xf32> -> vector<16x256xf32>
    %58 = arith.addf %54, %57 : vector<16x256xf32>
    %c2 = arith.constant 2 : index
    %c0_21 = arith.constant 0 : index
    %c0_22 = arith.constant 0 : index
    %59 = vector.load %arg2[%c2, %c0_21, %c0_22] : memref<4x128x256xbf16, #tpu.memory_space<vmem>>, vector<1x128x256xbf16>
    %60 = vector.shape_cast %59 : vector<1x128x256xbf16> to vector<128x256xbf16>
    %cst_23 = arith.constant dense<0.000000e+00> : vector<16x256xf32>
    %61 = tpu.matmul %51, %60, %cst_23 {dimension_numbers = #tpu.dot_dimension_numbers<[1], [0], [0], [1], [0, 0, 1, 1], [], []>} : vector<16x128xbf16>, vector<128x256xbf16>, vector<16x256xf32> -> vector<16x256xf32>
    %c3 = arith.constant 3 : index
    %c0_24 = arith.constant 0 : index
    %c0_25 = arith.constant 0 : index
    %62 = vector.load %arg2[%c3, %c0_24, %c0_25] : memref<4x128x256xbf16, #tpu.memory_space<vmem>>, vector<1x128x256xbf16>
    %63 = vector.shape_cast %62 : vector<1x128x256xbf16> to vector<128x256xbf16>
    %cst_26 = arith.constant dense<0.000000e+00> : vector<16x256xf32>
    %64 = tpu.matmul %50, %63, %cst_26 {dimension_numbers = #tpu.dot_dimension_numbers<[1], [0], [0], [1], [0, 0, 1, 1], [], []>} : vector<16x128xbf16>, vector<128x256xbf16>, vector<16x256xf32> -> vector<16x256xf32>
    %65 = arith.addf %61, %64 : vector<16x256xf32>
    %66 = tpu.iota {dimensions = array<i32: 0>} : vector<32x16xi32>
    %67 = tpu.iota {dimensions = array<i32: 1>} : vector<32x16xi32>
    %c2_i32 = arith.constant 2 : i32
    %68 = vector.broadcast %c2_i32 : i32 to vector<32x16xi32>
    %69 = arith.muli %68, %67 : vector<32x16xi32>
    %70 = arith.cmpi eq, %66, %69 : vector<32x16xi32>
    %71 = arith.extui %70 : vector<32x16xi1> to vector<32x16xi32>
    %72 = arith.sitofp %71 : vector<32x16xi32> to vector<32x16xf32>
    %c2_i32_27 = arith.constant 2 : i32
    %73 = vector.broadcast %c2_i32_27 : i32 to vector<32x16xi32>
    %74 = arith.muli %73, %67 : vector<32x16xi32>
    %c1_i32_28 = arith.constant 1 : i32
    %75 = vector.broadcast %c1_i32_28 : i32 to vector<32x16xi32>
    %76 = arith.addi %74, %75 : vector<32x16xi32>
    %77 = arith.cmpi eq, %66, %76 : vector<32x16xi32>
    %78 = arith.extui %77 : vector<32x16xi1> to vector<32x16xi32>
    %79 = arith.sitofp %78 : vector<32x16xi32> to vector<32x16xf32>
    %cst_29 = arith.constant dense<0.000000e+00> : vector<32x256xf32>
    %80 = tpu.matmul %72, %58, %cst_29 {dimension_numbers = #tpu.dot_dimension_numbers<[1], [0], [0], [1], [0, 0, 1, 1], [], []>} : vector<32x16xf32>, vector<16x256xf32>, vector<32x256xf32> -> vector<32x256xf32>
    %cst_30 = arith.constant dense<0.000000e+00> : vector<32x256xf32>
    %81 = tpu.matmul %79, %65, %cst_30 {dimension_numbers = #tpu.dot_dimension_numbers<[1], [0], [0], [1], [0, 0, 1, 1], [], []>} : vector<32x16xf32>, vector<16x256xf32>, vector<32x256xf32> -> vector<32x256xf32>
    %82 = arith.addf %80, %81 : vector<32x256xf32>
    %c0_31 = arith.constant 0 : index
    %c0_32 = arith.constant 0 : index
    %83 = vector.load %arg4[%c0_31, %c0_32] : memref<4x256xf32, #tpu.memory_space<vmem>>, vector<1x256xf32>
    %84 = vector.shape_cast %83 : vector<1x256xf32> to vector<256xf32>
    %85 = vector.shape_cast %84 : vector<256xf32> to vector<1x256xf32>
    %86 = vector.broadcast %85 : vector<1x256xf32> to vector<32x256xf32>
    %87 = arith.addf %82, %86 : vector<32x256xf32>
    %88 = vector.shape_cast %87 : vector<32x256xf32> to vector<2x16x256xf32>
    %cst_33 = arith.constant dense<0.000000e+00> : vector<2x256xf32>
    %89 = vector.multi_reduction <add>, %88, %cst_33 [1] : vector<2x16x256xf32> to vector<2x256xf32>
    %90 = arith.mulf %88, %88 : vector<2x16x256xf32>
    %cst_34 = arith.constant dense<0.000000e+00> : vector<2x256xf32>
    %91 = vector.multi_reduction <add>, %90, %cst_34 [1] : vector<2x16x256xf32> to vector<2x256xf32>
    %92 = tpu.concatenate %89, %91 in 0 : vector<2x256xf32>, vector<2x256xf32> -> vector<4x256xf32>
    %c0_35 = arith.constant 0 : index
    %c0_36 = arith.constant 0 : index
    %93 = vector.load %arg7[%c0_35, %c0_36] : memref<256x256xf32, #tpu.memory_space<vmem>>, vector<256x256xf32>
    %cst_37 = arith.constant dense<0.000000e+00> : vector<4x256xf32>
    %94 = tpu.matmul %92, %93, %cst_37 {dimension_numbers = #tpu.dot_dimension_numbers<[1], [0], [0], [1], [0, 0, 1, 1], [], []>} : vector<4x256xf32>, vector<256x256xf32>, vector<4x256xf32> -> vector<4x256xf32>
    %95 = vector.extract_strided_slice %94 {offsets = [0, 0], sizes = [2, 256], strides = [1, 1]} : vector<4x256xf32> to vector<2x256xf32>
    %96 = vector.shape_cast %95 : vector<2x256xf32> to vector<2x1x256xf32>
    %97 = vector.extract_strided_slice %94 {offsets = [2, 0], sizes = [2, 256], strides = [1, 1]} : vector<4x256xf32> to vector<2x256xf32>
    %98 = vector.shape_cast %97 : vector<2x256xf32> to vector<2x1x256xf32>
    %99 = arith.mulf %96, %96 : vector<2x1x256xf32>
    %100 = arith.subf %98, %99 : vector<2x1x256xf32>
    %cst_38 = arith.constant 9.99999974E-6 : f32
    %101 = vector.broadcast %cst_38 : f32 to vector<2x1x256xf32>
    %102 = arith.addf %100, %101 : vector<2x1x256xf32>
    %103 = math.rsqrt %102 : vector<2x1x256xf32>
    %104 = vector.broadcast %96 : vector<2x1x256xf32> to vector<2x16x256xf32>
    %105 = arith.subf %88, %104 : vector<2x16x256xf32>
    %c0_39 = arith.constant 0 : index
    %c0_40 = arith.constant 0 : index
    %106 = vector.load %arg5[%c0_39, %c0_40] : memref<4x256xf32, #tpu.memory_space<vmem>>, vector<1x256xf32>
    %107 = vector.shape_cast %106 : vector<1x256xf32> to vector<256xf32>
    %108 = vector.shape_cast %107 : vector<256xf32> to vector<1x1x256xf32>
    %109 = vector.broadcast %108 : vector<1x1x256xf32> to vector<2x1x256xf32>
    %110 = arith.mulf %103, %109 : vector<2x1x256xf32>
    %111 = vector.broadcast %110 : vector<2x1x256xf32> to vector<2x16x256xf32>
    %112 = arith.mulf %105, %111 : vector<2x16x256xf32>
    %c0_41 = arith.constant 0 : index
    %c0_42 = arith.constant 0 : index
    %113 = vector.load %arg6[%c0_41, %c0_42] : memref<4x256xf32, #tpu.memory_space<vmem>>, vector<1x256xf32>
    %114 = vector.shape_cast %113 : vector<1x256xf32> to vector<256xf32>
    %115 = vector.shape_cast %114 : vector<256xf32> to vector<1x1x256xf32>
    %116 = vector.broadcast %115 : vector<1x1x256xf32> to vector<2x16x256xf32>
    %117 = arith.addf %112, %116 : vector<2x16x256xf32>
    %118 = arith.negf %117 : vector<2x16x256xf32>
    %119 = math.exp %118 : vector<2x16x256xf32>
    %cst_43 = arith.constant 1.000000e+00 : f32
    %120 = vector.broadcast %cst_43 : f32 to vector<2x16x256xf32>
    %121 = arith.addf %120, %119 : vector<2x16x256xf32>
    %122 = arith.divf %120, %121 : vector<2x16x256xf32>
    %123 = arith.mulf %117, %122 : vector<2x16x256xf32>
    %124 = vector.shape_cast %123 : vector<2x16x256xf32> to vector<32x256xf32>
    %125 = tpu.iota {dimensions = array<i32: 0>} : vector<32x1xi32>
    %c16_i32 = arith.constant 16 : i32
    %c0_i32_44 = arith.constant 0 : i32
    %126 = arith.cmpi eq, %c16_i32, %c0_i32_44 : i32
    %c1_i32_45 = arith.constant 1 : i32
    %127 = arith.select %126, %c1_i32_45, %c16_i32 : i32
    %128 = vector.broadcast %127 : i32 to vector<32x1xi32>
    %129 = arith.remsi %125, %128 : vector<32x1xi32>
    %c0_i32_46 = arith.constant 0 : i32
    %130 = vector.broadcast %c0_i32_46 : i32 to vector<32x1xi32>
    %131 = arith.cmpi ne, %129, %130 : vector<32x1xi32>
    %c0_i32_47 = arith.constant 0 : i32
    %132 = vector.broadcast %c0_i32_47 : i32 to vector<32x1xi32>
    %133 = arith.cmpi slt, %129, %132 : vector<32x1xi32>
    %c0_i32_48 = arith.constant 0 : i32
    %134 = arith.cmpi slt, %127, %c0_i32_48 : i32
    %135 = vector.broadcast %134 : i1 to vector<32x1xi1>
    %136 = vector.broadcast %135 : vector<32x1xi1> to vector<32x1xi1>
    %137 = arith.xori %133, %136 : vector<32x1xi1>
    %138 = arith.andi %137, %131 : vector<32x1xi1>
    %139 = vector.broadcast %127 : i32 to vector<32x1xi32>
    %140 = arith.addi %129, %139 : vector<32x1xi32>
    %141 = arith.select %138, %140, %129 : vector<32x1xi1>, vector<32x1xi32>
    %c0_i32_49 = arith.constant 0 : i32
    %142 = vector.broadcast %c0_i32_49 : i32 to vector<32x1xi32>
    %143 = arith.cmpi ne, %141, %142 : vector<32x1xi32>
    %c16_i32_50 = arith.constant 16 : i32
    %c0_i32_51 = arith.constant 0 : i32
    %144 = arith.cmpi eq, %c16_i32_50, %c0_i32_51 : i32
    %c1_i32_52 = arith.constant 1 : i32
    %145 = arith.select %144, %c1_i32_52, %c16_i32_50 : i32
    %146 = vector.broadcast %145 : i32 to vector<32x1xi32>
    %147 = arith.remsi %125, %146 : vector<32x1xi32>
    %c0_i32_53 = arith.constant 0 : i32
    %148 = vector.broadcast %c0_i32_53 : i32 to vector<32x1xi32>
    %149 = arith.cmpi ne, %147, %148 : vector<32x1xi32>
    %c0_i32_54 = arith.constant 0 : i32
    %150 = vector.broadcast %c0_i32_54 : i32 to vector<32x1xi32>
    %151 = arith.cmpi slt, %147, %150 : vector<32x1xi32>
    %c0_i32_55 = arith.constant 0 : i32
    %152 = arith.cmpi slt, %145, %c0_i32_55 : i32
    %153 = vector.broadcast %152 : i1 to vector<32x1xi1>
    %154 = vector.broadcast %153 : vector<32x1xi1> to vector<32x1xi1>
    %155 = arith.xori %151, %154 : vector<32x1xi1>
    %156 = arith.andi %155, %149 : vector<32x1xi1>
    %157 = vector.broadcast %145 : i32 to vector<32x1xi32>
    %158 = arith.addi %147, %157 : vector<32x1xi32>
    %159 = arith.select %156, %158, %147 : vector<32x1xi1>, vector<32x1xi32>
    %c15_i32_56 = arith.constant 15 : i32
    %160 = vector.broadcast %c15_i32_56 : i32 to vector<32x1xi32>
    %161 = arith.cmpi ne, %159, %160 : vector<32x1xi32>
    %c1_i32_57 = arith.constant 1 : i32
    %162 = tpu.dynamic_rotate %124 by %c1_i32_57 dim 0 : vector<32x256xf32>, i32 -> vector<32x256xf32>
    %cst_58 = arith.constant 0.000000e+00 : f32
    %163 = vector.shape_cast %143 : vector<32x1xi1> to vector<32x1xi1>
    %164 = vector.broadcast %163 : vector<32x1xi1> to vector<32x256xi1>
    %165 = vector.broadcast %cst_58 : f32 to vector<32x256xf32>
    %166 = arith.select %164, %162, %165 : vector<32x256xi1>, vector<32x256xf32>
    %167 = arith.truncf %166 : vector<32x256xf32> to vector<32x256xbf16>
    %c31_i32 = arith.constant 31 : i32
    %168 = tpu.dynamic_rotate %124 by %c31_i32 dim 0 : vector<32x256xf32>, i32 -> vector<32x256xf32>
    %cst_59 = arith.constant 0.000000e+00 : f32
    %169 = vector.shape_cast %161 : vector<32x1xi1> to vector<32x1xi1>
    %170 = vector.broadcast %169 : vector<32x1xi1> to vector<32x256xi1>
    %171 = vector.broadcast %cst_59 : f32 to vector<32x256xf32>
    %172 = arith.select %170, %168, %171 : vector<32x256xi1>, vector<32x256xf32>
    %173 = arith.truncf %172 : vector<32x256xf32> to vector<32x256xbf16>
    %174 = arith.truncf %124 : vector<32x256xf32> to vector<32x256xbf16>
    %c0_60 = arith.constant 0 : index
    %c0_61 = arith.constant 0 : index
    %c0_62 = arith.constant 0 : index
    %175 = vector.load %arg3[%c0_60, %c0_61, %c0_62] : memref<9x256x256xbf16, #tpu.memory_space<vmem>>, vector<1x256x256xbf16>
    %176 = vector.shape_cast %175 : vector<1x256x256xbf16> to vector<256x256xbf16>
    %cst_63 = arith.constant dense<0.000000e+00> : vector<32x256xf32>
    %177 = tpu.matmul %167, %176, %cst_63 {dimension_numbers = #tpu.dot_dimension_numbers<[1], [0], [0], [1], [0, 0, 1, 1], [], []>} : vector<32x256xbf16>, vector<256x256xbf16>, vector<32x256xf32> -> vector<32x256xf32>
    %c1_64 = arith.constant 1 : index
    %c0_65 = arith.constant 0 : index
    %c0_66 = arith.constant 0 : index
    %178 = vector.load %arg3[%c1_64, %c0_65, %c0_66] : memref<9x256x256xbf16, #tpu.memory_space<vmem>>, vector<1x256x256xbf16>
    %179 = vector.shape_cast %178 : vector<1x256x256xbf16> to vector<256x256xbf16>
    %cst_67 = arith.constant dense<0.000000e+00> : vector<32x256xf32>
    %180 = tpu.matmul %174, %179, %cst_67 {dimension_numbers = #tpu.dot_dimension_numbers<[1], [0], [0], [1], [0, 0, 1, 1], [], []>} : vector<32x256xbf16>, vector<256x256xbf16>, vector<32x256xf32> -> vector<32x256xf32>
    %181 = arith.addf %177, %180 : vector<32x256xf32>
    %c2_68 = arith.constant 2 : index
    %c0_69 = arith.constant 0 : index
    %c0_70 = arith.constant 0 : index
    %182 = vector.load %arg3[%c2_68, %c0_69, %c0_70] : memref<9x256x256xbf16, #tpu.memory_space<vmem>>, vector<1x256x256xbf16>
    %183 = vector.shape_cast %182 : vector<1x256x256xbf16> to vector<256x256xbf16>
    %cst_71 = arith.constant dense<0.000000e+00> : vector<32x256xf32>
    %184 = tpu.matmul %173, %183, %cst_71 {dimension_numbers = #tpu.dot_dimension_numbers<[1], [0], [0], [1], [0, 0, 1, 1], [], []>} : vector<32x256xbf16>, vector<256x256xbf16>, vector<32x256xf32> -> vector<32x256xf32>
    %185 = arith.addf %181, %184 : vector<32x256xf32>
    %c1_72 = arith.constant 1 : index
    %c0_73 = arith.constant 0 : index
    %186 = vector.load %arg4[%c1_72, %c0_73] : memref<4x256xf32, #tpu.memory_space<vmem>>, vector<1x256xf32>
    %187 = vector.shape_cast %186 : vector<1x256xf32> to vector<256xf32>
    %188 = vector.shape_cast %187 : vector<256xf32> to vector<1x256xf32>
    %189 = vector.broadcast %188 : vector<1x256xf32> to vector<32x256xf32>
    %190 = arith.addf %185, %189 : vector<32x256xf32>
    %191 = vector.shape_cast %190 : vector<32x256xf32> to vector<2x16x256xf32>
    %cst_74 = arith.constant dense<0.000000e+00> : vector<2x256xf32>
    %192 = vector.multi_reduction <add>, %191, %cst_74 [1] : vector<2x16x256xf32> to vector<2x256xf32>
    %193 = arith.mulf %191, %191 : vector<2x16x256xf32>
    %cst_75 = arith.constant dense<0.000000e+00> : vector<2x256xf32>
    %194 = vector.multi_reduction <add>, %193, %cst_75 [1] : vector<2x16x256xf32> to vector<2x256xf32>
    %195 = tpu.concatenate %192, %194 in 0 : vector<2x256xf32>, vector<2x256xf32> -> vector<4x256xf32>
    %c0_76 = arith.constant 0 : index
    %c0_77 = arith.constant 0 : index
    %196 = vector.load %arg7[%c0_76, %c0_77] : memref<256x256xf32, #tpu.memory_space<vmem>>, vector<256x256xf32>
    %cst_78 = arith.constant dense<0.000000e+00> : vector<4x256xf32>
    %197 = tpu.matmul %195, %196, %cst_78 {dimension_numbers = #tpu.dot_dimension_numbers<[1], [0], [0], [1], [0, 0, 1, 1], [], []>} : vector<4x256xf32>, vector<256x256xf32>, vector<4x256xf32> -> vector<4x256xf32>
    %198 = vector.extract_strided_slice %197 {offsets = [0, 0], sizes = [2, 256], strides = [1, 1]} : vector<4x256xf32> to vector<2x256xf32>
    %199 = vector.shape_cast %198 : vector<2x256xf32> to vector<2x1x256xf32>
    %200 = vector.extract_strided_slice %197 {offsets = [2, 0], sizes = [2, 256], strides = [1, 1]} : vector<4x256xf32> to vector<2x256xf32>
    %201 = vector.shape_cast %200 : vector<2x256xf32> to vector<2x1x256xf32>
    %202 = arith.mulf %199, %199 : vector<2x1x256xf32>
    %203 = arith.subf %201, %202 : vector<2x1x256xf32>
    %cst_79 = arith.constant 9.99999974E-6 : f32
    %204 = vector.broadcast %cst_79 : f32 to vector<2x1x256xf32>
    %205 = arith.addf %203, %204 : vector<2x1x256xf32>
    %206 = math.rsqrt %205 : vector<2x1x256xf32>
    %207 = vector.broadcast %199 : vector<2x1x256xf32> to vector<2x16x256xf32>
    %208 = arith.subf %191, %207 : vector<2x16x256xf32>
    %c1_80 = arith.constant 1 : index
    %c0_81 = arith.constant 0 : index
    %209 = vector.load %arg5[%c1_80, %c0_81] : memref<4x256xf32, #tpu.memory_space<vmem>>, vector<1x256xf32>
    %210 = vector.shape_cast %209 : vector<1x256xf32> to vector<256xf32>
    %211 = vector.shape_cast %210 : vector<256xf32> to vector<1x1x256xf32>
    %212 = vector.broadcast %211 : vector<1x1x256xf32> to vector<2x1x256xf32>
    %213 = arith.mulf %206, %212 : vector<2x1x256xf32>
    %214 = vector.broadcast %213 : vector<2x1x256xf32> to vector<2x16x256xf32>
    %215 = arith.mulf %208, %214 : vector<2x16x256xf32>
    %c1_82 = arith.constant 1 : index
    %c0_83 = arith.constant 0 : index
    %216 = vector.load %arg6[%c1_82, %c0_83] : memref<4x256xf32, #tpu.memory_space<vmem>>, vector<1x256xf32>
    %217 = vector.shape_cast %216 : vector<1x256xf32> to vector<256xf32>
    %218 = vector.shape_cast %217 : vector<256xf32> to vector<1x1x256xf32>
    %219 = vector.broadcast %218 : vector<1x1x256xf32> to vector<2x16x256xf32>
    %220 = arith.addf %215, %219 : vector<2x16x256xf32>
    %221 = arith.negf %220 : vector<2x16x256xf32>
    %222 = math.exp %221 : vector<2x16x256xf32>
    %cst_84 = arith.constant 1.000000e+00 : f32
    %223 = vector.broadcast %cst_84 : f32 to vector<2x16x256xf32>
    %224 = arith.addf %223, %222 : vector<2x16x256xf32>
    %225 = arith.divf %223, %224 : vector<2x16x256xf32>
    %226 = arith.mulf %220, %225 : vector<2x16x256xf32>
    %227 = vector.shape_cast %226 : vector<2x16x256xf32> to vector<32x256xf32>
    %c1_i32_85 = arith.constant 1 : i32
    %228 = tpu.dynamic_rotate %227 by %c1_i32_85 dim 0 : vector<32x256xf32>, i32 -> vector<32x256xf32>
    %cst_86 = arith.constant 0.000000e+00 : f32
    %229 = vector.shape_cast %143 : vector<32x1xi1> to vector<32x1xi1>
    %230 = vector.broadcast %229 : vector<32x1xi1> to vector<32x256xi1>
    %231 = vector.broadcast %cst_86 : f32 to vector<32x256xf32>
    %232 = arith.select %230, %228, %231 : vector<32x256xi1>, vector<32x256xf32>
    %233 = arith.truncf %232 : vector<32x256xf32> to vector<32x256xbf16>
    %c31_i32_87 = arith.constant 31 : i32
    %234 = tpu.dynamic_rotate %227 by %c31_i32_87 dim 0 : vector<32x256xf32>, i32 -> vector<32x256xf32>
    %cst_88 = arith.constant 0.000000e+00 : f32
    %235 = vector.shape_cast %161 : vector<32x1xi1> to vector<32x1xi1>
    %236 = vector.broadcast %235 : vector<32x1xi1> to vector<32x256xi1>
    %237 = vector.broadcast %cst_88 : f32 to vector<32x256xf32>
    %238 = arith.select %236, %234, %237 : vector<32x256xi1>, vector<32x256xf32>
    %239 = arith.truncf %238 : vector<32x256xf32> to vector<32x256xbf16>
    %240 = arith.truncf %227 : vector<32x256xf32> to vector<32x256xbf16>
    %c3_89 = arith.constant 3 : index
    %c0_90 = arith.constant 0 : index
    %c0_91 = arith.constant 0 : index
    %241 = vector.load %arg3[%c3_89, %c0_90, %c0_91] : memref<9x256x256xbf16, #tpu.memory_space<vmem>>, vector<1x256x256xbf16>
    %242 = vector.shape_cast %241 : vector<1x256x256xbf16> to vector<256x256xbf16>
    %cst_92 = arith.constant dense<0.000000e+00> : vector<32x256xf32>
    %243 = tpu.matmul %233, %242, %cst_92 {dimension_numbers = #tpu.dot_dimension_numbers<[1], [0], [0], [1], [0, 0, 1, 1], [], []>} : vector<32x256xbf16>, vector<256x256xbf16>, vector<32x256xf32> -> vector<32x256xf32>
    %c4 = arith.constant 4 : index
    %c0_93 = arith.constant 0 : index
    %c0_94 = arith.constant 0 : index
    %244 = vector.load %arg3[%c4, %c0_93, %c0_94] : memref<9x256x256xbf16, #tpu.memory_space<vmem>>, vector<1x256x256xbf16>
    %245 = vector.shape_cast %244 : vector<1x256x256xbf16> to vector<256x256xbf16>
    %cst_95 = arith.constant dense<0.000000e+00> : vector<32x256xf32>
    %246 = tpu.matmul %240, %245, %cst_95 {dimension_numbers = #tpu.dot_dimension_numbers<[1], [0], [0], [1], [0, 0, 1, 1], [], []>} : vector<32x256xbf16>, vector<256x256xbf16>, vector<32x256xf32> -> vector<32x256xf32>
    %247 = arith.addf %243, %246 : vector<32x256xf32>
    %c5 = arith.constant 5 : index
    %c0_96 = arith.constant 0 : index
    %c0_97 = arith.constant 0 : index
    %248 = vector.load %arg3[%c5, %c0_96, %c0_97] : memref<9x256x256xbf16, #tpu.memory_space<vmem>>, vector<1x256x256xbf16>
    %249 = vector.shape_cast %248 : vector<1x256x256xbf16> to vector<256x256xbf16>
    %cst_98 = arith.constant dense<0.000000e+00> : vector<32x256xf32>
    %250 = tpu.matmul %239, %249, %cst_98 {dimension_numbers = #tpu.dot_dimension_numbers<[1], [0], [0], [1], [0, 0, 1, 1], [], []>} : vector<32x256xbf16>, vector<256x256xbf16>, vector<32x256xf32> -> vector<32x256xf32>
    %251 = arith.addf %247, %250 : vector<32x256xf32>
    %c2_99 = arith.constant 2 : index
    %c0_100 = arith.constant 0 : index
    %252 = vector.load %arg4[%c2_99, %c0_100] : memref<4x256xf32, #tpu.memory_space<vmem>>, vector<1x256xf32>
    %253 = vector.shape_cast %252 : vector<1x256xf32> to vector<256xf32>
    %254 = vector.shape_cast %253 : vector<256xf32> to vector<1x256xf32>
    %255 = vector.broadcast %254 : vector<1x256xf32> to vector<32x256xf32>
    %256 = arith.addf %251, %255 : vector<32x256xf32>
    %257 = vector.shape_cast %256 : vector<32x256xf32> to vector<2x16x256xf32>
    %cst_101 = arith.constant dense<0.000000e+00> : vector<2x256xf32>
    %258 = vector.multi_reduction <add>, %257, %cst_101 [1] : vector<2x16x256xf32> to vector<2x256xf32>
    %259 = arith.mulf %257, %257 : vector<2x16x256xf32>
    %cst_102 = arith.constant dense<0.000000e+00> : vector<2x256xf32>
    %260 = vector.multi_reduction <add>, %259, %cst_102 [1] : vector<2x16x256xf32> to vector<2x256xf32>
    %261 = tpu.concatenate %258, %260 in 0 : vector<2x256xf32>, vector<2x256xf32> -> vector<4x256xf32>
    %c0_103 = arith.constant 0 : index
    %c0_104 = arith.constant 0 : index
    %262 = vector.load %arg7[%c0_103, %c0_104] : memref<256x256xf32, #tpu.memory_space<vmem>>, vector<256x256xf32>
    %cst_105 = arith.constant dense<0.000000e+00> : vector<4x256xf32>
    %263 = tpu.matmul %261, %262, %cst_105 {dimension_numbers = #tpu.dot_dimension_numbers<[1], [0], [0], [1], [0, 0, 1, 1], [], []>} : vector<4x256xf32>, vector<256x256xf32>, vector<4x256xf32> -> vector<4x256xf32>
    %264 = vector.extract_strided_slice %263 {offsets = [0, 0], sizes = [2, 256], strides = [1, 1]} : vector<4x256xf32> to vector<2x256xf32>
    %265 = vector.shape_cast %264 : vector<2x256xf32> to vector<2x1x256xf32>
    %266 = vector.extract_strided_slice %263 {offsets = [2, 0], sizes = [2, 256], strides = [1, 1]} : vector<4x256xf32> to vector<2x256xf32>
    %267 = vector.shape_cast %266 : vector<2x256xf32> to vector<2x1x256xf32>
    %268 = arith.mulf %265, %265 : vector<2x1x256xf32>
    %269 = arith.subf %267, %268 : vector<2x1x256xf32>
    %cst_106 = arith.constant 9.99999974E-6 : f32
    %270 = vector.broadcast %cst_106 : f32 to vector<2x1x256xf32>
    %271 = arith.addf %269, %270 : vector<2x1x256xf32>
    %272 = math.rsqrt %271 : vector<2x1x256xf32>
    %273 = vector.broadcast %265 : vector<2x1x256xf32> to vector<2x16x256xf32>
    %274 = arith.subf %257, %273 : vector<2x16x256xf32>
    %c2_107 = arith.constant 2 : index
    %c0_108 = arith.constant 0 : index
    %275 = vector.load %arg5[%c2_107, %c0_108] : memref<4x256xf32, #tpu.memory_space<vmem>>, vector<1x256xf32>
    %276 = vector.shape_cast %275 : vector<1x256xf32> to vector<256xf32>
    %277 = vector.shape_cast %276 : vector<256xf32> to vector<1x1x256xf32>
    %278 = vector.broadcast %277 : vector<1x1x256xf32> to vector<2x1x256xf32>
    %279 = arith.mulf %272, %278 : vector<2x1x256xf32>
    %280 = vector.broadcast %279 : vector<2x1x256xf32> to vector<2x16x256xf32>
    %281 = arith.mulf %274, %280 : vector<2x16x256xf32>
    %c2_109 = arith.constant 2 : index
    %c0_110 = arith.constant 0 : index
    %282 = vector.load %arg6[%c2_109, %c0_110] : memref<4x256xf32, #tpu.memory_space<vmem>>, vector<1x256xf32>
    %283 = vector.shape_cast %282 : vector<1x256xf32> to vector<256xf32>
    %284 = vector.shape_cast %283 : vector<256xf32> to vector<1x1x256xf32>
    %285 = vector.broadcast %284 : vector<1x1x256xf32> to vector<2x16x256xf32>
    %286 = arith.addf %281, %285 : vector<2x16x256xf32>
    %287 = arith.negf %286 : vector<2x16x256xf32>
    %288 = math.exp %287 : vector<2x16x256xf32>
    %cst_111 = arith.constant 1.000000e+00 : f32
    %289 = vector.broadcast %cst_111 : f32 to vector<2x16x256xf32>
    %290 = arith.addf %289, %288 : vector<2x16x256xf32>
    %291 = arith.divf %289, %290 : vector<2x16x256xf32>
    %292 = arith.mulf %286, %291 : vector<2x16x256xf32>
    %293 = vector.shape_cast %292 : vector<2x16x256xf32> to vector<32x256xf32>
    %c1_i32_112 = arith.constant 1 : i32
    %294 = tpu.dynamic_rotate %293 by %c1_i32_112 dim 0 : vector<32x256xf32>, i32 -> vector<32x256xf32>
    %cst_113 = arith.constant 0.000000e+00 : f32
    %295 = vector.shape_cast %143 : vector<32x1xi1> to vector<32x1xi1>
    %296 = vector.broadcast %295 : vector<32x1xi1> to vector<32x256xi1>
    %297 = vector.broadcast %cst_113 : f32 to vector<32x256xf32>
    %298 = arith.select %296, %294, %297 : vector<32x256xi1>, vector<32x256xf32>
    %299 = arith.truncf %298 : vector<32x256xf32> to vector<32x256xbf16>
    %c31_i32_114 = arith.constant 31 : i32
    %300 = tpu.dynamic_rotate %293 by %c31_i32_114 dim 0 : vector<32x256xf32>, i32 -> vector<32x256xf32>
    %cst_115 = arith.constant 0.000000e+00 : f32
    %301 = vector.shape_cast %161 : vector<32x1xi1> to vector<32x1xi1>
    %302 = vector.broadcast %301 : vector<32x1xi1> to vector<32x256xi1>
    %303 = vector.broadcast %cst_115 : f32 to vector<32x256xf32>
    %304 = arith.select %302, %300, %303 : vector<32x256xi1>, vector<32x256xf32>
    %305 = arith.truncf %304 : vector<32x256xf32> to vector<32x256xbf16>
    %306 = arith.truncf %293 : vector<32x256xf32> to vector<32x256xbf16>
    %c6 = arith.constant 6 : index
    %c0_116 = arith.constant 0 : index
    %c0_117 = arith.constant 0 : index
    %307 = vector.load %arg3[%c6, %c0_116, %c0_117] : memref<9x256x256xbf16, #tpu.memory_space<vmem>>, vector<1x256x256xbf16>
    %308 = vector.shape_cast %307 : vector<1x256x256xbf16> to vector<256x256xbf16>
    %cst_118 = arith.constant dense<0.000000e+00> : vector<32x256xf32>
    %309 = tpu.matmul %299, %308, %cst_118 {dimension_numbers = #tpu.dot_dimension_numbers<[1], [0], [0], [1], [0, 0, 1, 1], [], []>} : vector<32x256xbf16>, vector<256x256xbf16>, vector<32x256xf32> -> vector<32x256xf32>
    %c7 = arith.constant 7 : index
    %c0_119 = arith.constant 0 : index
    %c0_120 = arith.constant 0 : index
    %310 = vector.load %arg3[%c7, %c0_119, %c0_120] : memref<9x256x256xbf16, #tpu.memory_space<vmem>>, vector<1x256x256xbf16>
    %311 = vector.shape_cast %310 : vector<1x256x256xbf16> to vector<256x256xbf16>
    %cst_121 = arith.constant dense<0.000000e+00> : vector<32x256xf32>
    %312 = tpu.matmul %306, %311, %cst_121 {dimension_numbers = #tpu.dot_dimension_numbers<[1], [0], [0], [1], [0, 0, 1, 1], [], []>} : vector<32x256xbf16>, vector<256x256xbf16>, vector<32x256xf32> -> vector<32x256xf32>
    %313 = arith.addf %309, %312 : vector<32x256xf32>
    %c8 = arith.constant 8 : index
    %c0_122 = arith.constant 0 : index
    %c0_123 = arith.constant 0 : index
    %314 = vector.load %arg3[%c8, %c0_122, %c0_123] : memref<9x256x256xbf16, #tpu.memory_space<vmem>>, vector<1x256x256xbf16>
    %315 = vector.shape_cast %314 : vector<1x256x256xbf16> to vector<256x256xbf16>
    %cst_124 = arith.constant dense<0.000000e+00> : vector<32x256xf32>
    %316 = tpu.matmul %305, %315, %cst_124 {dimension_numbers = #tpu.dot_dimension_numbers<[1], [0], [0], [1], [0, 0, 1, 1], [], []>} : vector<32x256xbf16>, vector<256x256xbf16>, vector<32x256xf32> -> vector<32x256xf32>
    %317 = arith.addf %313, %316 : vector<32x256xf32>
    %c3_125 = arith.constant 3 : index
    %c0_126 = arith.constant 0 : index
    %318 = vector.load %arg4[%c3_125, %c0_126] : memref<4x256xf32, #tpu.memory_space<vmem>>, vector<1x256xf32>
    %319 = vector.shape_cast %318 : vector<1x256xf32> to vector<256xf32>
    %320 = vector.shape_cast %319 : vector<256xf32> to vector<1x256xf32>
    %321 = vector.broadcast %320 : vector<1x256xf32> to vector<32x256xf32>
    %322 = arith.addf %317, %321 : vector<32x256xf32>
    %323 = vector.shape_cast %322 : vector<32x256xf32> to vector<2x16x256xf32>
    %cst_127 = arith.constant dense<0.000000e+00> : vector<2x256xf32>
    %324 = vector.multi_reduction <add>, %323, %cst_127 [1] : vector<2x16x256xf32> to vector<2x256xf32>
    %325 = arith.mulf %323, %323 : vector<2x16x256xf32>
    %cst_128 = arith.constant dense<0.000000e+00> : vector<2x256xf32>
    %326 = vector.multi_reduction <add>, %325, %cst_128 [1] : vector<2x16x256xf32> to vector<2x256xf32>
    %327 = tpu.concatenate %324, %326 in 0 : vector<2x256xf32>, vector<2x256xf32> -> vector<4x256xf32>
    %c0_129 = arith.constant 0 : index
    %c0_130 = arith.constant 0 : index
    %328 = vector.load %arg7[%c0_129, %c0_130] : memref<256x256xf32, #tpu.memory_space<vmem>>, vector<256x256xf32>
    %cst_131 = arith.constant dense<0.000000e+00> : vector<4x256xf32>
    %329 = tpu.matmul %327, %328, %cst_131 {dimension_numbers = #tpu.dot_dimension_numbers<[1], [0], [0], [1], [0, 0, 1, 1], [], []>} : vector<4x256xf32>, vector<256x256xf32>, vector<4x256xf32> -> vector<4x256xf32>
    %330 = vector.extract_strided_slice %329 {offsets = [0, 0], sizes = [2, 256], strides = [1, 1]} : vector<4x256xf32> to vector<2x256xf32>
    %331 = vector.shape_cast %330 : vector<2x256xf32> to vector<2x1x256xf32>
    %332 = vector.extract_strided_slice %329 {offsets = [2, 0], sizes = [2, 256], strides = [1, 1]} : vector<4x256xf32> to vector<2x256xf32>
    %333 = vector.shape_cast %332 : vector<2x256xf32> to vector<2x1x256xf32>
    %334 = arith.mulf %331, %331 : vector<2x1x256xf32>
    %335 = arith.subf %333, %334 : vector<2x1x256xf32>
    %cst_132 = arith.constant 9.99999974E-6 : f32
    %336 = vector.broadcast %cst_132 : f32 to vector<2x1x256xf32>
    %337 = arith.addf %335, %336 : vector<2x1x256xf32>
    %338 = math.rsqrt %337 : vector<2x1x256xf32>
    %339 = vector.broadcast %331 : vector<2x1x256xf32> to vector<2x16x256xf32>
    %340 = arith.subf %323, %339 : vector<2x16x256xf32>
    %c3_133 = arith.constant 3 : index
    %c0_134 = arith.constant 0 : index
    %341 = vector.load %arg5[%c3_133, %c0_134] : memref<4x256xf32, #tpu.memory_space<vmem>>, vector<1x256xf32>
    %342 = vector.shape_cast %341 : vector<1x256xf32> to vector<256xf32>
    %343 = vector.shape_cast %342 : vector<256xf32> to vector<1x1x256xf32>
    %344 = vector.broadcast %343 : vector<1x1x256xf32> to vector<2x1x256xf32>
    %345 = arith.mulf %338, %344 : vector<2x1x256xf32>
    %346 = vector.broadcast %345 : vector<2x1x256xf32> to vector<2x16x256xf32>
    %347 = arith.mulf %340, %346 : vector<2x16x256xf32>
    %c3_135 = arith.constant 3 : index
    %c0_136 = arith.constant 0 : index
    %348 = vector.load %arg6[%c3_135, %c0_136] : memref<4x256xf32, #tpu.memory_space<vmem>>, vector<1x256xf32>
    %349 = vector.shape_cast %348 : vector<1x256xf32> to vector<256xf32>
    %350 = vector.shape_cast %349 : vector<256xf32> to vector<1x1x256xf32>
    %351 = vector.broadcast %350 : vector<1x1x256xf32> to vector<2x16x256xf32>
    %352 = arith.addf %347, %351 : vector<2x16x256xf32>
    %353 = arith.negf %352 : vector<2x16x256xf32>
    %354 = math.exp %353 : vector<2x16x256xf32>
    %cst_137 = arith.constant 1.000000e+00 : f32
    %355 = vector.broadcast %cst_137 : f32 to vector<2x16x256xf32>
    %356 = arith.addf %355, %354 : vector<2x16x256xf32>
    %357 = arith.divf %355, %356 : vector<2x16x256xf32>
    %358 = arith.mulf %352, %357 : vector<2x16x256xf32>
    %359 = vector.shape_cast %358 : vector<2x16x256xf32> to vector<32x256xf32>
    %360 = vector.shape_cast %359 : vector<32x256xf32> to vector<2x16x256xf32>
    %c0_138 = arith.constant 0 : index
    %c0_139 = arith.constant 0 : index
    %c0_140 = arith.constant 0 : index
    %361 = vector.load %arg8[%c0_138, %c0_139, %c0_140] : memref<2x16x256xf32, #tpu.memory_space<vmem>>, vector<2x16x256xf32>
    tpu.vector_store %arg8[%c0_138, %c0_139, %c0_140], %360 {strides = array<i32>} : memref<2x16x256xf32, #tpu.memory_space<vmem>>, vector<2x16x256xf32>,
    return
  }
  func.func @transform_0(%arg0: i32) -> (i32, i32, i32) {
    %c0_i32 = arith.constant 0 : i32
    %c0_i32_0 = arith.constant 0 : i32
    %c0_i32_1 = arith.constant 0 : i32
    return %arg0, %c0_i32, %c0_i32_0 : i32, i32, i32
  }
  func.func @transform_1(%arg0: i32) -> (i32, i32, i32) {
    %c0_i32 = arith.constant 0 : i32
    %c0_i32_0 = arith.constant 0 : i32
    %c0_i32_1 = arith.constant 0 : i32
    %c0_i32_2 = arith.constant 0 : i32
    return %c0_i32, %c0_i32_0, %c0_i32_1 : i32, i32, i32
  }
  func.func @transform_2(%arg0: i32) -> (i32, i32, i32) {
    %c0_i32 = arith.constant 0 : i32
    %c0_i32_0 = arith.constant 0 : i32
    %c0_i32_1 = arith.constant 0 : i32
    %c0_i32_2 = arith.constant 0 : i32
    return %c0_i32, %c0_i32_0, %c0_i32_1 : i32, i32, i32
  }
  func.func @transform_3(%arg0: i32) -> (i32, i32) {
    %c0_i32 = arith.constant 0 : i32
    %c0_i32_0 = arith.constant 0 : i32
    %c0_i32_1 = arith.constant 0 : i32
    return %c0_i32, %c0_i32_0 : i32, i32
  }
  func.func @transform_4(%arg0: i32) -> (i32, i32) {
    %c0_i32 = arith.constant 0 : i32
    %c0_i32_0 = arith.constant 0 : i32
    %c0_i32_1 = arith.constant 0 : i32
    return %c0_i32, %c0_i32_0 : i32, i32
  }
  func.func @transform_5(%arg0: i32) -> (i32, i32) {
    %c0_i32 = arith.constant 0 : i32
    %c0_i32_0 = arith.constant 0 : i32
    %c0_i32_1 = arith.constant 0 : i32
    return %c0_i32, %c0_i32_0 : i32, i32
  }
  func.func @transform_6(%arg0: i32) -> (i32, i32) {
    %c0_i32 = arith.constant 0 : i32
    %c0_i32_0 = arith.constant 0 : i32
    %c0_i32_1 = arith.constant 0 : i32
    return %c0_i32, %c0_i32_0 : i32, i32
  }
  func.func @transform_7(%arg0: i32) -> (i32, i32, i32) {
    %c0_i32 = arith.constant 0 : i32
    %c0_i32_0 = arith.constant 0 : i32
    %c0_i32_1 = arith.constant 0 : i32
    return %arg0, %c0_i32, %c0_i32_0 : i32, i32, i32
  }
}

</mosaic_0001>

<llo_original>
// kernel: unet_upsample_forward.1
$region0: #{unet_upsample_forward.1}
  #allocation0 [shape = 'u32[]', space=smem, size = 0x4, offset = 0x4, fixed_abs, tag = 'smem constant byte address 0x4 - core index']
  #allocation1 [shape = 'u32[72,128]{1,0:T(1,128)}', space=vmem, size = 0x9000, scoped, tag = 'internal scratch']
  %s0 = inlined_call_operand.vmem [shape: f32[2,8,128], index: 0, kind: input, shape index: {}]
  %s1 = inlined_call_operand.hbm [shape: bf16[4,128,256], index: 1, kind: input, shape index: {}]
  %s2 = inlined_call_operand.hbm [shape: bf16[9,256,256], index: 2, kind: input, shape index: {}]
  %s3 = inlined_call_operand.hbm [shape: f32[4,256], index: 3, kind: input, shape index: {}]
  %s4 = inlined_call_operand.hbm [shape: f32[4,256], index: 4, kind: input, shape index: {}]
  %s5 = inlined_call_operand.hbm [shape: f32[4,256], index: 5, kind: input, shape index: {}]
  %s6 = inlined_call_operand.hbm [shape: f32[256,256], index: 6, kind: input, shape index: {}]
  %s7 = inlined_call_operand.vmem [shape: f32[2,16,256], index: 7, kind: output, shape index: {}]
  %s8 = sld [smem:[#allocation0]]
  $region62: #{unet_upsample_forward.1} parent=0
    _
  %s10 = ssub.s32 1, %s8
  %s11 = scalar_select 0, %s10, %s8
  $region1: #{unet_upsample_forward.1} parent=0
    #allocation2 [shape = 'u8[262144]{0}', space=vmem, size = 0x40000, scoped, tag = 'input window, operand 1, single buffered']
    #allocation3 [shape = 's32[1]{0}', space=sflag, size = 0x4, scoped, tag = 'scoped memory for unet_upsample_forward.1']
    #allocation4 [shape = 'u8[1179648]{0}', space=vmem, size = 0x120000, scoped, tag = 'input window, operand 2, single buffered']
    #allocation5 [shape = 's32[1]{0}', space=sflag, size = 0x4, scoped, tag = 'scoped memory for unet_upsample_forward.1']
    #allocation6 [shape = 'u8[4096]{0}', space=vmem, size = 0x1000, scoped, tag = 'input window, operand 3, single buffered']
    #allocation7 [shape = 'u8[4096]{0}', space=vmem, size = 0x1000, scoped, tag = 'input window, operand 4, single buffered']
    #allocation8 [shape = 's32[1]{0}', space=sflag, size = 0x4, scoped, tag = 'scoped memory for unet_upsample_forward.1']
    #allocation9 [shape = 'u8[4096]{0}', space=vmem, size = 0x1000, scoped, tag = 'input window, operand 5, single buffered']
    #allocation10 [shape = 'u8[262144]{0}', space=vmem, size = 0x40000, scoped, tag = 'input window, operand 6, single buffered']
    #allocation11 [shape = 's32[1]{0}', space=sflag, size = 0x4, scoped, tag = 'scoped memory for unet_upsample_forward.1']
    %12 = vsyncpa [#allocation3], 0
    %13 = vsyncpa [#allocation5], 0
    %14 = vsyncpa [#allocation8], 0
    %15 = vsyncpa [#allocation11], 0
    // Predicated region
    $region2: #{unet_upsample_forward.1} parent=1 // pred_check
      _
    $region3: #{unet_upsample_forward.1} parent=1 // pred_check_branch
      %17 = sbr.rel (0) target = $region5
    $region4: #{unet_upsample_forward.1} parent=1 // pred_region
      _
    $region5: #{unet_upsample_forward.1} parent=1 // pred_fallthru
      _
    // Predicated region
    $region6: #{unet_upsample_forward.1} parent=1 // pred_check
      _
    $region7: #{unet_upsample_forward.1} parent=1 // pred_check_branch
      %19 = sbr.rel (0) target = $region9
    $region8: #{unet_upsample_forward.1} parent=1 // pred_region
      %21 = vsyncadd [#allocation3], 0
      %s22 = sshll.u32 %s1, 4
      %s23 = int_to_ptr.hbm [resolvable:$true] %s22
      %s24 = sshll.u32 [#allocation2], 4
      %s25 = int_to_ptr.vmem [resolvable:$true] %s24
      %30 = dma.hbm_to_vmem [thread:$0]  %s23, 8192, %s25, [#allocation3], 128, 128, 8
    $region9: #{unet_upsample_forward.1} parent=1 // pred_fallthru
      _
    // Predicated region
    $region10: #{unet_upsample_forward.1} parent=1 // pred_check
      _
    $region11: #{unet_upsample_forward.1} parent=1 // pred_check_branch
      %32 = sbr.rel (0) target = $region13
    $region12: #{unet_upsample_forward.1} parent=1 // pred_region
      %34 = vsyncadd [#allocation5], 0
      %s35 = sshll.u32 %s2, 4
      %s36 = int_to_ptr.hbm [resolvable:$true] %s35
      %s37 = sshll.u32 [#allocation4], 4
      %s38 = int_to_ptr.vmem [resolvable:$true] %s37
      %43 = dma.hbm_to_vmem [thread:$0]  %s36, 36864, %s38, [#allocation5], 128, 128, 8
    $region13: #{unet_upsample_forward.1} parent=1 // pred_fallthru
      _
    // Predicated region
    $region14: #{unet_upsample_forward.1} parent=1 // pred_check
      _
    $region15: #{unet_upsample_forward.1} parent=1 // pred_check_branch
      %45 = sbr.rel (0) target = $region17
    $region16: #{unet_upsample_forward.1} parent=1 // pred_region
      %47 = vsyncadd [#allocation5], 0
      %s49 = sshll.u32 %s3, 4
      %s50 = int_to_ptr.hbm [resolvable:$true] %s49
      %s51 = sshll.u32 [#allocation6], 4
      %s52 = int_to_ptr.vmem [resolvable:$true] %s51
      %54 = dma.hbm_to_vmem [thread:$0]  %s50, 128, %s52, [#allocation5]
    $region17: #{unet_upsample_forward.1} parent=1 // pred_fallthru
      _
    // Predicated region
    $region18: #{unet_upsample_forward.1} parent=1 // pred_check
      _
    $region19: #{unet_upsample_forward.1} parent=1 // pred_check_branch
      %56 = sbr.rel (0) target = $region21
    $region20: #{unet_upsample_forward.1} parent=1 // pred_region
      %58 = vsyncadd [#allocation8], 0
      %s60 = sshll.u32 %s4, 4
      %s61 = int_to_ptr.hbm [resolvable:$true] %s60
      %s62 = sshll.u32 [#allocation7], 4
      %s63 = int_to_ptr.vmem [resolvable:$true] %s62
      %65 = dma.hbm_to_vmem [thread:$0]  %s61, 128, %s63, [#allocation8]
    $region21: #{unet_upsample_forward.1} parent=1 // pred_fallthru
      _
    // Predicated region
    $region22: #{unet_upsample_forward.1} parent=1 // pred_check
      _
    $region23: #{unet_upsample_forward.1} parent=1 // pred_check_branch
      %67 = sbr.rel (0) target = $region25
    $region24: #{unet_upsample_forward.1} parent=1 // pred_region
      %69 = vsyncadd [#allocation8], 0
      %s71 = sshll.u32 %s5, 4
      %s72 = int_to_ptr.hbm [resolvable:$true] %s71
      %s73 = sshll.u32 [#allocation9], 4
      %s74 = int_to_ptr.vmem [resolvable:$true] %s73
      %76 = dma.hbm_to_vmem [thread:$0]  %s72, 128, %s74, [#allocation8]
    $region25: #{unet_upsample_forward.1} parent=1 // pred_fallthru
      _
    // Predicated region
    $region26: #{unet_upsample_forward.1} parent=1 // pred_check
      _
    $region27: #{unet_upsample_forward.1} parent=1 // pred_check_branch
      %78 = sbr.rel (0) target = $region29
    $region28: #{unet_upsample_forward.1} parent=1 // pred_region
      %80 = vsyncadd [#allocation11], 0
      %s81 = sshll.u32 %s6, 4
      %s82 = int_to_ptr.hbm [resolvable:$true] %s81
      %s83 = sshll.u32 [#allocation10], 4
      %s84 = int_to_ptr.vmem [resolvable:$true] %s83
      %89 = dma.hbm_to_vmem [thread:$0]  %s82, 8192, %s84, [#allocation11], 256, 256, 16
    $region29: #{unet_upsample_forward.1} parent=1 // pred_fallthru
      _
    // Predicated region
    $region30: #{unet_upsample_forward.1} parent=1 // pred_check
      _
    $region31: #{unet_upsample_forward.1} parent=1 // pred_check_branch
      %91 = sbr.rel (0) target = $region33
    $region32: #{unet_upsample_forward.1} parent=1 // pred_region
      %93 = dma.done [#allocation3], 8192
    $region33: #{unet_upsample_forward.1} parent=1 // pred_fallthru
      _
    // Predicated region
    $region34: #{unet_upsample_forward.1} parent=1 // pred_check
      _
    $region35: #{unet_upsample_forward.1} parent=1 // pred_check_branch
      %95 = sbr.rel (0) target = $region37
    $region36: #{unet_upsample_forward.1} parent=1 // pred_region
      %97 = dma.done [#allocation5], 36864
    $region37: #{unet_upsample_forward.1} parent=1 // pred_fallthru
      _
    // Predicated region
    $region38: #{unet_upsample_forward.1} parent=1 // pred_check
      _
    $region39: #{unet_upsample_forward.1} parent=1 // pred_check_branch
      %99 = sbr.rel (0) target = $region41
    $region40: #{unet_upsample_forward.1} parent=1 // pred_region
      %101 = dma.done [#allocation5], 128
    $region41: #{unet_upsample_forward.1} parent=1 // pred_fallthru
      _
    // Predicated region
    $region42: #{unet_upsample_forward.1} parent=1 // pred_check
      _
    $region43: #{unet_upsample_forward.1} parent=1 // pred_check_branch
      %103 = sbr.rel (0) target = $region45
    $region44: #{unet_upsample_forward.1} parent=1 // pred_region
      %105 = dma.done [#allocation8], 128
    $region45: #{unet_upsample_forward.1} parent=1 // pred_fallthru
      _
    // Predicated region
    $region46: #{unet_upsample_forward.1} parent=1 // pred_check
      _
    $region47: #{unet_upsample_forward.1} parent=1 // pred_check_branch
      %107 = sbr.rel (0) target = $region49
    $region48: #{unet_upsample_forward.1} parent=1 // pred_region
      %109 = dma.done [#allocation8], 128
    $region49: #{unet_upsample_forward.1} parent=1 // pred_fallthru
      _
    // Predicated region
    $region50: #{unet_upsample_forward.1} parent=1 // pred_check
      _
    $region51: #{unet_upsample_forward.1} parent=1 // pred_check_branch
      %111 = sbr.rel (0) target = $region53
    $region52: #{unet_upsample_forward.1} parent=1 // pred_region
      %113 = dma.done [#allocation11], 8192
    $region53: #{unet_upsample_forward.1} parent=1 // pred_fallthru
      _
    %v114 = vld [vmem:[%s0] sm:$0xff]
    %v115 = vld [vmem:[%s0 + $0x8] sm:$0xff]
    %v116 = vlaneseq
    %v117 = vshrl.u32 %v116, 7
    %v118 = vadd.s32 %v117, 8
    %vm119 = vcmp.lt.s32.totalorder %v117, 0
    %v120 = vsub.s32 0, %v117
    %v121 = vsel %vm119, %v120, %v117
    %v122 = vshrl.u32 %v121, 3
    %v123 = vand.u32 %v121, 7
    %v124 = vsub.s32 0, %v123
    %v125 = vsel %vm119, %v124, %v123
    %vm126 = vcmp.lt.s32.totalorder %v118, 0
    %v127 = vsub.s32 0, %v118
    %v128 = vsel %vm126, %v127, %v118
    %v129 = vshrl.u32 %v128, 3
    %v130 = vand.u32 %v128, 7
    %v131 = vsub.s32 0, %v130
    %v132 = vsel %vm126, %v131, %v130
    %vm133 = vcmp.ne.s32.totalorder %v125, 0
    %vm134 = vcmp.ne.s32.totalorder %v132, 0
    %vm135 = vcmp.lt.s32.totalorder %v125, 0
    %vm136 = vcmp.lt.s32.totalorder %v132, 0
    %vm137 = vmand %vm135, %vm133
    %vm138 = vmand %vm136, %vm134
    %v139 = vadd.s32 %v125, 8
    %v140 = vadd.s32 %v132, 8
    %v141 = vsel %vm137, %v139, %v125
    %v142 = vsel %vm138, %v140, %v132
    %vm143 = vcmp.ne.s32.totalorder %v141, 0
    %vm144 = vcmp.ne.s32.totalorder %v142, 0
    %v145 = vrot.slane %v114, 7
    %v146 = vrot.slane %v115, 7
    %vm147 = vcmp.lt.s32.totalorder %v117, 1
    %v148 = vsel %vm147, %v145, %v146
    %v149 = vsel %vm147, %v146, %v145
    %v150 = vsel %vm143, 1, 0
    %v151 = vsel %vm144, 1, 0
    %vm152 = vcmp.eq.s32.totalorder %v150, 1
    %vm153 = vcmp.eq.s32.totalorder %v151, 1
    %v154 = vsel %vm152, %v149, 0.0
    %v155 = vsel %vm153, %v148, 0.0
    %v156 = vpack.c.bf16 %v155, %v154
    %vm157 = vcmp.ne.s32.totalorder %v141, 7
    %vm158 = vcmp.ne.s32.totalorder %v142, 7
    %v159 = vrot.slane %v114, 1
    %v160 = vrot.slane %v115, 1
    %vm161 = vcmp.lt.s32.totalorder %v117, 7
    %v162 = vsel %vm161, %v159, %v160
    %v163 = vsel %vm161, %v160, %v159
    %v164 = vsel %vm157, 1, 0
    %v165 = vsel %vm158, 1, 0
    %vm166 = vcmp.eq.s32.totalorder %v164, 1
    %vm167 = vcmp.eq.s32.totalorder %v165, 1
    %v168 = vsel %vm166, %v162, 0.0
    %v169 = vsel %vm167, %v163, 0.0
    %v170 = vpack.c.bf16 %v169, %v168
    %v171 = vpack.c.bf16 %v115, %v114
    %v172 = vld [vmem:[#allocation2] sm:$0xff]
    %v173 = vld [vmem:[#allocation2 + $0x8] sm:$0xff]
    %v174 = vld [vmem:[#allocation2 + $0x10] sm:$0xff]
    %v175 = vld [vmem:[#allocation2 + $0x18] sm:$0xff]
    %v176 = vld [vmem:[#allocation2 + $0x20] sm:$0xff]
    %v177 = vld [vmem:[#allocation2 + $0x28] sm:$0xff]
    %v178 = vld [vmem:[#allocation2 + $0x30] sm:$0xff]
    %v179 = vld [vmem:[#allocation2 + $0x38] sm:$0xff]
    %v180 = vld [vmem:[#allocation2 + $0x40] sm:$0xff]
    %v181 = vld [vmem:[#allocation2 + $0x48] sm:$0xff]
    %v182 = vld [vmem:[#allocation2 + $0x50] sm:$0xff]
    %v183 = vld [vmem:[#allocation2 + $0x58] sm:$0xff]
    %v184 = vld [vmem:[#allocation2 + $0x60] sm:$0xff]
    %v185 = vld [vmem:[#allocation2 + $0x68] sm:$0xff]
    %v186 = vld [vmem:[#allocation2 + $0x70] sm:$0xff]
    %v187 = vld [vmem:[#allocation2 + $0x78] sm:$0xff]
    %s188 = scalar_lea.vmem [#allocation2], 128
    %v189 = vld [vmem:[%s188] sm:$0xff]
    %v190 = vld [vmem:[%s188 + $0x8] sm:$0xff]
    %v191 = vld [vmem:[%s188 + $0x10] sm:$0xff]
    %v192 = vld [vmem:[%s188 + $0x18] sm:$0xff]
    %v193 = vld [vmem:[%s188 + $0x20] sm:$0xff]
    %v194 = vld [vmem:[%s188 + $0x28] sm:$0xff]
    %v195 = vld [vmem:[%s188 + $0x30] sm:$0xff]
    %v196 = vld [vmem:[%s188 + $0x38] sm:$0xff]
    %v197 = vld [vmem:[%s188 + $0x40] sm:$0xff]
    %v198 = vld [vmem:[%s188 + $0x48] sm:$0xff]
    %v199 = vld [vmem:[%s188 + $0x50] sm:$0xff]
    %v200 = vld [vmem:[%s188 + $0x58] sm:$0xff]
    %v201 = vld [vmem:[%s188 + $0x60] sm:$0xff]
    %v202 = vld [vmem:[%s188 + $0x68] sm:$0xff]
    %v203 = vld [vmem:[%s188 + $0x70] sm:$0xff]
    %v204 = vld [vmem:[%s188 + $0x78] sm:$0xff]
    %v221 = vunpack.c.l.b16 %v189
    %v222 = vunpack.c.h.b16 %v189
    %v223 = vunpack.c.l.b16 %v190
    %v224 = vunpack.c.h.b16 %v190
    %v225 = vunpack.c.l.b16 %v191
    %v226 = vunpack.c.h.b16 %v191
    %v227 = vunpack.c.l.b16 %v192
    %v228 = vunpack.c.h.b16 %v192
    %v229 = vunpack.c.l.b16 %v193
    %v230 = vunpack.c.h.b16 %v193
    %v231 = vunpack.c.l.b16 %v194
    %v232 = vunpack.c.h.b16 %v194
    %v233 = vunpack.c.l.b16 %v195
    %v234 = vunpack.c.h.b16 %v195
    %v235 = vunpack.c.l.b16 %v196
    %v236 = vunpack.c.h.b16 %v196
    %v237 = vunpack.c.l.b16 %v197
    %v238 = vunpack.c.h.b16 %v197
    %v239 = vunpack.c.l.b16 %v198
    %v240 = vunpack.c.h.b16 %v198
    %v241 = vunpack.c.l.b16 %v199
    %v242 = vunpack.c.h.b16 %v199
    %v243 = vunpack.c.l.b16 %v200
    %v244 = vunpack.c.h.b16 %v200
    %v245 = vunpack.c.l.b16 %v201
    %v246 = vunpack.c.h.b16 %v201
    %v247 = vunpack.c.l.b16 %v202
    %v248 = vunpack.c.h.b16 %v202
    %v249 = vunpack.c.l.b16 %v203
    %v250 = vunpack.c.h.b16 %v203
    %v251 = vunpack.c.l.b16 %v204
    %v252 = vunpack.c.h.b16 %v204
    %v253 = vpack.c.b16 %v223, %v221
    %v254 = vpack.c.b16 %v224, %v222
    %v255 = vpack.c.b16 %v227, %v225
    %v256 = vpack.c.b16 %v228, %v226
    %v257 = vpack.c.b16 %v231, %v229
    %v258 = vpack.c.b16 %v232, %v230
    %v259 = vpack.c.b16 %v235, %v233
    %v260 = vpack.c.b16 %v236, %v234
    %v261 = vpack.c.b16 %v239, %v237
    %v262 = vpack.c.b16 %v240, %v238
    %v263 = vpack.c.b16 %v243, %v241
    %v264 = vpack.c.b16 %v244, %v242
    %v265 = vpack.c.b16 %v247, %v245
    %v266 = vpack.c.b16 %v248, %v246
    %v267 = vpack.c.b16 %v251, %v249
    %v268 = vpack.c.b16 %v252, %v250
    %285 = vmatpush.bf16.msra.mxu0 %v267
    %286 = vmatpush.bf16.msra.mxu0 %v265
    %287 = vmatpush.bf16.msra.mxu0 %v263
    %288 = vmatpush.bf16.msra.mxu0 %v261
    %289 = vmatpush.bf16.msra.mxu0 %v259
    %290 = vmatpush.bf16.msra.mxu0 %v257
    %291 = vmatpush.bf16.msra.mxu0 %v255
    %292 = vmatpush.bf16.msra.mxu0 %v253
    %293 = vmatmul.bf16.gmra.mxu0 %v171
    %v294 = vpop.f32.mrf.mxu0
    %v295 = vadd.f32 0.0, %v294
    %v296 = vpop.f32.mrf.mxu0
    %v297 = vadd.f32 0.0, %v296
    %298 = vdwg.mxu0
    %299 = vmatpush.bf16.msra.mxu0 %v268
    %300 = vmatpush.bf16.msra.mxu0 %v266
    %301 = vmatpush.bf16.msra.mxu0 %v264
    %302 = vmatpush.bf16.msra.mxu0 %v262
    %303 = vmatpush.bf16.msra.mxu0 %v260
    %304 = vmatpush.bf16.msra.mxu0 %v258
    %305 = vmatpush.bf16.msra.mxu0 %v256
    %306 = vmatpush.bf16.msra.mxu0 %v254
    %307 = vmatmul.bf16.gmra.mxu0 %v171
    %v308 = vpop.f32.mrf.mxu0
    %v309 = vadd.f32 0.0, %v308
    %v310 = vpop.f32.mrf.mxu0
    %v311 = vadd.f32 0.0, %v310
    %312 = vdwg.mxu0
    %v329 = vunpack.c.l.b16 %v172
    %v330 = vunpack.c.h.b16 %v172
    %v331 = vunpack.c.l.b16 %v173
    %v332 = vunpack.c.h.b16 %v173
    %v333 = vunpack.c.l.b16 %v174
    %v334 = vunpack.c.h.b16 %v174
    %v335 = vunpack.c.l.b16 %v175
    %v336 = vunpack.c.h.b16 %v175
    %v337 = vunpack.c.l.b16 %v176
    %v338 = vunpack.c.h.b16 %v176
    %v339 = vunpack.c.l.b16 %v177
    %v340 = vunpack.c.h.b16 %v177
    %v341 = vunpack.c.l.b16 %v178
    %v342 = vunpack.c.h.b16 %v178
    %v343 = vunpack.c.l.b16 %v179
    %v344 = vunpack.c.h.b16 %v179
    %v345 = vunpack.c.l.b16 %v180
    %v346 = vunpack.c.h.b16 %v180
    %v347 = vunpack.c.l.b16 %v181
    %v348 = vunpack.c.h.b16 %v181
    %v349 = vunpack.c.l.b16 %v182
    %v350 = vunpack.c.h.b16 %v182
    %v351 = vunpack.c.l.b16 %v183
    %v352 = vunpack.c.h.b16 %v183
    %v353 = vunpack.c.l.b16 %v184
    %v354 = vunpack.c.h.b16 %v184
    %v355 = vunpack.c.l.b16 %v185
    %v356 = vunpack.c.h.b16 %v185
    %v357 = vunpack.c.l.b16 %v186
    %v358 = vunpack.c.h.b16 %v186
    %v359 = vunpack.c.l.b16 %v187
    %v360 = vunpack.c.h.b16 %v187
    %v361 = vpack.c.b16 %v331, %v329
    %v362 = vpack.c.b16 %v332, %v330
    %v363 = vpack.c.b16 %v335, %v333
    %v364 = vpack.c.b16 %v336, %v334
    %v365 = vpack.c.b16 %v339, %v337
    %v366 = vpack.c.b16 %v340, %v338
    %v367 = vpack.c.b16 %v343, %v341
    %v368 = vpack.c.b16 %v344, %v342
    %v369 = vpack.c.b16 %v347, %v345
    %v370 = vpack.c.b16 %v348, %v346
    %v371 = vpack.c.b16 %v351, %v349
    %v372 = vpack.c.b16 %v352, %v350
    %v373 = vpack.c.b16 %v355, %v353
    %v374 = vpack.c.b16 %v356, %v354
    %v375 = vpack.c.b16 %v359, %v357
    %v376 = vpack.c.b16 %v360, %v358
    %393 = vmatpush.bf16.msra.mxu0 %v375
    %394 = vmatpush.bf16.msra.mxu0 %v373
    %395 = vmatpush.bf16.msra.mxu0 %v371
    %396 = vmatpush.bf16.msra.mxu0 %v369
    %397 = vmatpush.bf16.msra.mxu0 %v367
    %398 = vmatpush.bf16.msra.mxu0 %v365
    %399 = vmatpush.bf16.msra.mxu0 %v363
    %400 = vmatpush.bf16.msra.mxu0 %v361
    %401 = vmatmul.bf16.gmra.mxu0 %v156
    %v402 = vpop.f32.mrf.mxu0
    %v403 = vadd.f32 %v295, %v402
    %v404 = vpop.f32.mrf.mxu0
    %v405 = vadd.f32 %v297, %v404
    %406 = vdwg.mxu0
    %407 = vmatpush.bf16.msra.mxu0 %v376
    %408 = vmatpush.bf16.msra.mxu0 %v374
    %409 = vmatpush.bf16.msra.mxu0 %v372
    %410 = vmatpush.bf16.msra.mxu0 %v370
    %411 = vmatpush.bf16.msra.mxu0 %v368
    %412 = vmatpush.bf16.msra.mxu0 %v366
    %413 = vmatpush.bf16.msra.mxu0 %v364
    %414 = vmatpush.bf16.msra.mxu0 %v362
    %415 = vmatmul.bf16.gmra.mxu0 %v156
    %v416 = vpop.f32.mrf.mxu0
    %v417 = vadd.f32 %v309, %v416
    %v418 = vpop.f32.mrf.mxu0
    %v419 = vadd.f32 %v311, %v418
    %420 = vdwg.mxu0
    %s421 = scalar_lea.vmem [#allocation2], 256
    %v422 = vld [vmem:[%s421] sm:$0xff]
    %v423 = vld [vmem:[%s421 + $0x8] sm:$0xff]
    %v424 = vld [vmem:[%s421 + $0x10] sm:$0xff]
    %v425 = vld [vmem:[%s421 + $0x18] sm:$0xff]
    %v426 = vld [vmem:[%s421 + $0x20] sm:$0xff]
    %v427 = vld [vmem:[%s421 + $0x28] sm:$0xff]
    %v428 = vld [vmem:[%s421 + $0x30] sm:$0xff]
    %v429 = vld [vmem:[%s421 + $0x38] sm:$0xff]
    %v430 = vld [vmem:[%s421 + $0x40] sm:$0xff]
    %v431 = vld [vmem:[%s421 + $0x48] sm:$0xff]
    %v432 = vld [vmem:[%s421 + $0x50] sm:$0xff]
    %v433 = vld [vmem:[%s421 + $0x58] sm:$0xff]
    %v434 = vld [vmem:[%s421 + $0x60] sm:$0xff]
    %v435 = vld [vmem:[%s421 + $0x68] sm:$0xff]
    %v436 = vld [vmem:[%s421 + $0x70] sm:$0xff]
    %v437 = vld [vmem:[%s421 + $0x78] sm:$0xff]
    %s438 = scalar_lea.vmem [#allocation2], 384
    %v439 = vld [vmem:[%s438] sm:$0xff]
    %v440 = vld [vmem:[%s438 + $0x8] sm:$0xff]
    %v441 = vld [vmem:[%s438 + $0x10] sm:$0xff]
    %v442 = vld [vmem:[%s438 + $0x18] sm:$0xff]
    %v443 = vld [vmem:[%s438 + $0x20] sm:$0xff]
    %v444 = vld [vmem:[%s438 + $0x28] sm:$0xff]
    %v445 = vld [vmem:[%s438 + $0x30] sm:$0xff]
    %v446 = vld [vmem:[%s438 + $0x38] sm:$0xff]
    %v447 = vld [vmem:[%s438 + $0x40] sm:$0xff]
    %v448 = vld [vmem:[%s438 + $0x48] sm:$0xff]
    %v449 = vld [vmem:[%s438 + $0x50] sm:$0xff]
    %v450 = vld [vmem:[%s438 + $0x58] sm:$0xff]
    %v451 = vld [vmem:[%s438 + $0x60] sm:$0xff]
    %v452 = vld [vmem:[%s438 + $0x68] sm:$0xff]
    %v453 = vld [vmem:[%s438 + $0x70] sm:$0xff]
    %v454 = vld [vmem:[%s438 + $0x78] sm:$0xff]
    %v471 = vunpack.c.l.b16 %v439
    %v472 = vunpack.c.h.b16 %v439
    %v473 = vunpack.c.l.b16 %v440
    %v474 = vunpack.c.h.b16 %v440
    %v475 = vunpack.c.l.b16 %v441
    %v476 = vunpack.c.h.b16 %v441
    %v477 = vunpack.c.l.b16 %v442
    %v478 = vunpack.c.h.b16 %v442
    %v479 = vunpack.c.l.b16 %v443
    %v480 = vunpack.c.h.b16 %v443
    %v481 = vunpack.c.l.b16 %v444
    %v482 = vunpack.c.h.b16 %v444
    %v483 = vunpack.c.l.b16 %v445
    %v484 = vunpack.c.h.b16 %v445
    %v485 = vunpack.c.l.b16 %v446
    %v486 = vunpack.c.h.b16 %v446
    %v487 = vunpack.c.l.b16 %v447
    %v488 = vunpack.c.h.b16 %v447
    %v489 = vunpack.c.l.b16 %v448
    %v490 = vunpack.c.h.b16 %v448
    %v491 = vunpack.c.l.b16 %v449
    %v492 = vunpack.c.h.b16 %v449
    %v493 = vunpack.c.l.b16 %v450
    %v494 = vunpack.c.h.b16 %v450
    %v495 = vunpack.c.l.b16 %v451
    %v496 = vunpack.c.h.b16 %v451
    %v497 = vunpack.c.l.b16 %v452
    %v498 = vunpack.c.h.b16 %v452
    %v499 = vunpack.c.l.b16 %v453
    %v500 = vunpack.c.h.b16 %v453
    %v501 = vunpack.c.l.b16 %v454
    %v502 = vunpack.c.h.b16 %v454
    %v503 = vpack.c.b16 %v473, %v471
    %v504 = vpack.c.b16 %v474, %v472
    %v505 = vpack.c.b16 %v477, %v475
    %v506 = vpack.c.b16 %v478, %v476
    %v507 = vpack.c.b16 %v481, %v479
    %v508 = vpack.c.b16 %v482, %v480
    %v509 = vpack.c.b16 %v485, %v483
    %v510 = vpack.c.b16 %v486, %v484
    %v511 = vpack.c.b16 %v489, %v487
    %v512 = vpack.c.b16 %v490, %v488
    %v513 = vpack.c.b16 %v493, %v491
    %v514 = vpack.c.b16 %v494, %v492
    %v515 = vpack.c.b16 %v497, %v495
    %v516 = vpack.c.b16 %v498, %v496
    %v517 = vpack.c.b16 %v501, %v499
    %v518 = vpack.c.b16 %v502, %v500
    %535 = vmatpush.bf16.msra.mxu0 %v517
    %536 = vmatpush.bf16.msra.mxu0 %v515
    %537 = vmatpush.bf16.msra.mxu0 %v513
    %538 = vmatpush.bf16.msra.mxu0 %v511
    %539 = vmatpush.bf16.msra.mxu0 %v509
    %540 = vmatpush.bf16.msra.mxu0 %v507
    %541 = vmatpush.bf16.msra.mxu0 %v505
    %542 = vmatpush.bf16.msra.mxu0 %v503
    %543 = vmatmul.bf16.gmra.mxu0 %v170
    %v544 = vpop.f32.mrf.mxu0
    %v545 = vadd.f32 0.0, %v544
    %v546 = vpop.f32.mrf.mxu0
    %v547 = vadd.f32 0.0, %v546
    %548 = vdwg.mxu0
    %549 = vmatpush.bf16.msra.mxu0 %v518
    %550 = vmatpush.bf16.msra.mxu0 %v516
    %551 = vmatpush.bf16.msra.mxu0 %v514
    %552 = vmatpush.bf16.msra.mxu0 %v512
    %553 = vmatpush.bf16.msra.mxu0 %v510
    %554 = vmatpush.bf16.msra.mxu0 %v508
    %555 = vmatpush.bf16.msra.mxu0 %v506
    %556 = vmatpush.bf16.msra.mxu0 %v504
    %557 = vmatmul.bf16.gmra.mxu0 %v170
    %v558 = vpop.f32.mrf.mxu0
    %v559 = vadd.f32 0.0, %v558
    %v560 = vpop.f32.mrf.mxu0
    %v561 = vadd.f32 0.0, %v560
    %562 = vdwg.mxu0
    %v579 = vunpack.c.l.b16 %v422
    %v580 = vunpack.c.h.b16 %v422
    %v581 = vunpack.c.l.b16 %v423
    %v582 = vunpack.c.h.b16 %v423
    %v583 = vunpack.c.l.b16 %v424
    %v584 = vunpack.c.h.b16 %v424
    %v585 = vunpack.c.l.b16 %v425
    %v586 = vunpack.c.h.b16 %v425
    %v587 = vunpack.c.l.b16 %v426
    %v588 = vunpack.c.h.b16 %v426
    %v589 = vunpack.c.l.b16 %v427
    %v590 = vunpack.c.h.b16 %v427
    %v591 = vunpack.c.l.b16 %v428
    %v592 = vunpack.c.h.b16 %v428
    %v593 = vunpack.c.l.b16 %v429
    %v594 = vunpack.c.h.b16 %v429
    %v595 = vunpack.c.l.b16 %v430
    %v596 = vunpack.c.h.b16 %v430
    %v597 = vunpack.c.l.b16 %v431
    %v598 = vunpack.c.h.b16 %v431
    %v599 = vunpack.c.l.b16 %v432
    %v600 = vunpack.c.h.b16 %v432
    %v601 = vunpack.c.l.b16 %v433
    %v602 = vunpack.c.h.b16 %v433
    %v603 = vunpack.c.l.b16 %v434
    %v604 = vunpack.c.h.b16 %v434
    %v605 = vunpack.c.l.b16 %v435
    %v606 = vunpack.c.h.b16 %v435
    %v607 = vunpack.c.l.b16 %v436
    %v608 = vunpack.c.h.b16 %v436
    %v609 = vunpack.c.l.b16 %v437
    %v610 = vunpack.c.h.b16 %v437
    %v611 = vpack.c.b16 %v581, %v579
    %v612 = vpack.c.b16 %v582, %v580
    %v613 = vpack.c.b16 %v585, %v583
    %v614 = vpack.c.b16 %v586, %v584
    %v615 = vpack.c.b16 %v589, %v587
    %v616 = vpack.c.b16 %v590, %v588
    %v617 = vpack.c.b16 %v593, %v591
    %v618 = vpack.c.b16 %v594, %v592
    %v619 = vpack.c.b16 %v597, %v595
    %v620 = vpack.c.b16 %v598, %v596
    %v621 = vpack.c.b16 %v601, %v599
    %v622 = vpack.c.b16 %v602, %v600
    %v623 = vpack.c.b16 %v605, %v603
    %v624 = vpack.c.b16 %v606, %v604
    %v625 = vpack.c.b16 %v609, %v607
    %v626 = vpack.c.b16 %v610, %v608
    %643 = vmatpush.bf16.msra.mxu0 %v625
    %644 = vmatpush.bf16.msra.mxu0 %v623
    %645 = vmatpush.bf16.msra.mxu0 %v621
    %646 = vmatpush.bf16.msra.mxu0 %v619
    %647 = vmatpush.bf16.msra.mxu0 %v617
    %648 = vmatpush.bf16.msra.mxu0 %v615
    %649 = vmatpush.bf16.msra.mxu0 %v613
    %650 = vmatpush.bf16.msra.mxu0 %v611
    %651 = vmatmul.bf16.gmra.mxu0 %v171
    %v652 = vpop.f32.mrf.mxu0
    %v653 = vadd.f32 %v545, %v652
    %v654 = vpop.f32.mrf.mxu0
    %v655 = vadd.f32 %v547, %v654
    %656 = vdwg.mxu0
    %657 = vmatpush.bf16.msra.mxu0 %v626
    %658 = vmatpush.bf16.msra.mxu0 %v624
    %659 = vmatpush.bf16.msra.mxu0 %v622
    %660 = vmatpush.bf16.msra.mxu0 %v620
    %661 = vmatpush.bf16.msra.mxu0 %v618
    %662 = vmatpush.bf16.msra.mxu0 %v616
    %663 = vmatpush.bf16.msra.mxu0 %v614
    %664 = vmatpush.bf16.msra.mxu0 %v612
    %665 = vmatmul.bf16.gmra.mxu0 %v171
    %v666 = vpop.f32.mrf.mxu0
    %v667 = vadd.f32 %v559, %v666
    %v668 = vpop.f32.mrf.mxu0
    %v669 = vadd.f32 %v561, %v668
    %670 = vdwg.mxu0
    %v671 = vadd.s32 %v117, 16
    %v672 = vadd.s32 %v117, 24
    %v673 = vlaneseq
    %v674 = vand.u32 %v673, 127
    %v675 = vmul.u32 %v674, 2
    %vm676 = vcmp.eq.s32.totalorder %v117, %v675
    %vm677 = vcmp.eq.s32.totalorder %v118, %v675
    %vm678 = vcmp.eq.s32.totalorder %v671, %v675
    %vm679 = vcmp.eq.s32.totalorder %v672, %v675
    %v680 = vsel %vm676, 1, 0
    %v681 = vsel %vm677, 1, 0
    %v682 = vsel %vm678, 1, 0
    %v683 = vsel %vm679, 1, 0
    %v684 = vcvt.s32.f32 %v680
    %v685 = vcvt.s32.f32 %v681
    %v686 = vcvt.s32.f32 %v682
    %v687 = vcvt.s32.f32 %v683
    %v688 = vadd.s32 %v675, 1
    %vm689 = vcmp.eq.s32.totalorder %v117, %v688
    %vm690 = vcmp.eq.s32.totalorder %v118, %v688
    %vm691 = vcmp.eq.s32.totalorder %v671, %v688
    %vm692 = vcmp.eq.s32.totalorder %v672, %v688
    %v693 = vsel %vm689, 1, 0
    %v694 = vsel %vm690, 1, 0
    %v695 = vsel %vm691, 1, 0
    %v696 = vsel %vm692, 1, 0
    %v697 = vcvt.s32.f32 %v693
    %v698 = vcvt.s32.f32 %v694
    %v699 = vcvt.s32.f32 %v695
    %v700 = vcvt.s32.f32 %v696
    %vm701 = vcmask 130048
    %v703 = vsel %vm701, %v697, 0
    %v706 = vsel %vm701, %v698, 0
    %v709 = vsel %vm701, %v699, 0
    %v712 = vsel %vm701, %v700, 0
    %714 = vmatpush.msra.mxu0 0.0
    %715 = vmatpush.msra.mxu0 0.0
    %716 = vmatpush.msra.mxu0 0.0
    %717 = vmatpush.msra.mxu0 0.0
    %718 = vmatpush.msra.mxu0 0.0
    %719 = vmatpush.msra.mxu0 0.0
    %720 = vmatpush.msra.mxu0 0.0
    %721 = vmatpush.msra.mxu0 0.0
    %722 = vmatpush.msra.mxu0 0.0
    %723 = vmatpush.msra.mxu0 0.0
    %724 = vmatpush.msra.mxu0 0.0
    %725 = vmatpush.msra.mxu0 0.0
    %726 = vmatpush.msra.mxu0 0.0
    %727 = vmatpush.msra.mxu0 0.0
    %728 = vmatpush.msra.mxu0 %v655
    %729 = vmatpush.msra.mxu0 %v653
    %730 = vmatmul.f32.gmra.mxu0 %v703
    %v731 = vpop.f32.mrf.mxu0
    %v732 = vadd.f32 0.0, %v731
    %733 = vmatmul.f32.gmra.mxu0 %v706
    %v734 = vpop.f32.mrf.mxu0
    %v735 = vadd.f32 0.0, %v734
    %736 = vmatmul.f32.gmra.mxu0 %v709
    %v737 = vpop.f32.mrf.mxu0
    %v738 = vadd.f32 0.0, %v737
    %739 = vmatmul.f32.gmra.mxu0 %v712
    %v740 = vpop.f32.mrf.mxu0
    %v741 = vadd.f32 0.0, %v740
    %742 = vdwg.mxu0
    %743 = vmatpush.msra.mxu0 0.0
    %744 = vmatpush.msra.mxu0 0.0
    %745 = vmatpush.msra.mxu0 0.0
    %746 = vmatpush.msra.mxu0 0.0
    %747 = vmatpush.msra.mxu0 0.0
    %748 = vmatpush.msra.mxu0 0.0
    %749 = vmatpush.msra.mxu0 0.0
    %750 = vmatpush.msra.mxu0 0.0
    %751 = vmatpush.msra.mxu0 0.0
    %752 = vmatpush.msra.mxu0 0.0
    %753 = vmatpush.msra.mxu0 0.0
    %754 = vmatpush.msra.mxu0 0.0
    %755 = vmatpush.msra.mxu0 0.0
    %756 = vmatpush.msra.mxu0 0.0
    %757 = vmatpush.msra.mxu0 %v669
    %758 = vmatpush.msra.mxu0 %v667
    %759 = vmatmul.f32.gmra.mxu0 %v703
    %v760 = vpop.f32.mrf.mxu0
    %v761 = vadd.f32 0.0, %v760
    %762 = vmatmul.f32.gmra.mxu0 %v706
    %v763 = vpop.f32.mrf.mxu0
    %v764 = vadd.f32 0.0, %v763
    %765 = vmatmul.f32.gmra.mxu0 %v709
    %v766 = vpop.f32.mrf.mxu0
    %v767 = vadd.f32 0.0, %v766
    %768 = vmatmul.f32.gmra.mxu0 %v712
    %v769 = vpop.f32.mrf.mxu0
    %v770 = vadd.f32 0.0, %v769
    %771 = vdwg.mxu0
    %v773 = vsel %vm701, %v684, 0
    %v776 = vsel %vm701, %v685, 0
    %v779 = vsel %vm701, %v686, 0
    %v782 = vsel %vm701, %v687, 0
    %784 = vmatpush.msra.mxu0 0.0
    %785 = vmatpush.msra.mxu0 0.0
    %786 = vmatpush.msra.mxu0 0.0
    %787 = vmatpush.msra.mxu0 0.0
    %788 = vmatpush.msra.mxu0 0.0
    %789 = vmatpush.msra.mxu0 0.0
    %790 = vmatpush.msra.mxu0 0.0
    %791 = vmatpush.msra.mxu0 0.0
    %792 = vmatpush.msra.mxu0 0.0
    %793 = vmatpush.msra.mxu0 0.0
    %794 = vmatpush.msra.mxu0 0.0
    %795 = vmatpush.msra.mxu0 0.0
    %796 = vmatpush.msra.mxu0 0.0
    %797 = vmatpush.msra.mxu0 0.0
    %798 = vmatpush.msra.mxu0 %v405
    %799 = vmatpush.msra.mxu0 %v403
    %800 = vmatmul.f32.gmra.mxu0 %v773
    %v801 = vpop.f32.mrf.mxu0
    %v802 = vadd.f32 %v732, %v801
    %803 = vmatmul.f32.gmra.mxu0 %v776
    %v804 = vpop.f32.mrf.mxu0
    %v805 = vadd.f32 %v735, %v804
    %806 = vmatmul.f32.gmra.mxu0 %v779
    %v807 = vpop.f32.mrf.mxu0
    %v808 = vadd.f32 %v738, %v807
    %809 = vmatmul.f32.gmra.mxu0 %v782
    %v810 = vpop.f32.mrf.mxu0
    %v811 = vadd.f32 %v741, %v810
    %812 = vdwg.mxu0
    %813 = vmatpush.msra.mxu0 0.0
    %814 = vmatpush.msra.mxu0 0.0
    %815 = vmatpush.msra.mxu0 0.0
    %816 = vmatpush.msra.mxu0 0.0
    %817 = vmatpush.msra.mxu0 0.0
    %818 = vmatpush.msra.mxu0 0.0
    %819 = vmatpush.msra.mxu0 0.0
    %820 = vmatpush.msra.mxu0 0.0
    %821 = vmatpush.msra.mxu0 0.0
    %822 = vmatpush.msra.mxu0 0.0
    %823 = vmatpush.msra.mxu0 0.0
    %824 = vmatpush.msra.mxu0 0.0
    %825 = vmatpush.msra.mxu0 0.0
    %826 = vmatpush.msra.mxu0 0.0
    %827 = vmatpush.msra.mxu0 %v419
    %828 = vmatpush.msra.mxu0 %v417
    %829 = vmatmul.f32.gmra.mxu0 %v773
    %v830 = vpop.f32.mrf.mxu0
    %v831 = vadd.f32 %v761, %v830
    %832 = vmatmul.f32.gmra.mxu0 %v776
    %v833 = vpop.f32.mrf.mxu0
    %v834 = vadd.f32 %v764, %v833
    %835 = vmatmul.f32.gmra.mxu0 %v779
    %v836 = vpop.f32.mrf.mxu0
    %v837 = vadd.f32 %v767, %v836
    %838 = vmatmul.f32.gmra.mxu0 %v782
    %v839 = vpop.f32.mrf.mxu0
    %v840 = vadd.f32 %v770, %v839
    %841 = vdwg.mxu0
    %v842 = vld [vmem:[#allocation6] ss:$4 sm:$0x3]
    %v844 = vperm.slane %v842, 0
    %v845 = vperm.slane %v842, 1
    %v848 = vadd.f32 %v802, %v844
    %v849 = vadd.f32 %v831, %v845
    %v850 = vadd.f32 %v805, %v844
    %v851 = vadd.f32 %v834, %v845
    %v852 = vadd.f32 %v808, %v844
    %v853 = vadd.f32 %v837, %v845
    %v854 = vadd.f32 %v811, %v844
    %v855 = vadd.f32 %v840, %v845
    %v856 = vadd.f32 %v848, %v850
    %v857 = vrot.slane %v856, 4
    %v858 = vadd.f32 %v856, %v857
    %v859 = vrot.slane %v858, 2
    %v860 = vadd.f32 %v858, %v859
    %v861 = vrot.slane %v860, 1
    %v862 = vadd.f32 %v860, %v861
    %v863 = vadd.f32 %v849, %v851
    %v864 = vrot.slane %v863, 4
    %v865 = vadd.f32 %v863, %v864
    %v866 = vrot.slane %v865, 2
    %v867 = vadd.f32 %v865, %v866
    %v868 = vrot.slane %v867, 1
    %v869 = vadd.f32 %v867, %v868
    %v870 = vadd.f32 %v852, %v854
    %v871 = vrot.slane %v870, 4
    %v872 = vadd.f32 %v870, %v871
    %v873 = vrot.slane %v872, 2
    %v874 = vadd.f32 %v872, %v873
    %v875 = vrot.slane %v874, 1
    %v876 = vadd.f32 %v874, %v875
    %v877 = vadd.f32 %v853, %v855
    %v878 = vrot.slane %v877, 4
    %v879 = vadd.f32 %v877, %v878
    %v880 = vrot.slane %v879, 2
    %v881 = vadd.f32 %v879, %v880
    %v882 = vrot.slane %v881, 1
    %v883 = vadd.f32 %v881, %v882
    %v884 = vmul.f32 %v848, %v848
    %v885 = vmul.f32 %v849, %v849
    %v886 = vmul.f32 %v850, %v850
    %v887 = vmul.f32 %v851, %v851
    %v888 = vmul.f32 %v852, %v852
    %v889 = vmul.f32 %v853, %v853
    %v890 = vmul.f32 %v854, %v854
    %v891 = vmul.f32 %v855, %v855
    %v892 = vadd.f32 %v884, %v886
    %v893 = vrot.slane %v892, 4
    %v894 = vadd.f32 %v892, %v893
    %v895 = vrot.slane %v894, 2
    %v896 = vadd.f32 %v894, %v895
    %v897 = vrot.slane %v896, 1
    %v898 = vadd.f32 %v896, %v897
    %v899 = vadd.f32 %v885, %v887
    %v900 = vrot.slane %v899, 4
    %v901 = vadd.f32 %v899, %v900
    %v902 = vrot.slane %v901, 2
    %v903 = vadd.f32 %v901, %v902
    %v904 = vrot.slane %v903, 1
    %v905 = vadd.f32 %v903, %v904
    %v906 = vadd.f32 %v888, %v890
    %v907 = vrot.slane %v906, 4
    %v908 = vadd.f32 %v906, %v907
    %v909 = vrot.slane %v908, 2
    %v910 = vadd.f32 %v908, %v909
    %v911 = vrot.slane %v910, 1
    %v912 = vadd.f32 %v910, %v911
    %v913 = vadd.f32 %v889, %v891
    %v914 = vrot.slane %v913, 4
    %v915 = vadd.f32 %v913, %v914
    %v916 = vrot.slane %v915, 2
    %v917 = vadd.f32 %v915, %v916
    %v918 = vrot.slane %v917, 1
    %v919 = vadd.f32 %v917, %v918
    %vm924 = vcmask 1041409
    %v925 = vsel %vm924, %v876, %v862
    %v926 = vsel %vm924, %v883, %v869
    %vm933 = vcmask 1043459
    %v934 = vsel %vm933, %v912, %v898
    %v935 = vsel %vm933, %v919, %v905
    %vm938 = vcmask 1041408
    %v939 = vsel %vm938, %v925, %v934
    %v940 = vsel %vm938, %v926, %v935
    %v941 = vld [vmem:[#allocation10] sm:$0xff]
    %v942 = vld [vmem:[#allocation10 + $0x8] sm:$0xff]
    %v943 = vld [vmem:[#allocation10 + $0x10] sm:$0xff]
    %v944 = vld [vmem:[#allocation10 + $0x18] sm:$0xff]
    %v945 = vld [vmem:[#allocation10 + $0x20] sm:$0xff]
    %v946 = vld [vmem:[#allocation10 + $0x28] sm:$0xff]
    %v947 = vld [vmem:[#allocation10 + $0x30] sm:$0xff]
    %v948 = vld [vmem:[#allocation10 + $0x38] sm:$0xff]
    %v949 = vld [vmem:[#allocation10 + $0x40] sm:$0xff]
    %v950 = vld [vmem:[#allocation10 + $0x48] sm:$0xff]
    %v951 = vld [vmem:[#allocation10 + $0x50] sm:$0xff]
    %v952 = vld [vmem:[#allocation10 + $0x58] sm:$0xff]
    %v953 = vld [vmem:[#allocation10 + $0x60] sm:$0xff]
    %v954 = vld [vmem:[#allocation10 + $0x68] sm:$0xff]
    %v955 = vld [vmem:[#allocation10 + $0x70] sm:$0xff]
    %v956 = vld [vmem:[#allocation10 + $0x78] sm:$0xff]
    %v957 = vld [vmem:[#allocation10 + $0x80] sm:$0xff]
    %v958 = vld [vmem:[#allocation10 + $0x88] sm:$0xff]
    %v959 = vld [vmem:[#allocation10 + $0x90] sm:$0xff]
    %v960 = vld [vmem:[#allocation10 + $0x98] sm:$0xff]
    %v961 = vld [vmem:[#allocation10 + $0xa0] sm:$0xff]
    %v962 = vld [vmem:[#allocation10 + $0xa8] sm:$0xff]
    %v963 = vld [vmem:[#allocation10 + $0xb0] sm:$0xff]
    %v964 = vld [vmem:[#allocation10 + $0xb8] sm:$0xff]
    %v965 = vld [vmem:[#allocation10 + $0xc0] sm:$0xff]
    %v966 = vld [vmem:[#allocation10 + $0xc8] sm:$0xff]
    %v967 = vld [vmem:[#allocation10 + $0xd0] sm:$0xff]
    %v968 = vld [vmem:[#allocation10 + $0xd8] sm:$0xff]
    %v969 = vld [vmem:[#allocation10 + $0xe0] sm:$0xff]
    %v970 = vld [vmem:[#allocation10 + $0xe8] sm:$0xff]
    %v971 = vld [vmem:[#allocation10 + $0xf0] sm:$0xff]
    %v972 = vld [vmem:[#allocation10 + $0xf8] sm:$0xff]
    %v973 = vld [vmem:[#allocation10 + $0x100] sm:$0xff]
    %v974 = vld [vmem:[#allocation10 + $0x108] sm:$0xff]
    %v975 = vld [vmem:[#allocation10 + $0x110] sm:$0xff]
    %v976 = vld [vmem:[#allocation10 + $0x118] sm:$0xff]
    %v977 = vld [vmem:[#allocation10 + $0x120] sm:$0xff]
    %v978 = vld [vmem:[#allocation10 + $0x128] sm:$0xff]
    %v979 = vld [vmem:[#allocation10 + $0x130] sm:$0xff]
    %v980 = vld [vmem:[#allocation10 + $0x138] sm:$0xff]
    %v981 = vld [vmem:[#allocation10 + $0x140] sm:$0xff]
    %v982 = vld [vmem:[#allocation10 + $0x148] sm:$0xff]
    %v983 = vld [vmem:[#allocation10 + $0x150] sm:$0xff]
    %v984 = vld [vmem:[#allocation10 + $0x158] sm:$0xff]
    %v985 = vld [vmem:[#allocation10 + $0x160] sm:$0xff]
    %v986 = vld [vmem:[#allocation10 + $0x168] sm:$0xff]
    %v987 = vld [vmem:[#allocation10 + $0x170] sm:$0xff]
    %v988 = vld [vmem:[#allocation10 + $0x178] sm:$0xff]
    %v989 = vld [vmem:[#allocation10 + $0x180] sm:$0xff]
    %v990 = vld [vmem:[#allocation10 + $0x188] sm:$0xff]
    %v991 = vld [vmem:[#allocation10 + $0x190] sm:$0xff]
    %v992 = vld [vmem:[#allocation10 + $0x198] sm:$0xff]
    %v993 = vld [vmem:[#allocation10 + $0x1a0] sm:$0xff]
    %v994 = vld [vmem:[#allocation10 + $0x1a8] sm:$0xff]
    %v995 = vld [vmem:[#allocation10 + $0x1b0] sm:$0xff]
    %v996 = vld [vmem:[#allocation10 + $0x1b8] sm:$0xff]
    %v997 = vld [vmem:[#allocation10 + $0x1c0] sm:$0xff]
    %v998 = vld [vmem:[#allocation10 + $0x1c8] sm:$0xff]
    %v999 = vld [vmem:[#allocation10 + $0x1d0] sm:$0xff]
    %v1000 = vld [vmem:[#allocation10 + $0x1d8] sm:$0xff]
    %v1001 = vld [vmem:[#allocation10 + $0x1e0] sm:$0xff]
    %v1002 = vld [vmem:[#allocation10 + $0x1e8] sm:$0xff]
    %v1003 = vld [vmem:[#allocation10 + $0x1f0] sm:$0xff]
    %v1004 = vld [vmem:[#allocation10 + $0x1f8] sm:$0xff]
    %1005 = vmatpush.msra.mxu0 %v971
    %1006 = vmatpush.msra.mxu0 %v969
    %1007 = vmatpush.msra.mxu0 %v967
    %1008 = vmatpush.msra.mxu0 %v965
    %1009 = vmatpush.msra.mxu0 %v963
    %1010 = vmatpush.msra.mxu0 %v961
    %1011 = vmatpush.msra.mxu0 %v959
    %1012 = vmatpush.msra.mxu0 %v957
    %1013 = vmatpush.msra.mxu0 %v955
    %1014 = vmatpush.msra.mxu0 %v953
    %1015 = vmatpush.msra.mxu0 %v951
    %1016 = vmatpush.msra.mxu0 %v949
    %1017 = vmatpush.msra.mxu0 %v947
    %1018 = vmatpush.msra.mxu0 %v945
    %1019 = vmatpush.msra.mxu0 %v943
    %1020 = vmatpush.msra.mxu0 %v941
    %1021 = vmatmul.f32.gmra.mxu0 %v939
    %v1022 = vpop.f32.mrf.mxu0
    %v1023 = vadd.f32 0.0, %v1022
    %1024 = vdwg.mxu0
    %1025 = vmatpush.msra.mxu0 %v1003
    %1026 = vmatpush.msra.mxu0 %v1001
    %1027 = vmatpush.msra.mxu0 %v999
    %1028 = vmatpush.msra.mxu0 %v997
    %1029 = vmatpush.msra.mxu0 %v995
    %1030 = vmatpush.msra.mxu0 %v993
    %1031 = vmatpush.msra.mxu0 %v991
    %1032 = vmatpush.msra.mxu0 %v989
    %1033 = vmatpush.msra.mxu0 %v987
    %1034 = vmatpush.msra.mxu0 %v985
    %1035 = vmatpush.msra.mxu0 %v983
    %1036 = vmatpush.msra.mxu0 %v981
    %1037 = vmatpush.msra.mxu0 %v979
    %1038 = vmatpush.msra.mxu0 %v977
    %1039 = vmatpush.msra.mxu0 %v975
    %1040 = vmatpush.msra.mxu0 %v973
    %1041 = vmatmul.f32.gmra.mxu0 %v940
    %v1042 = vpop.f32.mrf.mxu0
    %v1043 = vadd.f32 %v1023, %v1042
    %1044 = vdwg.mxu0
    %1045 = vmatpush.msra.mxu0 %v972
    %1046 = vmatpush.msra.mxu0 %v970
    %1047 = vmatpush.msra.mxu0 %v968
    %1048 = vmatpush.msra.mxu0 %v966
    %1049 = vmatpush.msra.mxu0 %v964
    %1050 = vmatpush.msra.mxu0 %v962
    %1051 = vmatpush.msra.mxu0 %v960
    %1052 = vmatpush.msra.mxu0 %v958
    %1053 = vmatpush.msra.mxu0 %v956
    %1054 = vmatpush.msra.mxu0 %v954
    %1055 = vmatpush.msra.mxu0 %v952
    %1056 = vmatpush.msra.mxu0 %v950
    %1057 = vmatpush.msra.mxu0 %v948
    %1058 = vmatpush.msra.mxu0 %v946
    %1059 = vmatpush.msra.mxu0 %v944
    %1060 = vmatpush.msra.mxu0 %v942
    %1061 = vmatmul.f32.gmra.mxu0 %v939
    %v1062 = vpop.f32.mrf.mxu0
    %v1063 = vadd.f32 0.0, %v1062
    %1064 = vdwg.mxu0
    %1065 = vmatpush.msra.mxu0 %v1004
    %1066 = vmatpush.msra.mxu0 %v1002
    %1067 = vmatpush.msra.mxu0 %v1000
    %1068 = vmatpush.msra.mxu0 %v998
    %1069 = vmatpush.msra.mxu0 %v996
    %1070 = vmatpush.msra.mxu0 %v994
    %1071 = vmatpush.msra.mxu0 %v992
    %1072 = vmatpush.msra.mxu0 %v990
    %1073 = vmatpush.msra.mxu0 %v988
    %1074 = vmatpush.msra.mxu0 %v986
    %1075 = vmatpush.msra.mxu0 %v984
    %1076 = vmatpush.msra.mxu0 %v982
    %1077 = vmatpush.msra.mxu0 %v980
    %1078 = vmatpush.msra.mxu0 %v978
    %1079 = vmatpush.msra.mxu0 %v976
    %1080 = vmatpush.msra.mxu0 %v974
    %1081 = vmatmul.f32.gmra.mxu0 %v940
    %v1082 = vpop.f32.mrf.mxu0
    %v1083 = vadd.f32 %v1063, %v1082
    %1084 = vdwg.mxu0
    %v1087 = vrot.slane %v1083, 7
    %vm1088 = vcmask 1040384
    %v1089 = vsel %vm1088, %v1043, %v1087
    %v1090 = vsel %vm924, %v1043, %v1087
    %v1091 = vrot.slane %v1090, 1
    %1094 = vst [vmem:[#allocation1] sm:$0xff] %v1043
    %1095 = vst [vmem:[#allocation1 + $0x9] sm:$0xff] %v1083
    %s1096 = scalar_lea.vmem [#allocation1], 2
    %v1097 = vld [vmem:[%s1096] ss:$9 sm:$0xff]
    %s1098 = scalar_lea.vmem [#allocation1], 3
    %v1099 = vld [vmem:[%s1098] ss:$9 sm:$0xff]
    %v1102 = vmul.f32 %v1089, %v1089
    %v1103 = vmul.f32 %v1091, %v1091
    %v1104 = vsub.f32 %v1097, %v1102
    %v1105 = vsub.f32 %v1099, %v1103
    %v1106 = vadd.f32 %v1104, 1e-05
    %v1107 = vadd.f32 %v1105, 1e-05
    %v1108 = vrsqrt.pop %v1106
    %v1109 = vmul.f32 %v1108, %v1106
    %v1110 = vmul.f32 %v1109, %v1108
    %v1111 = vmul.f32 0.5, %v1110
    %v1112 = vsub.f32 1.5, %v1111
    %v1113 = vmul.f32 %v1108, %v1112
    %vm1114 = vweird.f32 %v1106
    %vm1115 = vweird.f32 %v1108
    %vm1116 = vmor %vm1114, %vm1115
    %v1117 = vsel %vm1116, %v1108, %v1113
    %v1118 = vrsqrt.pop %v1107
    %v1119 = vmul.f32 %v1118, %v1107
    %v1120 = vmul.f32 %v1119, %v1118
    %v1121 = vmul.f32 0.5, %v1120
    %v1122 = vsub.f32 1.5, %v1121
    %v1123 = vmul.f32 %v1118, %v1122
    %vm1124 = vweird.f32 %v1107
    %vm1125 = vweird.f32 %v1118
    %vm1126 = vmor %vm1124, %vm1125
    %v1127 = vsel %vm1126, %v1118, %v1123
    %v1128 = vperm.slane %v1089, 0
    %v1129 = vperm.slane %v1089, 1
    %v1130 = vperm.slane %v1091, 0
    %v1131 = vperm.slane %v1091, 1
    %v1136 = vsub.f32 %v848, %v1128
    %v1137 = vsub.f32 %v849, %v1129
    %v1138 = vsub.f32 %v850, %v1128
    %v1139 = vsub.f32 %v851, %v1129
    %v1140 = vsub.f32 %v852, %v1130
    %v1141 = vsub.f32 %v853, %v1131
    %v1142 = vsub.f32 %v854, %v1130
    %v1143 = vsub.f32 %v855, %v1131
    %v1144 = vld [vmem:[#allocation7] ss:$4 sm:$0x3]
    %v1145 = vmul.f32 %v1117, %v1144
    %v1146 = vmul.f32 %v1127, %v1144
    %v1149 = vperm.slane %v1145, 0
    %v1150 = vperm.slane %v1145, 1
    %v1151 = vperm.slane %v1146, 0
    %v1152 = vperm.slane %v1146, 1
    %v1157 = vmul.f32 %v1136, %v1149
    %v1158 = vmul.f32 %v1137, %v1150
    %v1159 = vmul.f32 %v1138, %v1149
    %v1160 = vmul.f32 %v1139, %v1150
    %v1161 = vmul.f32 %v1140, %v1151
    %v1162 = vmul.f32 %v1141, %v1152
    %v1163 = vmul.f32 %v1142, %v1151
    %v1164 = vmul.f32 %v1143, %v1152
    %v1165 = vld [vmem:[#allocation9] ss:$4 sm:$0x3]
    %v1167 = vperm.slane %v1165, 0
    %v1168 = vperm.slane %v1165, 1
    %v1171 = vadd.f32 %v1157, %v1167
    %v1172 = vadd.f32 %v1158, %v1168
    %v1173 = vadd.f32 %v1159, %v1167
    %v1174 = vadd.f32 %v1160, %v1168
    %v1175 = vadd.f32 %v1161, %v1167
    %v1176 = vadd.f32 %v1162, %v1168
    %v1177 = vadd.f32 %v1163, %v1167
    %v1178 = vadd.f32 %v1164, %v1168
    %v1179 = vxor.u32 %v1171, 2147483648
    %v1180 = vxor.u32 %v1172, 2147483648
    %v1181 = vxor.u32 %v1173, 2147483648
    %v1182 = vxor.u32 %v1174, 2147483648
    %v1183 = vxor.u32 %v1175, 2147483648
    %v1184 = vxor.u32 %v1176, 2147483648
    %v1185 = vxor.u32 %v1177, 2147483648
    %v1186 = vxor.u32 %v1178, 2147483648
    %v1187 = vmul.f32 %v1179, 1.442695
    %v1188 = vpow.pop %v1187
    %v1189 = vmul.f32 %v1180, 1.442695
    %v1190 = vpow.pop %v1189
    %v1191 = vmul.f32 %v1181, 1.442695
    %v1192 = vpow.pop %v1191
    %v1193 = vmul.f32 %v1182, 1.442695
    %v1194 = vpow.pop %v1193
    %v1195 = vmul.f32 %v1183, 1.442695
    %v1196 = vpow.pop %v1195
    %v1197 = vmul.f32 %v1184, 1.442695
    %v1198 = vpow.pop %v1197
    %v1199 = vmul.f32 %v1185, 1.442695
    %v1200 = vpow.pop %v1199
    %v1201 = vmul.f32 %v1186, 1.442695
    %v1202 = vpow.pop %v1201
    %v1203 = vadd.f32 %v1188, 1.0
    %v1204 = vadd.f32 %v1190, 1.0
    %v1205 = vadd.f32 %v1192, 1.0
    %v1206 = vadd.f32 %v1194, 1.0
    %v1207 = vadd.f32 %v1196, 1.0
    %v1208 = vadd.f32 %v1198, 1.0
    %v1209 = vadd.f32 %v1200, 1.0
    %v1210 = vadd.f32 %v1202, 1.0
    %v1211 = vrcp.pop %v1203
    %v1212 = vmul.f32 %v1203, %v1211
    %v1213 = vsub.f32 1.0, %v1212
    %v1214 = vmul.f32 %v1211, %v1213
    %v1215 = vadd.f32 %v1211, %v1214
    %vm1216 = vweird.f32 %v1203
    %vm1217 = vweird.f32 %v1211
    %vm1218 = vmor %vm1216, %vm1217
    %v1219 = vsel %vm1218, %v1211, %v1215
    %v1220 = vand.u32 2147483647, %v1203
    %vm1221 = vcmp.eq.f32.partialorder %v1220, 8.507059e+37
    %v1222 = vand.u32 %v1203, 2147483648
    %v1223 = vor.u32 1.1754944e-38, %v1222
    %v1224 = vsel %vm1221, %v1223, %v1219
    %v1225 = vmul.f32 1.0, %v1224
    %v1226 = vrcp.pop %v1204
    %v1227 = vmul.f32 %v1204, %v1226
    %v1228 = vsub.f32 1.0, %v1227
    %v1229 = vmul.f32 %v1226, %v1228
    %v1230 = vadd.f32 %v1226, %v1229
    %vm1231 = vweird.f32 %v1204
    %vm1232 = vweird.f32 %v1226
    %vm1233 = vmor %vm1231, %vm1232
    %v1234 = vsel %vm1233, %v1226, %v1230
    %v1235 = vand.u32 2147483647, %v1204
    %vm1236 = vcmp.eq.f32.partialorder %v1235, 8.507059e+37
    %v1237 = vand.u32 %v1204, 2147483648
    %v1238 = vor.u32 1.1754944e-38, %v1237
    %v1239 = vsel %vm1236, %v1238, %v1234
    %v1240 = vmul.f32 1.0, %v1239
    %v1241 = vrcp.pop %v1205
    %v1242 = vmul.f32 %v1205, %v1241
    %v1243 = vsub.f32 1.0, %v1242
    %v1244 = vmul.f32 %v1241, %v1243
    %v1245 = vadd.f32 %v1241, %v1244
    %vm1246 = vweird.f32 %v1205
    %vm1247 = vweird.f32 %v1241
    %vm1248 = vmor %vm1246, %vm1247
    %v1249 = vsel %vm1248, %v1241, %v1245
    %v1250 = vand.u32 2147483647, %v1205
    %vm1251 = vcmp.eq.f32.partialorder %v1250, 8.507059e+37
    %v1252 = vand.u32 %v1205, 2147483648
    %v1253 = vor.u32 1.1754944e-38, %v1252
    %v1254 = vsel %vm1251, %v1253, %v1249
    %v1255 = vmul.f32 1.0, %v1254
    %v1256 = vrcp.pop %v1206
    %v1257 = vmul.f32 %v1206, %v1256
    %v1258 = vsub.f32 1.0, %v1257
    %v1259 = vmul.f32 %v1256, %v1258
    %v1260 = vadd.f32 %v1256, %v1259
    %vm1261 = vweird.f32 %v1206
    %vm1262 = vweird.f32 %v1256
    %vm1263 = vmor %vm1261, %vm1262
    %v1264 = vsel %vm1263, %v1256, %v1260
    %v1265 = vand.u32 2147483647, %v1206
    %vm1266 = vcmp.eq.f32.partialorder %v1265, 8.507059e+37
    %v1267 = vand.u32 %v1206, 2147483648
    %v1268 = vor.u32 1.1754944e-38, %v1267
    %v1269 = vsel %vm1266, %v1268, %v1264
    %v1270 = vmul.f32 1.0, %v1269
    %v1271 = vrcp.pop %v1207
    %v1272 = vmul.f32 %v1207, %v1271
    %v1273 = vsub.f32 1.0, %v1272
    %v1274 = vmul.f32 %v1271, %v1273
    %v1275 = vadd.f32 %v1271, %v1274
    %vm1276 = vweird.f32 %v1207
    %vm1277 = vweird.f32 %v1271
    %vm1278 = vmor %vm1276, %vm1277
    %v1279 = vsel %vm1278, %v1271, %v1275
    %v1280 = vand.u32 2147483647, %v1207
    %vm1281 = vcmp.eq.f32.partialorder %v1280, 8.507059e+37
    %v1282 = vand.u32 %v1207, 2147483648
    %v1283 = vor.u32 1.1754944e-38, %v1282
    %v1284 = vsel %vm1281, %v1283, %v1279
    %v1285 = vmul.f32 1.0, %v1284
    %v1286 = vrcp.pop %v1208
    %v1287 = vmul.f32 %v1208, %v1286
    %v1288 = vsub.f32 1.0, %v1287
    %v1289 = vmul.f32 %v1286, %v1288
    %v1290 = vadd.f32 %v1286, %v1289
    %vm1291 = vweird.f32 %v1208
    %vm1292 = vweird.f32 %v1286
    %vm1293 = vmor %vm1291, %vm1292
    %v1294 = vsel %vm1293, %v1286, %v1290
    %v1295 = vand.u32 2147483647, %v1208
    %vm1296 = vcmp.eq.f32.partialorder %v1295, 8.507059e+37
    %v1297 = vand.u32 %v1208, 2147483648
    %v1298 = vor.u32 1.1754944e-38, %v1297
    %v1299 = vsel %vm1296, %v1298, %v1294
    %v1300 = vmul.f32 1.0, %v1299
    %v1301 = vrcp.pop %v1209
    %v1302 = vmul.f32 %v1209, %v1301
    %v1303 = vsub.f32 1.0, %v1302
    %v1304 = vmul.f32 %v1301, %v1303
    %v1305 = vadd.f32 %v1301, %v1304
    %vm1306 = vweird.f32 %v1209
    %vm1307 = vweird.f32 %v1301
    %vm1308 = vmor %vm1306, %vm1307
    %v1309 = vsel %vm1308, %v1301, %v1305
    %v1310 = vand.u32 2147483647, %v1209
    %vm1311 = vcmp.eq.f32.partialorder %v1310, 8.507059e+37
    %v1312 = vand.u32 %v1209, 2147483648
    %v1313 = vor.u32 1.1754944e-38, %v1312
    %v1314 = vsel %vm1311, %v1313, %v1309
    %v1315 = vmul.f32 1.0, %v1314
    %v1316 = vrcp.pop %v1210
    %v1317 = vmul.f32 %v1210, %v1316
    %v1318 = vsub.f32 1.0, %v1317
    %v1319 = vmul.f32 %v1316, %v1318
    %v1320 = vadd.f32 %v1316, %v1319
    %vm1321 = vweird.f32 %v1210
    %vm1322 = vweird.f32 %v1316
    %vm1323 = vmor %vm1321, %vm1322
    %v1324 = vsel %vm1323, %v1316, %v1320
    %v1325 = vand.u32 2147483647, %v1210
    %vm1326 = vcmp.eq.f32.partialorder %v1325, 8.507059e+37
    %v1327 = vand.u32 %v1210, 2147483648
    %v1328 = vor.u32 1.1754944e-38, %v1327
    %v1329 = vsel %vm1326, %v1328, %v1324
    %v1330 = vmul.f32 1.0, %v1329
    %v1331 = vmul.f32 %v1171, %v1225
    %v1332 = vmul.f32 %v1172, %v1240
    %v1333 = vmul.f32 %v1173, %v1255
    %v1334 = vmul.f32 %v1174, %v1270
    %v1335 = vmul.f32 %v1175, %v1285
    %v1336 = vmul.f32 %v1176, %v1300
    %v1337 = vmul.f32 %v1177, %v1315
    %v1338 = vmul.f32 %v1178, %v1330
    %vm1339 = vcmp.lt.s32.totalorder %v117, 0
    %v1340 = vsub.s32 0, %v117
    %v1341 = vsel %vm1339, %v1340, %v117
    %v1342 = vshrl.u32 %v1341, 4
    %v1343 = vand.u32 %v1341, 15
    %v1344 = vsub.s32 0, %v1343
    %v1345 = vsel %vm1339, %v1344, %v1343
    %vm1346 = vcmp.lt.s32.totalorder %v118, 0
    %v1347 = vsub.s32 0, %v118
    %v1348 = vsel %vm1346, %v1347, %v118
    %v1349 = vshrl.u32 %v1348, 4
    %v1350 = vand.u32 %v1348, 15
    %v1351 = vsub.s32 0, %v1350
    %v1352 = vsel %vm1346, %v1351, %v1350
    %vm1353 = vcmp.lt.s32.totalorder %v671, 0
    %v1354 = vsub.s32 0, %v671
    %v1355 = vsel %vm1353, %v1354, %v671
    %v1356 = vshrl.u32 %v1355, 4
    %v1357 = vand.u32 %v1355, 15
    %v1358 = vsub.s32 0, %v1357
    %v1359 = vsel %vm1353, %v1358, %v1357
    %vm1360 = vcmp.lt.s32.totalorder %v672, 0
    %v1361 = vsub.s32 0, %v672
    %v1362 = vsel %vm1360, %v1361, %v672
    %v1363 = vshrl.u32 %v1362, 4
    %v1364 = vand.u32 %v1362, 15
    %v1365 = vsub.s32 0, %v1364
    %v1366 = vsel %vm1360, %v1365, %v1364
    %vm1367 = vcmp.ne.s32.totalorder %v1345, 0
    %vm1368 = vcmp.ne.s32.totalorder %v1352, 0
    %vm1369 = vcmp.ne.s32.totalorder %v1359, 0
    %vm1370 = vcmp.ne.s32.totalorder %v1366, 0
    %vm1371 = vcmp.lt.s32.totalorder %v1345, 0
    %vm1372 = vcmp.lt.s32.totalorder %v1352, 0
    %vm1373 = vcmp.lt.s32.totalorder %v1359, 0
    %vm1374 = vcmp.lt.s32.totalorder %v1366, 0
    %vm1375 = vmand %vm1371, %vm1367
    %vm1376 = vmand %vm1372, %vm1368
    %vm1377 = vmand %vm1373, %vm1369
    %vm1378 = vmand %vm1374, %vm1370
    %v1379 = vadd.s32 %v1345, 16
    %v1380 = vadd.s32 %v1352, 16
    %v1381 = vadd.s32 %v1359, 16
    %v1382 = vadd.s32 %v1366, 16
    %v1383 = vsel %vm1375, %v1379, %v1345
    %v1384 = vsel %vm1376, %v1380, %v1352
    %v1385 = vsel %vm1377, %v1381, %v1359
    %v1386 = vsel %vm1378, %v1382, %v1366
    %vm1387 = vcmp.ne.s32.totalorder %v1383, 0
    %vm1388 = vcmp.ne.s32.totalorder %v1384, 0
    %vm1389 = vcmp.ne.s32.totalorder %v1385, 0
    %vm1390 = vcmp.ne.s32.totalorder %v1386, 0
    %vm1391 = vcmp.ne.s32.totalorder %v1383, 15
    %vm1392 = vcmp.ne.s32.totalorder %v1384, 15
    %vm1393 = vcmp.ne.s32.totalorder %v1385, 15
    %vm1394 = vcmp.ne.s32.totalorder %v1386, 15
    %v1395 = vrot.slane %v1331, 7
    %v1396 = vrot.slane %v1332, 7
    %v1397 = vrot.slane %v1333, 7
    %v1398 = vrot.slane %v1334, 7
    %v1399 = vrot.slane %v1335, 7
    %v1400 = vrot.slane %v1336, 7
    %v1401 = vrot.slane %v1337, 7
    %v1402 = vrot.slane %v1338, 7
    %v1403 = vsel %vm147, %v1399, %v1401
    %v1404 = vsel %vm147, %v1400, %v1402
    %v1405 = vsel %vm147, %v1397, %v1399
    %v1406 = vsel %vm147, %v1398, %v1400
    %v1407 = vsel %vm147, %v1395, %v1397
    %v1408 = vsel %vm147, %v1396, %v1398
    %v1409 = vsel %vm147, %v1401, %v1395
    %v1410 = vsel %vm147, %v1402, %v1396
    %v1411 = vsel %vm1387, 1, 0
    %v1412 = vsel %vm1388, 1, 0
    %v1413 = vsel %vm1389, 1, 0
    %v1414 = vsel %vm1390, 1, 0
    %vm1415 = vcmp.eq.s32.totalorder %v1411, 1
    %vm1416 = vcmp.eq.s32.totalorder %v1412, 1
    %vm1417 = vcmp.eq.s32.totalorder %v1413, 1
    %vm1418 = vcmp.eq.s32.totalorder %v1414, 1
    %v1419 = vsel %vm1415, %v1409, 0.0
    %v1420 = vsel %vm1415, %v1410, 0.0
    %v1421 = vsel %vm1416, %v1407, 0.0
    %v1422 = vsel %vm1416, %v1408, 0.0
    %v1423 = vsel %vm1417, %v1405, 0.0
    %v1424 = vsel %vm1417, %v1406, 0.0
    %v1425 = vsel %vm1418, %v1403, 0.0
    %v1426 = vsel %vm1418, %v1404, 0.0
    %v1427 = vpack.c.bf16 %v1421, %v1419
    %v1428 = vpack.c.bf16 %v1422, %v1420
    %v1429 = vpack.c.bf16 %v1425, %v1423
    %v1430 = vpack.c.bf16 %v1426, %v1424
    %v1431 = vrot.slane %v1331, 1
    %v1432 = vrot.slane %v1332, 1
    %v1433 = vrot.slane %v1333, 1
    %v1434 = vrot.slane %v1334, 1
    %v1435 = vrot.slane %v1335, 1
    %v1436 = vrot.slane %v1336, 1
    %v1437 = vrot.slane %v1337, 1
    %v1438 = vrot.slane %v1338, 1
    %v1439 = vsel %vm161, %v1435, %v1437
    %v1440 = vsel %vm161, %v1436, %v1438
    %v1441 = vsel %vm161, %v1433, %v1435
    %v1442 = vsel %vm161, %v1434, %v1436
    %v1443 = vsel %vm161, %v1431, %v1433
    %v1444 = vsel %vm161, %v1432, %v1434
    %v1445 = vsel %vm161, %v1437, %v1431
    %v1446 = vsel %vm161, %v1438, %v1432
    %v1447 = vsel %vm1391, 1, 0
    %v1448 = vsel %vm1392, 1, 0
    %v1449 = vsel %vm1393, 1, 0
    %v1450 = vsel %vm1394, 1, 0
    %vm1451 = vcmp.eq.s32.totalorder %v1447, 1
    %vm1452 = vcmp.eq.s32.totalorder %v1448, 1
    %vm1453 = vcmp.eq.s32.totalorder %v1449, 1
    %vm1454 = vcmp.eq.s32.totalorder %v1450, 1
    %v1455 = vsel %vm1451, %v1443, 0.0
    %v1456 = vsel %vm1451, %v1444, 0.0
    %v1457 = vsel %vm1452, %v1441, 0.0
    %v1458 = vsel %vm1452, %v1442, 0.0
    %v1459 = vsel %vm1453, %v1439, 0.0
    %v1460 = vsel %vm1453, %v1440, 0.0
    %v1461 = vsel %vm1454, %v1445, 0.0
    %v1462 = vsel %vm1454, %v1446, 0.0
    %v1463 = vpack.c.bf16 %v1457, %v1455
    %v1464 = vpack.c.bf16 %v1458, %v1456
    %v1465 = vpack.c.bf16 %v1461, %v1459
    %v1466 = vpack.c.bf16 %v1462, %v1460
    %v1467 = vpack.c.bf16 %v1333, %v1331
    %v1468 = vpack.c.bf16 %v1334, %v1332
    %v1469 = vpack.c.bf16 %v1337, %v1335
    %v1470 = vpack.c.bf16 %v1338, %v1336
    %v1471 = vld [vmem:[#allocation4] sm:$0xff]
    %v1472 = vld [vmem:[#allocation4 + $0x8] sm:$0xff]
    %v1473 = vld [vmem:[#allocation4 + $0x10] sm:$0xff]
    %v1474 = vld [vmem:[#allocation4 + $0x18] sm:$0xff]
    %v1475 = vld [vmem:[#allocation4 + $0x20] sm:$0xff]
    %v1476 = vld [vmem:[#allocation4 + $0x28] sm:$0xff]
    %v1477 = vld [vmem:[#allocation4 + $0x30] sm:$0xff]
    %v1478 = vld [vmem:[#allocation4 + $0x38] sm:$0xff]
    %v1479 = vld [vmem:[#allocation4 + $0x40] sm:$0xff]
    %v1480 = vld [vmem:[#allocation4 + $0x48] sm:$0xff]
    %v1481 = vld [vmem:[#allocation4 + $0x50] sm:$0xff]
    %v1482 = vld [vmem:[#allocation4 + $0x58] sm:$0xff]
    %v1483 = vld [vmem:[#allocation4 + $0x60] sm:$0xff]
    %v1484 = vld [vmem:[#allocation4 + $0x68] sm:$0xff]
    %v1485 = vld [vmem:[#allocation4 + $0x70] sm:$0xff]
    %v1486 = vld [vmem:[#allocation4 + $0x78] sm:$0xff]
    %v1487 = vld [vmem:[#allocation4 + $0x80] sm:$0xff]
    %v1488 = vld [vmem:[#allocation4 + $0x88] sm:$0xff]
    %v1489 = vld [vmem:[#allocation4 + $0x90] sm:$0xff]
    %v1490 = vld [vmem:[#allocation4 + $0x98] sm:$0xff]
    %v1491 = vld [vmem:[#allocation4 + $0xa0] sm:$0xff]
    %v1492 = vld [vmem:[#allocation4 + $0xa8] sm:$0xff]
    %v1493 = vld [vmem:[#allocation4 + $0xb0] sm:$0xff]
    %v1494 = vld [vmem:[#allocation4 + $0xb8] sm:$0xff]
    %v1495 = vld [vmem:[#allocation4 + $0xc0] sm:$0xff]
    %v1496 = vld [vmem:[#allocation4 + $0xc8] sm:$0xff]
    %v1497 = vld [vmem:[#allocation4 + $0xd0] sm:$0xff]
    %v1498 = vld [vmem:[#allocation4 + $0xd8] sm:$0xff]
    %v1499 = vld [vmem:[#allocation4 + $0xe0] sm:$0xff]
    %v1500 = vld [vmem:[#allocation4 + $0xe8] sm:$0xff]
    %v1501 = vld [vmem:[#allocation4 + $0xf0] sm:$0xff]
    %v1502 = vld [vmem:[#allocation4 + $0xf8] sm:$0xff]
    %s1503 = scalar_lea.vmem [#allocation4], 256
    %v1504 = vld [vmem:[%s1503] sm:$0xff]
    %v1505 = vld [vmem:[%s1503 + $0x8] sm:$0xff]
    %v1506 = vld [vmem:[%s1503 + $0x10] sm:$0xff]
    %v1507 = vld [vmem:[%s1503 + $0x18] sm:$0xff]
    %v1508 = vld [vmem:[%s1503 + $0x20] sm:$0xff]
    %v1509 = vld [vmem:[%s1503 + $0x28] sm:$0xff]
    %v1510 = vld [vmem:[%s1503 + $0x30] sm:$0xff]
    %v1511 = vld [vmem:[%s1503 + $0x38] sm:$0xff]
    %v1512 = vld [vmem:[%s1503 + $0x40] sm:$0xff]
    %v1513 = vld [vmem:[%s1503 + $0x48] sm:$0xff]
    %v1514 = vld [vmem:[%s1503 + $0x50] sm:$0xff]
    %v1515 = vld [vmem:[%s1503 + $0x58] sm:$0xff]
    %v1516 = vld [vmem:[%s1503 + $0x60] sm:$0xff]
    %v1517 = vld [vmem:[%s1503 + $0x68] sm:$0xff]
    %v1518 = vld [vmem:[%s1503 + $0x70] sm:$0xff]
    %v1519 = vld [vmem:[%s1503 + $0x78] sm:$0xff]
    %v1520 = vld [vmem:[%s1503 + $0x80] sm:$0xff]
    %v1521 = vld [vmem:[%s1503 + $0x88] sm:$0xff]
    %v1522 = vld [vmem:[%s1503 + $0x90] sm:$0xff]
    %v1523 = vld [vmem:[%s1503 + $0x98] sm:$0xff]
    %v1524 = vld [vmem:[%s1503 + $0xa0] sm:$0xff]
    %v1525 = vld [vmem:[%s1503 + $0xa8] sm:$0xff]
    %v1526 = vld [vmem:[%s1503 + $0xb0] sm:$0xff]
    %v1527 = vld [vmem:[%s1503 + $0xb8] sm:$0xff]
    %v1528 = vld [vmem:[%s1503 + $0xc0] sm:$0xff]
    %v1529 = vld [vmem:[%s1503 + $0xc8] sm:$0xff]
    %v1530 = vld [vmem:[%s1503 + $0xd0] sm:$0xff]
    %v1531 = vld [vmem:[%s1503 + $0xd8] sm:$0xff]
    %v1532 = vld [vmem:[%s1503 + $0xe0] sm:$0xff]
    %v1533 = vld [vmem:[%s1503 + $0xe8] sm:$0xff]
    %v1534 = vld [vmem:[%s1503 + $0xf0] sm:$0xff]
    %v1535 = vld [vmem:[%s1503 + $0xf8] sm:$0xff]
    %v1568 = vunpack.c.l.b16 %v1504
    %v1569 = vunpack.c.h.b16 %v1504
    %v1570 = vunpack.c.l.b16 %v1505
    %v1571 = vunpack.c.h.b16 %v1505
    %v1572 = vunpack.c.l.b16 %v1506
    %v1573 = vunpack.c.h.b16 %v1506
    %v1574 = vunpack.c.l.b16 %v1507
    %v1575 = vunpack.c.h.b16 %v1507
    %v1576 = vunpack.c.l.b16 %v1508
    %v1577 = vunpack.c.h.b16 %v1508
    %v1578 = vunpack.c.l.b16 %v1509
    %v1579 = vunpack.c.h.b16 %v1509
    %v1580 = vunpack.c.l.b16 %v1510
    %v1581 = vunpack.c.h.b16 %v1510
    %v1582 = vunpack.c.l.b16 %v1511
    %v1583 = vunpack.c.h.b16 %v1511
    %v1584 = vunpack.c.l.b16 %v1512
    %v1585 = vunpack.c.h.b16 %v1512
    %v1586 = vunpack.c.l.b16 %v1513
    %v1587 = vunpack.c.h.b16 %v1513
    %v1588 = vunpack.c.l.b16 %v1514
    %v1589 = vunpack.c.h.b16 %v1514
    %v1590 = vunpack.c.l.b16 %v1515
    %v1591 = vunpack.c.h.b16 %v1515
    %v1592 = vunpack.c.l.b16 %v1516
    %v1593 = vunpack.c.h.b16 %v1516
    %v1594 = vunpack.c.l.b16 %v1517
    %v1595 = vunpack.c.h.b16 %v1517
    %v1596 = vunpack.c.l.b16 %v1518
    %v1597 = vunpack.c.h.b16 %v1518
    %v1598 = vunpack.c.l.b16 %v1519
    %v1599 = vunpack.c.h.b16 %v1519
    %v1600 = vunpack.c.l.b16 %v1520
    %v1601 = vunpack.c.h.b16 %v1520
    %v1602 = vunpack.c.l.b16 %v1521
    %v1603 = vunpack.c.h.b16 %v1521
    %v1604 = vunpack.c.l.b16 %v1522
    %v1605 = vunpack.c.h.b16 %v1522
    %v1606 = vunpack.c.l.b16 %v1523
    %v1607 = vunpack.c.h.b16 %v1523
    %v1608 = vunpack.c.l.b16 %v1524
    %v1609 = vunpack.c.h.b16 %v1524
    %v1610 = vunpack.c.l.b16 %v1525
    %v1611 = vunpack.c.h.b16 %v1525
    %v1612 = vunpack.c.l.b16 %v1526
    %v1613 = vunpack.c.h.b16 %v1526
    %v1614 = vunpack.c.l.b16 %v1527
    %v1615 = vunpack.c.h.b16 %v1527
    %v1616 = vunpack.c.l.b16 %v1528
    %v1617 = vunpack.c.h.b16 %v1528
    %v1618 = vunpack.c.l.b16 %v1529
    %v1619 = vunpack.c.h.b16 %v1529
    %v1620 = vunpack.c.l.b16 %v1530
    %v1621 = vunpack.c.h.b16 %v1530
    %v1622 = vunpack.c.l.b16 %v1531
    %v1623 = vunpack.c.h.b16 %v1531
    %v1624 = vunpack.c.l.b16 %v1532
    %v1625 = vunpack.c.h.b16 %v1532
    %v1626 = vunpack.c.l.b16 %v1533
    %v1627 = vunpack.c.h.b16 %v1533
    %v1628 = vunpack.c.l.b16 %v1534
    %v1629 = vunpack.c.h.b16 %v1534
    %v1630 = vunpack.c.l.b16 %v1535
    %v1631 = vunpack.c.h.b16 %v1535
    %v1632 = vpack.c.b16 %v1570, %v1568
    %v1633 = vpack.c.b16 %v1571, %v1569
    %v1634 = vpack.c.b16 %v1574, %v1572
    %v1635 = vpack.c.b16 %v1575, %v1573
    %v1636 = vpack.c.b16 %v1578, %v1576
    %v1637 = vpack.c.b16 %v1579, %v1577
    %v1638 = vpack.c.b16 %v1582, %v1580
    %v1639 = vpack.c.b16 %v1583, %v1581
    %v1640 = vpack.c.b16 %v1586, %v1584
    %v1641 = vpack.c.b16 %v1587, %v1585
    %v1642 = vpack.c.b16 %v1590, %v1588
    %v1643 = vpack.c.b16 %v1591, %v1589
    %v1644 = vpack.c.b16 %v1594, %v1592
    %v1645 = vpack.c.b16 %v1595, %v1593
    %v1646 = vpack.c.b16 %v1598, %v1596
    %v1647 = vpack.c.b16 %v1599, %v1597
    %v1648 = vpack.c.b16 %v1602, %v1600
    %v1649 = vpack.c.b16 %v1603, %v1601
    %v1650 = vpack.c.b16 %v1606, %v1604
    %v1651 = vpack.c.b16 %v1607, %v1605
    %v1652 = vpack.c.b16 %v1610, %v1608
    %v1653 = vpack.c.b16 %v1611, %v1609
    %v1654 = vpack.c.b16 %v1614, %v1612
    %v1655 = vpack.c.b16 %v1615, %v1613
    %v1656 = vpack.c.b16 %v1618, %v1616
    %v1657 = vpack.c.b16 %v1619, %v1617
    %v1658 = vpack.c.b16 %v1622, %v1620
    %v1659 = vpack.c.b16 %v1623, %v1621
    %v1660 = vpack.c.b16 %v1626, %v1624
    %v1661 = vpack.c.b16 %v1627, %v1625
    %v1662 = vpack.c.b16 %v1630, %v1628
    %v1663 = vpack.c.b16 %v1631, %v1629
    %1696 = vmatpush.bf16.msra.mxu0 %v1646
    %1697 = vmatpush.bf16.msra.mxu0 %v1644
    %1698 = vmatpush.bf16.msra.mxu0 %v1642
    %1699 = vmatpush.bf16.msra.mxu0 %v1640
    %1700 = vmatpush.bf16.msra.mxu0 %v1638
    %1701 = vmatpush.bf16.msra.mxu0 %v1636
    %1702 = vmatpush.bf16.msra.mxu0 %v1634
    %1703 = vmatpush.bf16.msra.mxu0 %v1632
    %1704 = vmatmul.bf16.gmra.mxu0 %v1467
    %v1705 = vpop.f32.mrf.mxu0
    %v1706 = vadd.f32 0.0, %v1705
    %v1707 = vpop.f32.mrf.mxu0
    %v1708 = vadd.f32 0.0, %v1707
    %1709 = vmatmul.bf16.gmra.mxu0 %v1469
    %v1710 = vpop.f32.mrf.mxu0
    %v1711 = vadd.f32 0.0, %v1710
    %v1712 = vpop.f32.mrf.mxu0
    %v1713 = vadd.f32 0.0, %v1712
    %1714 = vdwg.mxu0
    %1715 = vmatpush.bf16.msra.mxu0 %v1662
    %1716 = vmatpush.bf16.msra.mxu0 %v1660
    %1717 = vmatpush.bf16.msra.mxu0 %v1658
    %1718 = vmatpush.bf16.msra.mxu0 %v1656
    %1719 = vmatpush.bf16.msra.mxu0 %v1654
    %1720 = vmatpush.bf16.msra.mxu0 %v1652
    %1721 = vmatpush.bf16.msra.mxu0 %v1650
    %1722 = vmatpush.bf16.msra.mxu0 %v1648
    %1723 = vmatmul.bf16.gmra.mxu0 %v1468
    %v1724 = vpop.f32.mrf.mxu0
    %v1725 = vadd.f32 %v1706, %v1724
    %v1726 = vpop.f32.mrf.mxu0
    %v1727 = vadd.f32 %v1708, %v1726
    %1728 = vmatmul.bf16.gmra.mxu0 %v1470
    %v1729 = vpop.f32.mrf.mxu0
    %v1730 = vadd.f32 %v1711, %v1729
    %v1731 = vpop.f32.mrf.mxu0
    %v1732 = vadd.f32 %v1713, %v1731
    %1733 = vdwg.mxu0
    %1734 = vmatpush.bf16.msra.mxu0 %v1647
    %1735 = vmatpush.bf16.msra.mxu0 %v1645
    %1736 = vmatpush.bf16.msra.mxu0 %v1643
    %1737 = vmatpush.bf16.msra.mxu0 %v1641
    %1738 = vmatpush.bf16.msra.mxu0 %v1639
    %1739 = vmatpush.bf16.msra.mxu0 %v1637
    %1740 = vmatpush.bf16.msra.mxu0 %v1635
    %1741 = vmatpush.bf16.msra.mxu0 %v1633
    %1742 = vmatmul.bf16.gmra.mxu0 %v1467
    %v1743 = vpop.f32.mrf.mxu0
    %v1744 = vadd.f32 0.0, %v1743
    %v1745 = vpop.f32.mrf.mxu0
    %v1746 = vadd.f32 0.0, %v1745
    %1747 = vmatmul.bf16.gmra.mxu0 %v1469
    %v1748 = vpop.f32.mrf.mxu0
    %v1749 = vadd.f32 0.0, %v1748
    %v1750 = vpop.f32.mrf.mxu0
    %v1751 = vadd.f32 0.0, %v1750
    %1752 = vdwg.mxu0
    %1753 = vmatpush.bf16.msra.mxu0 %v1663
    %1754 = vmatpush.bf16.msra.mxu0 %v1661
    %1755 = vmatpush.bf16.msra.mxu0 %v1659
    %1756 = vmatpush.bf16.msra.mxu0 %v1657
    %1757 = vmatpush.bf16.msra.mxu0 %v1655
    %1758 = vmatpush.bf16.msra.mxu0 %v1653
    %1759 = vmatpush.bf16.msra.mxu0 %v1651
    %1760 = vmatpush.bf16.msra.mxu0 %v1649
    %1761 = vmatmul.bf16.gmra.mxu0 %v1468
    %v1762 = vpop.f32.mrf.mxu0
    %v1763 = vadd.f32 %v1744, %v1762
    %v1764 = vpop.f32.mrf.mxu0
    %v1765 = vadd.f32 %v1746, %v1764
    %1766 = vmatmul.bf16.gmra.mxu0 %v1470
    %v1767 = vpop.f32.mrf.mxu0
    %v1768 = vadd.f32 %v1749, %v1767
    %v1769 = vpop.f32.mrf.mxu0
    %v1770 = vadd.f32 %v1751, %v1769
    %1771 = vdwg.mxu0
    %v1804 = vunpack.c.l.b16 %v1471
    %v1805 = vunpack.c.h.b16 %v1471
    %v1806 = vunpack.c.l.b16 %v1472
    %v1807 = vunpack.c.h.b16 %v1472
    %v1808 = vunpack.c.l.b16 %v1473
    %v1809 = vunpack.c.h.b16 %v1473
    %v1810 = vunpack.c.l.b16 %v1474
    %v1811 = vunpack.c.h.b16 %v1474
    %v1812 = vunpack.c.l.b16 %v1475
    %v1813 = vunpack.c.h.b16 %v1475
    %v1814 = vunpack.c.l.b16 %v1476
    %v1815 = vunpack.c.h.b16 %v1476
    %v1816 = vunpack.c.l.b16 %v1477
    %v1817 = vunpack.c.h.b16 %v1477
    %v1818 = vunpack.c.l.b16 %v1478
    %v1819 = vunpack.c.h.b16 %v1478
    %v1820 = vunpack.c.l.b16 %v1479
    %v1821 = vunpack.c.h.b16 %v1479
    %v1822 = vunpack.c.l.b16 %v1480
    %v1823 = vunpack.c.h.b16 %v1480
    %v1824 = vunpack.c.l.b16 %v1481
    %v1825 = vunpack.c.h.b16 %v1481
    %v1826 = vunpack.c.l.b16 %v1482
    %v1827 = vunpack.c.h.b16 %v1482
    %v1828 = vunpack.c.l.b16 %v1483
    %v1829 = vunpack.c.h.b16 %v1483
    %v1830 = vunpack.c.l.b16 %v1484
    %v1831 = vunpack.c.h.b16 %v1484
    %v1832 = vunpack.c.l.b16 %v1485
    %v1833 = vunpack.c.h.b16 %v1485
    %v1834 = vunpack.c.l.b16 %v1486
    %v1835 = vunpack.c.h.b16 %v1486
    %v1836 = vunpack.c.l.b16 %v1487
    %v1837 = vunpack.c.h.b16 %v1487
    %v1838 = vunpack.c.l.b16 %v1488
    %v1839 = vunpack.c.h.b16 %v1488
    %v1840 = vunpack.c.l.b16 %v1489
    %v1841 = vunpack.c.h.b16 %v1489
    %v1842 = vunpack.c.l.b16 %v1490
    %v1843 = vunpack.c.h.b16 %v1490
    %v1844 = vunpack.c.l.b16 %v1491
    %v1845 = vunpack.c.h.b16 %v1491
    %v1846 = vunpack.c.l.b16 %v1492
    %v1847 = vunpack.c.h.b16 %v1492
    %v1848 = vunpack.c.l.b16 %v1493
    %v1849 = vunpack.c.h.b16 %v1493
    %v1850 = vunpack.c.l.b16 %v1494
    %v1851 = vunpack.c.h.b16 %v1494
    %v1852 = vunpack.c.l.b16 %v1495
    %v1853 = vunpack.c.h.b16 %v1495
    %v1854 = vunpack.c.l.b16 %v1496
    %v1855 = vunpack.c.h.b16 %v1496
    %v1856 = vunpack.c.l.b16 %v1497
    %v1857 = vunpack.c.h.b16 %v1497
    %v1858 = vunpack.c.l.b16 %v1498
    %v1859 = vunpack.c.h.b16 %v1498
    %v1860 = vunpack.c.l.b16 %v1499
    %v1861 = vunpack.c.h.b16 %v1499
    %v1862 = vunpack.c.l.b16 %v1500
    %v1863 = vunpack.c.h.b16 %v1500
    %v1864 = vunpack.c.l.b16 %v1501
    %v1865 = vunpack.c.h.b16 %v1501
    %v1866 = vunpack.c.l.b16 %v1502
    %v1867 = vunpack.c.h.b16 %v1502
    %v1868 = vpack.c.b16 %v1806, %v1804
    %v1869 = vpack.c.b16 %v1807, %v1805
    %v1870 = vpack.c.b16 %v1810, %v1808
    %v1871 = vpack.c.b16 %v1811, %v1809
    %v1872 = vpack.c.b16 %v1814, %v1812
    %v1873 = vpack.c.b16 %v1815, %v1813
    %v1874 = vpack.c.b16 %v1818, %v1816
    %v1875 = vpack.c.b16 %v1819, %v1817
    %v1876 = vpack.c.b16 %v1822, %v1820
    %v1877 = vpack.c.b16 %v1823, %v1821
    %v1878 = vpack.c.b16 %v1826, %v1824
    %v1879 = vpack.c.b16 %v1827, %v1825
    %v1880 = vpack.c.b16 %v1830, %v1828
    %v1881 = vpack.c.b16 %v1831, %v1829
    %v1882 = vpack.c.b16 %v1834, %v1832
    %v1883 = vpack.c.b16 %v1835, %v1833
    %v1884 = vpack.c.b16 %v1838, %v1836
    %v1885 = vpack.c.b16 %v1839, %v1837
    %v1886 = vpack.c.b16 %v1842, %v1840
    %v1887 = vpack.c.b16 %v1843, %v1841
    %v1888 = vpack.c.b16 %v1846, %v1844
    %v1889 = vpack.c.b16 %v1847, %v1845
    %v1890 = vpack.c.b16 %v1850, %v1848
    %v1891 = vpack.c.b16 %v1851, %v1849
    %v1892 = vpack.c.b16 %v1854, %v1852
    %v1893 = vpack.c.b16 %v1855, %v1853
    %v1894 = vpack.c.b16 %v1858, %v1856
    %v1895 = vpack.c.b16 %v1859, %v1857
    %v1896 = vpack.c.b16 %v1862, %v1860
    %v1897 = vpack.c.b16 %v1863, %v1861
    %v1898 = vpack.c.b16 %v1866, %v1864
    %v1899 = vpack.c.b16 %v1867, %v1865
    %1932 = vmatpush.bf16.msra.mxu0 %v1882
    %1933 = vmatpush.bf16.msra.mxu0 %v1880
    %1934 = vmatpush.bf16.msra.mxu0 %v1878
    %1935 = vmatpush.bf16.msra.mxu0 %v1876
    %1936 = vmatpush.bf16.msra.mxu0 %v1874
    %1937 = vmatpush.bf16.msra.mxu0 %v1872
    %1938 = vmatpush.bf16.msra.mxu0 %v1870
    %1939 = vmatpush.bf16.msra.mxu0 %v1868
    %1940 = vmatmul.bf16.gmra.mxu0 %v1427
    %v1941 = vpop.f32.mrf.mxu0
    %v1942 = vadd.f32 %v1725, %v1941
    %v1943 = vpop.f32.mrf.mxu0
    %v1944 = vadd.f32 %v1727, %v1943
    %1945 = vmatmul.bf16.gmra.mxu0 %v1429
    %v1946 = vpop.f32.mrf.mxu0
    %v1947 = vadd.f32 %v1730, %v1946
    %v1948 = vpop.f32.mrf.mxu0
    %v1949 = vadd.f32 %v1732, %v1948
    %1950 = vdwg.mxu0
    %1951 = vmatpush.bf16.msra.mxu0 %v1898
    %1952 = vmatpush.bf16.msra.mxu0 %v1896
    %1953 = vmatpush.bf16.msra.mxu0 %v1894
    %1954 = vmatpush.bf16.msra.mxu0 %v1892
    %1955 = vmatpush.bf16.msra.mxu0 %v1890
    %1956 = vmatpush.bf16.msra.mxu0 %v1888
    %1957 = vmatpush.bf16.msra.mxu0 %v1886
    %1958 = vmatpush.bf16.msra.mxu0 %v1884
    %1959 = vmatmul.bf16.gmra.mxu0 %v1428
    %v1960 = vpop.f32.mrf.mxu0
    %v1961 = vadd.f32 %v1942, %v1960
    %v1962 = vpop.f32.mrf.mxu0
    %v1963 = vadd.f32 %v1944, %v1962
    %1964 = vmatmul.bf16.gmra.mxu0 %v1430
    %v1965 = vpop.f32.mrf.mxu0
    %v1966 = vadd.f32 %v1947, %v1965
    %v1967 = vpop.f32.mrf.mxu0
    %v1968 = vadd.f32 %v1949, %v1967
    %1969 = vdwg.mxu0
    %1970 = vmatpush.bf16.msra.mxu0 %v1883
    %1971 = vmatpush.bf16.msra.mxu0 %v1881
    %1972 = vmatpush.bf16.msra.mxu0 %v1879
    %1973 = vmatpush.bf16.msra.mxu0 %v1877
    %1974 = vmatpush.bf16.msra.mxu0 %v1875
    %1975 = vmatpush.bf16.msra.mxu0 %v1873
    %1976 = vmatpush.bf16.msra.mxu0 %v1871
    %1977 = vmatpush.bf16.msra.mxu0 %v1869
    %1978 = vmatmul.bf16.gmra.mxu0 %v1427
    %v1979 = vpop.f32.mrf.mxu0
    %v1980 = vadd.f32 %v1763, %v1979
    %v1981 = vpop.f32.mrf.mxu0
    %v1982 = vadd.f32 %v1765, %v1981
    %1983 = vmatmul.bf16.gmra.mxu0 %v1429
    %v1984 = vpop.f32.mrf.mxu0
    %v1985 = vadd.f32 %v1768, %v1984
    %v1986 = vpop.f32.mrf.mxu0
    %v1987 = vadd.f32 %v1770, %v1986
    %1988 = vdwg.mxu0
    %1989 = vmatpush.bf16.msra.mxu0 %v1899
    %1990 = vmatpush.bf16.msra.mxu0 %v1897
    %1991 = vmatpush.bf16.msra.mxu0 %v1895
    %1992 = vmatpush.bf16.msra.mxu0 %v1893
    %1993 = vmatpush.bf16.msra.mxu0 %v1891
    %1994 = vmatpush.bf16.msra.mxu0 %v1889
    %1995 = vmatpush.bf16.msra.mxu0 %v1887
    %1996 = vmatpush.bf16.msra.mxu0 %v1885
    %1997 = vmatmul.bf16.gmra.mxu0 %v1428
    %v1998 = vpop.f32.mrf.mxu0
    %v1999 = vadd.f32 %v1980, %v1998
    %v2000 = vpop.f32.mrf.mxu0
    %v2001 = vadd.f32 %v1982, %v2000
    %2002 = vmatmul.bf16.gmra.mxu0 %v1430
    %v2003 = vpop.f32.mrf.mxu0
    %v2004 = vadd.f32 %v1985, %v2003
    %v2005 = vpop.f32.mrf.mxu0
    %v2006 = vadd.f32 %v1987, %v2005
    %2007 = vdwg.mxu0
    %s2008 = scalar_lea.vmem [#allocation4], 512
    %v2009 = vld [vmem:[%s2008] sm:$0xff]
    %v2010 = vld [vmem:[%s2008 + $0x8] sm:$0xff]
    %v2011 = vld [vmem:[%s2008 + $0x10] sm:$0xff]
    %v2012 = vld [vmem:[%s2008 + $0x18] sm:$0xff]
    %v2013 = vld [vmem:[%s2008 + $0x20] sm:$0xff]
    %v2014 = vld [vmem:[%s2008 + $0x28] sm:$0xff]
    %v2015 = vld [vmem:[%s2008 + $0x30] sm:$0xff]
    %v2016 = vld [vmem:[%s2008 + $0x38] sm:$0xff]
    %v2017 = vld [vmem:[%s2008 + $0x40] sm:$0xff]
    %v2018 = vld [vmem:[%s2008 + $0x48] sm:$0xff]
    %v2019 = vld [vmem:[%s2008 + $0x50] sm:$0xff]
    %v2020 = vld [vmem:[%s2008 + $0x58] sm:$0xff]
    %v2021 = vld [vmem:[%s2008 + $0x60] sm:$0xff]
    %v2022 = vld [vmem:[%s2008 + $0x68] sm:$0xff]
    %v2023 = vld [vmem:[%s2008 + $0x70] sm:$0xff]
    %v2024 = vld [vmem:[%s2008 + $0x78] sm:$0xff]
    %v2025 = vld [vmem:[%s2008 + $0x80] sm:$0xff]
    %v2026 = vld [vmem:[%s2008 + $0x88] sm:$0xff]
    %v2027 = vld [vmem:[%s2008 + $0x90] sm:$0xff]
    %v2028 = vld [vmem:[%s2008 + $0x98] sm:$0xff]
    %v2029 = vld [vmem:[%s2008 + $0xa0] sm:$0xff]
    %v2030 = vld [vmem:[%s2008 + $0xa8] sm:$0xff]
    %v2031 = vld [vmem:[%s2008 + $0xb0] sm:$0xff]
    %v2032 = vld [vmem:[%s2008 + $0xb8] sm:$0xff]
    %v2033 = vld [vmem:[%s2008 + $0xc0] sm:$0xff]
    %v2034 = vld [vmem:[%s2008 + $0xc8] sm:$0xff]
    %v2035 = vld [vmem:[%s2008 + $0xd0] sm:$0xff]
    %v2036 = vld [vmem:[%s2008 + $0xd8] sm:$0xff]
    %v2037 = vld [vmem:[%s2008 + $0xe0] sm:$0xff]
    %v2038 = vld [vmem:[%s2008 + $0xe8] sm:$0xff]
    %v2039 = vld [vmem:[%s2008 + $0xf0] sm:$0xff]
    %v2040 = vld [vmem:[%s2008 + $0xf8] sm:$0xff]
    %v2073 = vunpack.c.l.b16 %v2009
    %v2074 = vunpack.c.h.b16 %v2009
    %v2075 = vunpack.c.l.b16 %v2010
    %v2076 = vunpack.c.h.b16 %v2010
    %v2077 = vunpack.c.l.b16 %v2011
    %v2078 = vunpack.c.h.b16 %v2011
    %v2079 = vunpack.c.l.b16 %v2012
    %v2080 = vunpack.c.h.b16 %v2012
    %v2081 = vunpack.c.l.b16 %v2013
    %v2082 = vunpack.c.h.b16 %v2013
    %v2083 = vunpack.c.l.b16 %v2014
    %v2084 = vunpack.c.h.b16 %v2014
    %v2085 = vunpack.c.l.b16 %v2015
    %v2086 = vunpack.c.h.b16 %v2015
    %v2087 = vunpack.c.l.b16 %v2016
    %v2088 = vunpack.c.h.b16 %v2016
    %v2089 = vunpack.c.l.b16 %v2017
    %v2090 = vunpack.c.h.b16 %v2017
    %v2091 = vunpack.c.l.b16 %v2018
    %v2092 = vunpack.c.h.b16 %v2018
    %v2093 = vunpack.c.l.b16 %v2019
    %v2094 = vunpack.c.h.b16 %v2019
    %v2095 = vunpack.c.l.b16 %v2020
    %v2096 = vunpack.c.h.b16 %v2020
    %v2097 = vunpack.c.l.b16 %v2021
    %v2098 = vunpack.c.h.b16 %v2021
    %v2099 = vunpack.c.l.b16 %v2022
    %v2100 = vunpack.c.h.b16 %v2022
    %v2101 = vunpack.c.l.b16 %v2023
    %v2102 = vunpack.c.h.b16 %v2023
    %v2103 = vunpack.c.l.b16 %v2024
    %v2104 = vunpack.c.h.b16 %v2024
    %v2105 = vunpack.c.l.b16 %v2025
    %v2106 = vunpack.c.h.b16 %v2025
    %v2107 = vunpack.c.l.b16 %v2026
    %v2108 = vunpack.c.h.b16 %v2026
    %v2109 = vunpack.c.l.b16 %v2027
    %v2110 = vunpack.c.h.b16 %v2027
    %v2111 = vunpack.c.l.b16 %v2028
    %v2112 = vunpack.c.h.b16 %v2028
    %v2113 = vunpack.c.l.b16 %v2029
    %v2114 = vunpack.c.h.b16 %v2029
    %v2115 = vunpack.c.l.b16 %v2030
    %v2116 = vunpack.c.h.b16 %v2030
    %v2117 = vunpack.c.l.b16 %v2031
    %v2118 = vunpack.c.h.b16 %v2031
    %v2119 = vunpack.c.l.b16 %v2032
    %v2120 = vunpack.c.h.b16 %v2032
    %v2121 = vunpack.c.l.b16 %v2033
    %v2122 = vunpack.c.h.b16 %v2033
    %v2123 = vunpack.c.l.b16 %v2034
    %v2124 = vunpack.c.h.b16 %v2034
    %v2125 = vunpack.c.l.b16 %v2035
    %v2126 = vunpack.c.h.b16 %v2035
    %v2127 = vunpack.c.l.b16 %v2036
    %v2128 = vunpack.c.h.b16 %v2036
    %v2129 = vunpack.c.l.b16 %v2037
    %v2130 = vunpack.c.h.b16 %v2037
    %v2131 = vunpack.c.l.b16 %v2038
    %v2132 = vunpack.c.h.b16 %v2038
    %v2133 = vunpack.c.l.b16 %v2039
    %v2134 = vunpack.c.h.b16 %v2039
    %v2135 = vunpack.c.l.b16 %v2040
    %v2136 = vunpack.c.h.b16 %v2040
    %v2137 = vpack.c.b16 %v2075, %v2073
    %v2138 = vpack.c.b16 %v2076, %v2074
    %v2139 = vpack.c.b16 %v2079, %v2077
    %v2140 = vpack.c.b16 %v2080, %v2078
    %v2141 = vpack.c.b16 %v2083, %v2081
    %v2142 = vpack.c.b16 %v2084, %v2082
    %v2143 = vpack.c.b16 %v2087, %v2085
    %v2144 = vpack.c.b16 %v2088, %v2086
    %v2145 = vpack.c.b16 %v2091, %v2089
    %v2146 = vpack.c.b16 %v2092, %v2090
    %v2147 = vpack.c.b16 %v2095, %v2093
    %v2148 = vpack.c.b16 %v2096, %v2094
    %v2149 = vpack.c.b16 %v2099, %v2097
    %v2150 = vpack.c.b16 %v2100, %v2098
    %v2151 = vpack.c.b16 %v2103, %v2101
    %v2152 = vpack.c.b16 %v2104, %v2102
    %v2153 = vpack.c.b16 %v2107, %v2105
    %v2154 = vpack.c.b16 %v2108, %v2106
    %v2155 = vpack.c.b16 %v2111, %v2109
    %v2156 = vpack.c.b16 %v2112, %v2110
    %v2157 = vpack.c.b16 %v2115, %v2113
    %v2158 = vpack.c.b16 %v2116, %v2114
    %v2159 = vpack.c.b16 %v2119, %v2117
    %v2160 = vpack.c.b16 %v2120, %v2118
    %v2161 = vpack.c.b16 %v2123, %v2121
    %v2162 = vpack.c.b16 %v2124, %v2122
    %v2163 = vpack.c.b16 %v2127, %v2125
    %v2164 = vpack.c.b16 %v2128, %v2126
    %v2165 = vpack.c.b16 %v2131, %v2129
    %v2166 = vpack.c.b16 %v2132, %v2130
    %v2167 = vpack.c.b16 %v2135, %v2133
    %v2168 = vpack.c.b16 %v2136, %v2134
    %2201 = vmatpush.bf16.msra.mxu0 %v2151
    %2202 = vmatpush.bf16.msra.mxu0 %v2149
    %2203 = vmatpush.bf16.msra.mxu0 %v2147
    %2204 = vmatpush.bf16.msra.mxu0 %v2145
    %2205 = vmatpush.bf16.msra.mxu0 %v2143
    %2206 = vmatpush.bf16.msra.mxu0 %v2141
    %2207 = vmatpush.bf16.msra.mxu0 %v2139
    %2208 = vmatpush.bf16.msra.mxu0 %v2137
    %2209 = vmatmul.bf16.gmra.mxu0 %v1463
    %v2210 = vpop.f32.mrf.mxu0
    %v2211 = vadd.f32 0.0, %v2210
    %v2212 = vpop.f32.mrf.mxu0
    %v2213 = vadd.f32 0.0, %v2212
    %2214 = vmatmul.bf16.gmra.mxu0 %v1465
    %v2215 = vpop.f32.mrf.mxu0
    %v2216 = vadd.f32 0.0, %v2215
    %v2217 = vpop.f32.mrf.mxu0
    %v2218 = vadd.f32 0.0, %v2217
    %2219 = vdwg.mxu0
    %2220 = vmatpush.bf16.msra.mxu0 %v2167
    %2221 = vmatpush.bf16.msra.mxu0 %v2165
    %2222 = vmatpush.bf16.msra.mxu0 %v2163
    %2223 = vmatpush.bf16.msra.mxu0 %v2161
    %2224 = vmatpush.bf16.msra.mxu0 %v2159
    %2225 = vmatpush.bf16.msra.mxu0 %v2157
    %2226 = vmatpush.bf16.msra.mxu0 %v2155
    %2227 = vmatpush.bf16.msra.mxu0 %v2153
    %2228 = vmatmul.bf16.gmra.mxu0 %v1464
    %v2229 = vpop.f32.mrf.mxu0
    %v2230 = vadd.f32 %v2211, %v2229
    %v2231 = vpop.f32.mrf.mxu0
    %v2232 = vadd.f32 %v2213, %v2231
    %2233 = vmatmul.bf16.gmra.mxu0 %v1466
    %v2234 = vpop.f32.mrf.mxu0
    %v2235 = vadd.f32 %v2216, %v2234
    %v2236 = vpop.f32.mrf.mxu0
    %v2237 = vadd.f32 %v2218, %v2236
    %2238 = vdwg.mxu0
    %2239 = vmatpush.bf16.msra.mxu0 %v2152
    %2240 = vmatpush.bf16.msra.mxu0 %v2150
    %2241 = vmatpush.bf16.msra.mxu0 %v2148
    %2242 = vmatpush.bf16.msra.mxu0 %v2146
    %2243 = vmatpush.bf16.msra.mxu0 %v2144
    %2244 = vmatpush.bf16.msra.mxu0 %v2142
    %2245 = vmatpush.bf16.msra.mxu0 %v2140
    %2246 = vmatpush.bf16.msra.mxu0 %v2138
    %2247 = vmatmul.bf16.gmra.mxu0 %v1463
    %v2248 = vpop.f32.mrf.mxu0
    %v2249 = vadd.f32 0.0, %v2248
    %v2250 = vpop.f32.mrf.mxu0
    %v2251 = vadd.f32 0.0, %v2250
    %2252 = vmatmul.bf16.gmra.mxu0 %v1465
    %v2253 = vpop.f32.mrf.mxu0
    %v2254 = vadd.f32 0.0, %v2253
    %v2255 = vpop.f32.mrf.mxu0
    %v2256 = vadd.f32 0.0, %v2255
    %2257 = vdwg.mxu0
    %2258 = vmatpush.bf16.msra.mxu0 %v2168
    %2259 = vmatpush.bf16.msra.mxu0 %v2166
    %2260 = vmatpush.bf16.msra.mxu0 %v2164
    %2261 = vmatpush.bf16.msra.mxu0 %v2162
    %2262 = vmatpush.bf16.msra.mxu0 %v2160
    %2263 = vmatpush.bf16.msra.mxu0 %v2158
    %2264 = vmatpush.bf16.msra.mxu0 %v2156
    %2265 = vmatpush.bf16.msra.mxu0 %v2154
    %2266 = vmatmul.bf16.gmra.mxu0 %v1464
    %v2267 = vpop.f32.mrf.mxu0
    %v2268 = vadd.f32 %v2249, %v2267
    %v2269 = vpop.f32.mrf.mxu0
    %v2270 = vadd.f32 %v2251, %v2269
    %2271 = vmatmul.bf16.gmra.mxu0 %v1466
    %v2272 = vpop.f32.mrf.mxu0
    %v2273 = vadd.f32 %v2254, %v2272
    %v2274 = vpop.f32.mrf.mxu0
    %v2275 = vadd.f32 %v2256, %v2274
    %2276 = vdwg.mxu0
    %v2277 = vadd.f32 %v1961, %v2230
    %v2278 = vadd.f32 %v1999, %v2268
    %v2279 = vadd.f32 %v1963, %v2232
    %v2280 = vadd.f32 %v2001, %v2270
    %v2281 = vadd.f32 %v1966, %v2235
    %v2282 = vadd.f32 %v2004, %v2273
    %v2283 = vadd.f32 %v1968, %v2237
    %v2284 = vadd.f32 %v2006, %v2275
    %s2285 = scalar_lea.vmem [#allocation6], 1
    %v2286 = vld [vmem:[%s2285] ss:$4 sm:$0x3]
    %v2288 = vperm.slane %v2286, 0
    %v2289 = vperm.slane %v2286, 1
    %v2292 = vadd.f32 %v2277, %v2288
    %v2293 = vadd.f32 %v2278, %v2289
    %v2294 = vadd.f32 %v2279, %v2288
    %v2295 = vadd.f32 %v2280, %v2289
    %v2296 = vadd.f32 %v2281, %v2288
    %v2297 = vadd.f32 %v2282, %v2289
    %v2298 = vadd.f32 %v2283, %v2288
    %v2299 = vadd.f32 %v2284, %v2289
    %v2300 = vadd.f32 %v2292, %v2294
    %v2301 = vrot.slane %v2300, 4
    %v2302 = vadd.f32 %v2300, %v2301
    %v2303 = vrot.slane %v2302, 2
    %v2304 = vadd.f32 %v2302, %v2303
    %v2305 = vrot.slane %v2304, 1
    %v2306 = vadd.f32 %v2304, %v2305
    %v2307 = vadd.f32 %v2293, %v2295
    %v2308 = vrot.slane %v2307, 4
    %v2309 = vadd.f32 %v2307, %v2308
    %v2310 = vrot.slane %v2309, 2
    %v2311 = vadd.f32 %v2309, %v2310
    %v2312 = vrot.slane %v2311, 1
    %v2313 = vadd.f32 %v2311, %v2312
    %v2314 = vadd.f32 %v2296, %v2298
    %v2315 = vrot.slane %v2314, 4
    %v2316 = vadd.f32 %v2314, %v2315
    %v2317 = vrot.slane %v2316, 2
    %v2318 = vadd.f32 %v2316, %v2317
    %v2319 = vrot.slane %v2318, 1
    %v2320 = vadd.f32 %v2318, %v2319
    %v2321 = vadd.f32 %v2297, %v2299
    %v2322 = vrot.slane %v2321, 4
    %v2323 = vadd.f32 %v2321, %v2322
    %v2324 = vrot.slane %v2323, 2
    %v2325 = vadd.f32 %v2323, %v2324
    %v2326 = vrot.slane %v2325, 1
    %v2327 = vadd.f32 %v2325, %v2326
    %v2328 = vmul.f32 %v2292, %v2292
    %v2329 = vmul.f32 %v2293, %v2293
    %v2330 = vmul.f32 %v2294, %v2294
    %v2331 = vmul.f32 %v2295, %v2295
    %v2332 = vmul.f32 %v2296, %v2296
    %v2333 = vmul.f32 %v2297, %v2297
    %v2334 = vmul.f32 %v2298, %v2298
    %v2335 = vmul.f32 %v2299, %v2299
    %v2336 = vadd.f32 %v2328, %v2330
    %v2337 = vrot.slane %v2336, 4
    %v2338 = vadd.f32 %v2336, %v2337
    %v2339 = vrot.slane %v2338, 2
    %v2340 = vadd.f32 %v2338, %v2339
    %v2341 = vrot.slane %v2340, 1
    %v2342 = vadd.f32 %v2340, %v2341
    %v2343 = vadd.f32 %v2329, %v2331
    %v2344 = vrot.slane %v2343, 4
    %v2345 = vadd.f32 %v2343, %v2344
    %v2346 = vrot.slane %v2345, 2
    %v2347 = vadd.f32 %v2345, %v2346
    %v2348 = vrot.slane %v2347, 1
    %v2349 = vadd.f32 %v2347, %v2348
    %v2350 = vadd.f32 %v2332, %v2334
    %v2351 = vrot.slane %v2350, 4
    %v2352 = vadd.f32 %v2350, %v2351
    %v2353 = vrot.slane %v2352, 2
    %v2354 = vadd.f32 %v2352, %v2353
    %v2355 = vrot.slane %v2354, 1
    %v2356 = vadd.f32 %v2354, %v2355
    %v2357 = vadd.f32 %v2333, %v2335
    %v2358 = vrot.slane %v2357, 4
    %v2359 = vadd.f32 %v2357, %v2358
    %v2360 = vrot.slane %v2359, 2
    %v2361 = vadd.f32 %v2359, %v2360
    %v2362 = vrot.slane %v2361, 1
    %v2363 = vadd.f32 %v2361, %v2362
    %v2368 = vsel %vm924, %v2320, %v2306
    %v2369 = vsel %vm924, %v2327, %v2313
    %v2376 = vsel %vm933, %v2356, %v2342
    %v2377 = vsel %vm933, %v2363, %v2349
    %v2380 = vsel %vm938, %v2368, %v2376
    %v2381 = vsel %vm938, %v2369, %v2377
    %2382 = vmatpush.msra.mxu0 %v971
    %2383 = vmatpush.msra.mxu0 %v969
    %2384 = vmatpush.msra.mxu0 %v967
    %2385 = vmatpush.msra.mxu0 %v965
    %2386 = vmatpush.msra.mxu0 %v963
    %2387 = vmatpush.msra.mxu0 %v961
    %2388 = vmatpush.msra.mxu0 %v959
    %2389 = vmatpush.msra.mxu0 %v957
    %2390 = vmatpush.msra.mxu0 %v955
    %2391 = vmatpush.msra.mxu0 %v953
    %2392 = vmatpush.msra.mxu0 %v951
    %2393 = vmatpush.msra.mxu0 %v949
    %2394 = vmatpush.msra.mxu0 %v947
    %2395 = vmatpush.msra.mxu0 %v945
    %2396 = vmatpush.msra.mxu0 %v943
    %2397 = vmatpush.msra.mxu0 %v941
    %2398 = vmatmul.f32.gmra.mxu0 %v2380
    %v2399 = vpop.f32.mrf.mxu0
    %v2400 = vadd.f32 0.0, %v2399
    %2401 = vdwg.mxu0
    %2402 = vmatpush.msra.mxu0 %v1003
    %2403 = vmatpush.msra.mxu0 %v1001
    %2404 = vmatpush.msra.mxu0 %v999
    %2405 = vmatpush.msra.mxu0 %v997
    %2406 = vmatpush.msra.mxu0 %v995
    %2407 = vmatpush.msra.mxu0 %v993
    %2408 = vmatpush.msra.mxu0 %v991
    %2409 = vmatpush.msra.mxu0 %v989
    %2410 = vmatpush.msra.mxu0 %v987
    %2411 = vmatpush.msra.mxu0 %v985
    %2412 = vmatpush.msra.mxu0 %v983
    %2413 = vmatpush.msra.mxu0 %v981
    %2414 = vmatpush.msra.mxu0 %v979
    %2415 = vmatpush.msra.mxu0 %v977
    %2416 = vmatpush.msra.mxu0 %v975
    %2417 = vmatpush.msra.mxu0 %v973
    %2418 = vmatmul.f32.gmra.mxu0 %v2381
    %v2419 = vpop.f32.mrf.mxu0
    %v2420 = vadd.f32 %v2400, %v2419
    %2421 = vdwg.mxu0
    %2422 = vmatpush.msra.mxu0 %v972
    %2423 = vmatpush.msra.mxu0 %v970
    %2424 = vmatpush.msra.mxu0 %v968
    %2425 = vmatpush.msra.mxu0 %v966
    %2426 = vmatpush.msra.mxu0 %v964
    %2427 = vmatpush.msra.mxu0 %v962
    %2428 = vmatpush.msra.mxu0 %v960
    %2429 = vmatpush.msra.mxu0 %v958
    %2430 = vmatpush.msra.mxu0 %v956
    %2431 = vmatpush.msra.mxu0 %v954
    %2432 = vmatpush.msra.mxu0 %v952
    %2433 = vmatpush.msra.mxu0 %v950
    %2434 = vmatpush.msra.mxu0 %v948
    %2435 = vmatpush.msra.mxu0 %v946
    %2436 = vmatpush.msra.mxu0 %v944
    %2437 = vmatpush.msra.mxu0 %v942
    %2438 = vmatmul.f32.gmra.mxu0 %v2380
    %v2439 = vpop.f32.mrf.mxu0
    %v2440 = vadd.f32 0.0, %v2439
    %2441 = vdwg.mxu0
    %2442 = vmatpush.msra.mxu0 %v1004
    %2443 = vmatpush.msra.mxu0 %v1002
    %2444 = vmatpush.msra.mxu0 %v1000
    %2445 = vmatpush.msra.mxu0 %v998
    %2446 = vmatpush.msra.mxu0 %v996
    %2447 = vmatpush.msra.mxu0 %v994
    %2448 = vmatpush.msra.mxu0 %v992
    %2449 = vmatpush.msra.mxu0 %v990
    %2450 = vmatpush.msra.mxu0 %v988
    %2451 = vmatpush.msra.mxu0 %v986
    %2452 = vmatpush.msra.mxu0 %v984
    %2453 = vmatpush.msra.mxu0 %v982
    %2454 = vmatpush.msra.mxu0 %v980
    %2455 = vmatpush.msra.mxu0 %v978
    %2456 = vmatpush.msra.mxu0 %v976
    %2457 = vmatpush.msra.mxu0 %v974
    %2458 = vmatmul.f32.gmra.mxu0 %v2381
    %v2459 = vpop.f32.mrf.mxu0
    %v2460 = vadd.f32 %v2440, %v2459
    %2461 = vdwg.mxu0
    %v2464 = vrot.slane %v2460, 7
    %v2465 = vsel %vm1088, %v2420, %v2464
    %v2466 = vsel %vm924, %v2420, %v2464
    %v2467 = vrot.slane %v2466, 1
    %2470 = vst [vmem:[#allocation1] sm:$0xff] %v2420
    %2471 = vst [vmem:[#allocation1 + $0x9] sm:$0xff] %v2460
    %s2472 = scalar_lea.vmem [#allocation1], 2
    %v2473 = vld [vmem:[%s2472] ss:$9 sm:$0xff]
    %s2474 = scalar_lea.vmem [#allocation1], 3
    %v2475 = vld [vmem:[%s2474] ss:$9 sm:$0xff]
    %v2478 = vmul.f32 %v2465, %v2465
    %v2479 = vmul.f32 %v2467, %v2467
    %v2480 = vsub.f32 %v2473, %v2478
    %v2481 = vsub.f32 %v2475, %v2479
    %v2482 = vadd.f32 %v2480, 1e-05
    %v2483 = vadd.f32 %v2481, 1e-05
    %v2484 = vrsqrt.pop %v2482
    %v2485 = vmul.f32 %v2484, %v2482
    %v2486 = vmul.f32 %v2485, %v2484
    %v2487 = vmul.f32 0.5, %v2486
    %v2488 = vsub.f32 1.5, %v2487
    %v2489 = vmul.f32 %v2484, %v2488
    %vm2490 = vweird.f32 %v2482
    %vm2491 = vweird.f32 %v2484
    %vm2492 = vmor %vm2490, %vm2491
    %v2493 = vsel %vm2492, %v2484, %v2489
    %v2494 = vrsqrt.pop %v2483
    %v2495 = vmul.f32 %v2494, %v2483
    %v2496 = vmul.f32 %v2495, %v2494
    %v2497 = vmul.f32 0.5, %v2496
    %v2498 = vsub.f32 1.5, %v2497
    %v2499 = vmul.f32 %v2494, %v2498
    %vm2500 = vweird.f32 %v2483
    %vm2501 = vweird.f32 %v2494
    %vm2502 = vmor %vm2500, %vm2501
    %v2503 = vsel %vm2502, %v2494, %v2499
    %v2504 = vperm.slane %v2465, 0
    %v2505 = vperm.slane %v2465, 1
    %v2506 = vperm.slane %v2467, 0
    %v2507 = vperm.slane %v2467, 1
    %v2512 = vsub.f32 %v2292, %v2504
    %v2513 = vsub.f32 %v2293, %v2505
    %v2514 = vsub.f32 %v2294, %v2504
    %v2515 = vsub.f32 %v2295, %v2505
    %v2516 = vsub.f32 %v2296, %v2506
    %v2517 = vsub.f32 %v2297, %v2507
    %v2518 = vsub.f32 %v2298, %v2506
    %v2519 = vsub.f32 %v2299, %v2507
    %s2520 = scalar_lea.vmem [#allocation7], 1
    %v2521 = vld [vmem:[%s2520] ss:$4 sm:$0x3]
    %v2522 = vmul.f32 %v2493, %v2521
    %v2523 = vmul.f32 %v2503, %v2521
    %v2526 = vperm.slane %v2522, 0
    %v2527 = vperm.slane %v2522, 1
    %v2528 = vperm.slane %v2523, 0
    %v2529 = vperm.slane %v2523, 1
    %v2534 = vmul.f32 %v2512, %v2526
    %v2535 = vmul.f32 %v2513, %v2527
    %v2536 = vmul.f32 %v2514, %v2526
    %v2537 = vmul.f32 %v2515, %v2527
    %v2538 = vmul.f32 %v2516, %v2528
    %v2539 = vmul.f32 %v2517, %v2529
    %v2540 = vmul.f32 %v2518, %v2528
    %v2541 = vmul.f32 %v2519, %v2529
    %s2542 = scalar_lea.vmem [#allocation9], 1
    %v2543 = vld [vmem:[%s2542] ss:$4 sm:$0x3]
    %v2545 = vperm.slane %v2543, 0
    %v2546 = vperm.slane %v2543, 1
    %v2549 = vadd.f32 %v2534, %v2545
    %v2550 = vadd.f32 %v2535, %v2546
    %v2551 = vadd.f32 %v2536, %v2545
    %v2552 = vadd.f32 %v2537, %v2546
    %v2553 = vadd.f32 %v2538, %v2545
    %v2554 = vadd.f32 %v2539, %v2546
    %v2555 = vadd.f32 %v2540, %v2545
    %v2556 = vadd.f32 %v2541, %v2546
    %v2557 = vxor.u32 %v2549, 2147483648
    %v2558 = vxor.u32 %v2550, 2147483648
    %v2559 = vxor.u32 %v2551, 2147483648
    %v2560 = vxor.u32 %v2552, 2147483648
    %v2561 = vxor.u32 %v2553, 2147483648
    %v2562 = vxor.u32 %v2554, 2147483648
    %v2563 = vxor.u32 %v2555, 2147483648
    %v2564 = vxor.u32 %v2556, 2147483648
    %v2565 = vmul.f32 %v2557, 1.442695
    %v2566 = vpow.pop %v2565
    %v2567 = vmul.f32 %v2558, 1.442695
    %v2568 = vpow.pop %v2567
    %v2569 = vmul.f32 %v2559, 1.442695
    %v2570 = vpow.pop %v2569
    %v2571 = vmul.f32 %v2560, 1.442695
    %v2572 = vpow.pop %v2571
    %v2573 = vmul.f32 %v2561, 1.442695
    %v2574 = vpow.pop %v2573
    %v2575 = vmul.f32 %v2562, 1.442695
    %v2576 = vpow.pop %v2575
    %v2577 = vmul.f32 %v2563, 1.442695
    %v2578 = vpow.pop %v2577
    %v2579 = vmul.f32 %v2564, 1.442695
    %v2580 = vpow.pop %v2579
    %v2581 = vadd.f32 %v2566, 1.0
    %v2582 = vadd.f32 %v2568, 1.0
    %v2583 = vadd.f32 %v2570, 1.0
    %v2584 = vadd.f32 %v2572, 1.0
    %v2585 = vadd.f32 %v2574, 1.0
    %v2586 = vadd.f32 %v2576, 1.0
    %v2587 = vadd.f32 %v2578, 1.0
    %v2588 = vadd.f32 %v2580, 1.0
    %v2589 = vrcp.pop %v2581
    %v2590 = vmul.f32 %v2581, %v2589
    %v2591 = vsub.f32 1.0, %v2590
    %v2592 = vmul.f32 %v2589, %v2591
    %v2593 = vadd.f32 %v2589, %v2592
    %vm2594 = vweird.f32 %v2581
    %vm2595 = vweird.f32 %v2589
    %vm2596 = vmor %vm2594, %vm2595
    %v2597 = vsel %vm2596, %v2589, %v2593
    %v2598 = vand.u32 2147483647, %v2581
    %vm2599 = vcmp.eq.f32.partialorder %v2598, 8.507059e+37
    %v2600 = vand.u32 %v2581, 2147483648
    %v2601 = vor.u32 1.1754944e-38, %v2600
    %v2602 = vsel %vm2599, %v2601, %v2597
    %v2603 = vmul.f32 1.0, %v2602
    %v2604 = vrcp.pop %v2582
    %v2605 = vmul.f32 %v2582, %v2604
    %v2606 = vsub.f32 1.0, %v2605
    %v2607 = vmul.f32 %v2604, %v2606
    %v2608 = vadd.f32 %v2604, %v2607
    %vm2609 = vweird.f32 %v2582
    %vm2610 = vweird.f32 %v2604
    %vm2611 = vmor %vm2609, %vm2610
    %v2612 = vsel %vm2611, %v2604, %v2608
    %v2613 = vand.u32 2147483647, %v2582
    %vm2614 = vcmp.eq.f32.partialorder %v2613, 8.507059e+37
    %v2615 = vand.u32 %v2582, 2147483648
    %v2616 = vor.u32 1.1754944e-38, %v2615
    %v2617 = vsel %vm2614, %v2616, %v2612
    %v2618 = vmul.f32 1.0, %v2617
    %v2619 = vrcp.pop %v2583
    %v2620 = vmul.f32 %v2583, %v2619
    %v2621 = vsub.f32 1.0, %v2620
    %v2622 = vmul.f32 %v2619, %v2621
    %v2623 = vadd.f32 %v2619, %v2622
    %vm2624 = vweird.f32 %v2583
    %vm2625 = vweird.f32 %v2619
    %vm2626 = vmor %vm2624, %vm2625
    %v2627 = vsel %vm2626, %v2619, %v2623
    %v2628 = vand.u32 2147483647, %v2583
    %vm2629 = vcmp.eq.f32.partialorder %v2628, 8.507059e+37
    %v2630 = vand.u32 %v2583, 2147483648
    %v2631 = vor.u32 1.1754944e-38, %v2630
    %v2632 = vsel %vm2629, %v2631, %v2627
    %v2633 = vmul.f32 1.0, %v2632
    %v2634 = vrcp.pop %v2584
    %v2635 = vmul.f32 %v2584, %v2634
    %v2636 = vsub.f32 1.0, %v2635
    %v2637 = vmul.f32 %v2634, %v2636
    %v2638 = vadd.f32 %v2634, %v2637
    %vm2639 = vweird.f32 %v2584
    %vm2640 = vweird.f32 %v2634
    %vm2641 = vmor %vm2639, %vm2640
    %v2642 = vsel %vm2641, %v2634, %v2638
    %v2643 = vand.u32 2147483647, %v2584
    %vm2644 = vcmp.eq.f32.partialorder %v2643, 8.507059e+37
    %v2645 = vand.u32 %v2584, 2147483648
    %v2646 = vor.u32 1.1754944e-38, %v2645
    %v2647 = vsel %vm2644, %v2646, %v2642
    %v2648 = vmul.f32 1.0, %v2647
    %v2649 = vrcp.pop %v2585
    %v2650 = vmul.f32 %v2585, %v2649
    %v2651 = vsub.f32 1.0, %v2650
    %v2652 = vmul.f32 %v2649, %v2651
    %v2653 = vadd.f32 %v2649, %v2652
    %vm2654 = vweird.f32 %v2585
    %vm2655 = vweird.f32 %v2649
    %vm2656 = vmor %vm2654, %vm2655
    %v2657 = vsel %vm2656, %v2649, %v2653
    %v2658 = vand.u32 2147483647, %v2585
    %vm2659 = vcmp.eq.f32.partialorder %v2658, 8.507059e+37
    %v2660 = vand.u32 %v2585, 2147483648
    %v2661 = vor.u32 1.1754944e-38, %v2660
    %v2662 = vsel %vm2659, %v2661, %v2657
    %v2663 = vmul.f32 1.0, %v2662
    %v2664 = vrcp.pop %v2586
    %v2665 = vmul.f32 %v2586, %v2664
    %v2666 = vsub.f32 1.0, %v2665
    %v2667 = vmul.f32 %v2664, %v2666
    %v2668 = vadd.f32 %v2664, %v2667
    %vm2669 = vweird.f32 %v2586
    %vm2670 = vweird.f32 %v2664
    %vm2671 = vmor %vm2669, %vm2670
    %v2672 = vsel %vm2671, %v2664, %v2668
    %v2673 = vand.u32 2147483647, %v2586
    %vm2674 = vcmp.eq.f32.partialorder %v2673, 8.507059e+37
    %v2675 = vand.u32 %v2586, 2147483648
    %v2676 = vor.u32 1.1754944e-38, %v2675
    %v2677 = vsel %vm2674, %v2676, %v2672
    %v2678 = vmul.f32 1.0, %v2677
    %v2679 = vrcp.pop %v2587
    %v2680 = vmul.f32 %v2587, %v2679
    %v2681 = vsub.f32 1.0, %v2680
    %v2682 = vmul.f32 %v2679, %v2681
    %v2683 = vadd.f32 %v2679, %v2682
    %vm2684 = vweird.f32 %v2587
    %vm2685 = vweird.f32 %v2679
    %vm2686 = vmor %vm2684, %vm2685
    %v2687 = vsel %vm2686, %v2679, %v2683
    %v2688 = vand.u32 2147483647, %v2587
    %vm2689 = vcmp.eq.f32.partialorder %v2688, 8.507059e+37
    %v2690 = vand.u32 %v2587, 2147483648
    %v2691 = vor.u32 1.1754944e-38, %v2690
    %v2692 = vsel %vm2689, %v2691, %v2687
    %v2693 = vmul.f32 1.0, %v2692
    %v2694 = vrcp.pop %v2588
    %v2695 = vmul.f32 %v2588, %v2694
    %v2696 = vsub.f32 1.0, %v2695
    %v2697 = vmul.f32 %v2694, %v2696
    %v2698 = vadd.f32 %v2694, %v2697
    %vm2699 = vweird.f32 %v2588
    %vm2700 = vweird.f32 %v2694
    %vm2701 = vmor %vm2699, %vm2700
    %v2702 = vsel %vm2701, %v2694, %v2698
    %v2703 = vand.u32 2147483647, %v2588
    %vm2704 = vcmp.eq.f32.partialorder %v2703, 8.507059e+37
    %v2705 = vand.u32 %v2588, 2147483648
    %v2706 = vor.u32 1.1754944e-38, %v2705
    %v2707 = vsel %vm2704, %v2706, %v2702
    %v2708 = vmul.f32 1.0, %v2707
    %v2709 = vmul.f32 %v2549, %v2603
    %v2710 = vmul.f32 %v2550, %v2618
    %v2711 = vmul.f32 %v2551, %v2633
    %v2712 = vmul.f32 %v2552, %v2648
    %v2713 = vmul.f32 %v2553, %v2663
    %v2714 = vmul.f32 %v2554, %v2678
    %v2715 = vmul.f32 %v2555, %v2693
    %v2716 = vmul.f32 %v2556, %v2708
    %v2717 = vrot.slane %v2709, 7
    %v2718 = vrot.slane %v2710, 7
    %v2719 = vrot.slane %v2711, 7
    %v2720 = vrot.slane %v2712, 7
    %v2721 = vrot.slane %v2713, 7
    %v2722 = vrot.slane %v2714, 7
    %v2723 = vrot.slane %v2715, 7
    %v2724 = vrot.slane %v2716, 7
    %v2725 = vsel %vm147, %v2721, %v2723
    %v2726 = vsel %vm147, %v2722, %v2724
    %v2727 = vsel %vm147, %v2719, %v2721
    %v2728 = vsel %vm147, %v2720, %v2722
    %v2729 = vsel %vm147, %v2717, %v2719
    %v2730 = vsel %vm147, %v2718, %v2720
    %v2731 = vsel %vm147, %v2723, %v2717
    %v2732 = vsel %vm147, %v2724, %v2718
    %v2733 = vsel %vm1415, %v2731, 0.0
    %v2734 = vsel %vm1415, %v2732, 0.0
    %v2735 = vsel %vm1416, %v2729, 0.0
    %v2736 = vsel %vm1416, %v2730, 0.0
    %v2737 = vsel %vm1417, %v2727, 0.0
    %v2738 = vsel %vm1417, %v2728, 0.0
    %v2739 = vsel %vm1418, %v2725, 0.0
    %v2740 = vsel %vm1418, %v2726, 0.0
    %v2741 = vpack.c.bf16 %v2735, %v2733
    %v2742 = vpack.c.bf16 %v2736, %v2734
    %v2743 = vpack.c.bf16 %v2739, %v2737
    %v2744 = vpack.c.bf16 %v2740, %v2738
    %v2745 = vrot.slane %v2709, 1
    %v2746 = vrot.slane %v2710, 1
    %v2747 = vrot.slane %v2711, 1
    %v2748 = vrot.slane %v2712, 1
    %v2749 = vrot.slane %v2713, 1
    %v2750 = vrot.slane %v2714, 1
    %v2751 = vrot.slane %v2715, 1
    %v2752 = vrot.slane %v2716, 1
    %v2753 = vsel %vm161, %v2749, %v2751
    %v2754 = vsel %vm161, %v2750, %v2752
    %v2755 = vsel %vm161, %v2747, %v2749
    %v2756 = vsel %vm161, %v2748, %v2750
    %v2757 = vsel %vm161, %v2745, %v2747
    %v2758 = vsel %vm161, %v2746, %v2748
    %v2759 = vsel %vm161, %v2751, %v2745
    %v2760 = vsel %vm161, %v2752, %v2746
    %v2761 = vsel %vm1451, %v2757, 0.0
    %v2762 = vsel %vm1451, %v2758, 0.0
    %v2763 = vsel %vm1452, %v2755, 0.0
    %v2764 = vsel %vm1452, %v2756, 0.0
    %v2765 = vsel %vm1453, %v2753, 0.0
    %v2766 = vsel %vm1453, %v2754, 0.0
    %v2767 = vsel %vm1454, %v2759, 0.0
    %v2768 = vsel %vm1454, %v2760, 0.0
    %v2769 = vpack.c.bf16 %v2763, %v2761
    %v2770 = vpack.c.bf16 %v2764, %v2762
    %v2771 = vpack.c.bf16 %v2767, %v2765
    %v2772 = vpack.c.bf16 %v2768, %v2766
    %v2773 = vpack.c.bf16 %v2711, %v2709
    %v2774 = vpack.c.bf16 %v2712, %v2710
    %v2775 = vpack.c.bf16 %v2715, %v2713
    %v2776 = vpack.c.bf16 %v2716, %v2714
    %s2777 = scalar_lea.vmem [#allocation4], 768
    %v2778 = vld [vmem:[%s2777] sm:$0xff]
    %v2779 = vld [vmem:[%s2777 + $0x8] sm:$0xff]
    %v2780 = vld [vmem:[%s2777 + $0x10] sm:$0xff]
    %v2781 = vld [vmem:[%s2777 + $0x18] sm:$0xff]
    %v2782 = vld [vmem:[%s2777 + $0x20] sm:$0xff]
    %v2783 = vld [vmem:[%s2777 + $0x28] sm:$0xff]
    %v2784 = vld [vmem:[%s2777 + $0x30] sm:$0xff]
    %v2785 = vld [vmem:[%s2777 + $0x38] sm:$0xff]
    %v2786 = vld [vmem:[%s2777 + $0x40] sm:$0xff]
    %v2787 = vld [vmem:[%s2777 + $0x48] sm:$0xff]
    %v2788 = vld [vmem:[%s2777 + $0x50] sm:$0xff]
    %v2789 = vld [vmem:[%s2777 + $0x58] sm:$0xff]
    %v2790 = vld [vmem:[%s2777 + $0x60] sm:$0xff]
    %v2791 = vld [vmem:[%s2777 + $0x68] sm:$0xff]
    %v2792 = vld [vmem:[%s2777 + $0x70] sm:$0xff]
    %v2793 = vld [vmem:[%s2777 + $0x78] sm:$0xff]
    %v2794 = vld [vmem:[%s2777 + $0x80] sm:$0xff]
    %v2795 = vld [vmem:[%s2777 + $0x88] sm:$0xff]
    %v2796 = vld [vmem:[%s2777 + $0x90] sm:$0xff]
    %v2797 = vld [vmem:[%s2777 + $0x98] sm:$0xff]
    %v2798 = vld [vmem:[%s2777 + $0xa0] sm:$0xff]
    %v2799 = vld [vmem:[%s2777 + $0xa8] sm:$0xff]
    %v2800 = vld [vmem:[%s2777 + $0xb0] sm:$0xff]
    %v2801 = vld [vmem:[%s2777 + $0xb8] sm:$0xff]
    %v2802 = vld [vmem:[%s2777 + $0xc0] sm:$0xff]
    %v2803 = vld [vmem:[%s2777 + $0xc8] sm:$0xff]
    %v2804 = vld [vmem:[%s2777 + $0xd0] sm:$0xff]
    %v2805 = vld [vmem:[%s2777 + $0xd8] sm:$0xff]
    %v2806 = vld [vmem:[%s2777 + $0xe0] sm:$0xff]
    %v2807 = vld [vmem:[%s2777 + $0xe8] sm:$0xff]
    %v2808 = vld [vmem:[%s2777 + $0xf0] sm:$0xff]
    %v2809 = vld [vmem:[%s2777 + $0xf8] sm:$0xff]
    %s2810 = scalar_lea.vmem [#allocation4], 1024
    %v2811 = vld [vmem:[%s2810] sm:$0xff]
    %v2812 = vld [vmem:[%s2810 + $0x8] sm:$0xff]
    %v2813 = vld [vmem:[%s2810 + $0x10] sm:$0xff]
    %v2814 = vld [vmem:[%s2810 + $0x18] sm:$0xff]
    %v2815 = vld [vmem:[%s2810 + $0x20] sm:$0xff]
    %v2816 = vld [vmem:[%s2810 + $0x28] sm:$0xff]
    %v2817 = vld [vmem:[%s2810 + $0x30] sm:$0xff]
    %v2818 = vld [vmem:[%s2810 + $0x38] sm:$0xff]
    %v2819 = vld [vmem:[%s2810 + $0x40] sm:$0xff]
    %v2820 = vld [vmem:[%s2810 + $0x48] sm:$0xff]
    %v2821 = vld [vmem:[%s2810 + $0x50] sm:$0xff]
    %v2822 = vld [vmem:[%s2810 + $0x58] sm:$0xff]
    %v2823 = vld [vmem:[%s2810 + $0x60] sm:$0xff]
    %v2824 = vld [vmem:[%s2810 + $0x68] sm:$0xff]
    %v2825 = vld [vmem:[%s2810 + $0x70] sm:$0xff]
    %v2826 = vld [vmem:[%s2810 + $0x78] sm:$0xff]
    %v2827 = vld [vmem:[%s2810 + $0x80] sm:$0xff]
    %v2828 = vld [vmem:[%s2810 + $0x88] sm:$0xff]
    %v2829 = vld [vmem:[%s2810 + $0x90] sm:$0xff]
    %v2830 = vld [vmem:[%s2810 + $0x98] sm:$0xff]
    %v2831 = vld [vmem:[%s2810 + $0xa0] sm:$0xff]
    %v2832 = vld [vmem:[%s2810 + $0xa8] sm:$0xff]
    %v2833 = vld [vmem:[%s2810 + $0xb0] sm:$0xff]
    %v2834 = vld [vmem:[%s2810 + $0xb8] sm:$0xff]
    %v2835 = vld [vmem:[%s2810 + $0xc0] sm:$0xff]
    %v2836 = vld [vmem:[%s2810 + $0xc8] sm:$0xff]
    %v2837 = vld [vmem:[%s2810 + $0xd0] sm:$0xff]
    %v2838 = vld [vmem:[%s2810 + $0xd8] sm:$0xff]
    %v2839 = vld [vmem:[%s2810 + $0xe0] sm:$0xff]
    %v2840 = vld [vmem:[%s2810 + $0xe8] sm:$0xff]
    %v2841 = vld [vmem:[%s2810 + $0xf0] sm:$0xff]
    %v2842 = vld [vmem:[%s2810 + $0xf8] sm:$0xff]
    %v2875 = vunpack.c.l.b16 %v2811
    %v2876 = vunpack.c.h.b16 %v2811
    %v2877 = vunpack.c.l.b16 %v2812
    %v2878 = vunpack.c.h.b16 %v2812
    %v2879 = vunpack.c.l.b16 %v2813
    %v2880 = vunpack.c.h.b16 %v2813
    %v2881 = vunpack.c.l.b16 %v2814
    %v2882 = vunpack.c.h.b16 %v2814
    %v2883 = vunpack.c.l.b16 %v2815
    %v2884 = vunpack.c.h.b16 %v2815
    %v2885 = vunpack.c.l.b16 %v2816
    %v2886 = vunpack.c.h.b16 %v2816
    %v2887 = vunpack.c.l.b16 %v2817
    %v2888 = vunpack.c.h.b16 %v2817
    %v2889 = vunpack.c.l.b16 %v2818
    %v2890 = vunpack.c.h.b16 %v2818
    %v2891 = vunpack.c.l.b16 %v2819
    %v2892 = vunpack.c.h.b16 %v2819
    %v2893 = vunpack.c.l.b16 %v2820
    %v2894 = vunpack.c.h.b16 %v2820
    %v2895 = vunpack.c.l.b16 %v2821
    %v2896 = vunpack.c.h.b16 %v2821
    %v2897 = vunpack.c.l.b16 %v2822
    %v2898 = vunpack.c.h.b16 %v2822
    %v2899 = vunpack.c.l.b16 %v2823
    %v2900 = vunpack.c.h.b16 %v2823
    %v2901 = vunpack.c.l.b16 %v2824
    %v2902 = vunpack.c.h.b16 %v2824
    %v2903 = vunpack.c.l.b16 %v2825
    %v2904 = vunpack.c.h.b16 %v2825
    %v2905 = vunpack.c.l.b16 %v2826
    %v2906 = vunpack.c.h.b16 %v2826
    %v2907 = vunpack.c.l.b16 %v2827
    %v2908 = vunpack.c.h.b16 %v2827
    %v2909 = vunpack.c.l.b16 %v2828
    %v2910 = vunpack.c.h.b16 %v2828
    %v2911 = vunpack.c.l.b16 %v2829
    %v2912 = vunpack.c.h.b16 %v2829
    %v2913 = vunpack.c.l.b16 %v2830
    %v2914 = vunpack.c.h.b16 %v2830
    %v2915 = vunpack.c.l.b16 %v2831
    %v2916 = vunpack.c.h.b16 %v2831
    %v2917 = vunpack.c.l.b16 %v2832
    %v2918 = vunpack.c.h.b16 %v2832
    %v2919 = vunpack.c.l.b16 %v2833
    %v2920 = vunpack.c.h.b16 %v2833
    %v2921 = vunpack.c.l.b16 %v2834
    %v2922 = vunpack.c.h.b16 %v2834
    %v2923 = vunpack.c.l.b16 %v2835
    %v2924 = vunpack.c.h.b16 %v2835
    %v2925 = vunpack.c.l.b16 %v2836
    %v2926 = vunpack.c.h.b16 %v2836
    %v2927 = vunpack.c.l.b16 %v2837
    %v2928 = vunpack.c.h.b16 %v2837
    %v2929 = vunpack.c.l.b16 %v2838
    %v2930 = vunpack.c.h.b16 %v2838
    %v2931 = vunpack.c.l.b16 %v2839
    %v2932 = vunpack.c.h.b16 %v2839
    %v2933 = vunpack.c.l.b16 %v2840
    %v2934 = vunpack.c.h.b16 %v2840
    %v2935 = vunpack.c.l.b16 %v2841
    %v2936 = vunpack.c.h.b16 %v2841
    %v2937 = vunpack.c.l.b16 %v2842
    %v2938 = vunpack.c.h.b16 %v2842
    %v2939 = vpack.c.b16 %v2877, %v2875
    %v2940 = vpack.c.b16 %v2878, %v2876
    %v2941 = vpack.c.b16 %v2881, %v2879
    %v2942 = vpack.c.b16 %v2882, %v2880
    %v2943 = vpack.c.b16 %v2885, %v2883
    %v2944 = vpack.c.b16 %v2886, %v2884
    %v2945 = vpack.c.b16 %v2889, %v2887
    %v2946 = vpack.c.b16 %v2890, %v2888
    %v2947 = vpack.c.b16 %v2893, %v2891
    %v2948 = vpack.c.b16 %v2894, %v2892
    %v2949 = vpack.c.b16 %v2897, %v2895
    %v2950 = vpack.c.b16 %v2898, %v2896
    %v2951 = vpack.c.b16 %v2901, %v2899
    %v2952 = vpack.c.b16 %v2902, %v2900
    %v2953 = vpack.c.b16 %v2905, %v2903
    %v2954 = vpack.c.b16 %v2906, %v2904
    %v2955 = vpack.c.b16 %v2909, %v2907
    %v2956 = vpack.c.b16 %v2910, %v2908
    %v2957 = vpack.c.b16 %v2913, %v2911
    %v2958 = vpack.c.b16 %v2914, %v2912
    %v2959 = vpack.c.b16 %v2917, %v2915
    %v2960 = vpack.c.b16 %v2918, %v2916
    %v2961 = vpack.c.b16 %v2921, %v2919
    %v2962 = vpack.c.b16 %v2922, %v2920
    %v2963 = vpack.c.b16 %v2925, %v2923
    %v2964 = vpack.c.b16 %v2926, %v2924
    %v2965 = vpack.c.b16 %v2929, %v2927
    %v2966 = vpack.c.b16 %v2930, %v2928
    %v2967 = vpack.c.b16 %v2933, %v2931
    %v2968 = vpack.c.b16 %v2934, %v2932
    %v2969 = vpack.c.b16 %v2937, %v2935
    %v2970 = vpack.c.b16 %v2938, %v2936
    %3003 = vmatpush.bf16.msra.mxu0 %v2953
    %3004 = vmatpush.bf16.msra.mxu0 %v2951
    %3005 = vmatpush.bf16.msra.mxu0 %v2949
    %3006 = vmatpush.bf16.msra.mxu0 %v2947
    %3007 = vmatpush.bf16.msra.mxu0 %v2945
    %3008 = vmatpush.bf16.msra.mxu0 %v2943
    %3009 = vmatpush.bf16.msra.mxu0 %v2941
    %3010 = vmatpush.bf16.msra.mxu0 %v2939
    %3011 = vmatmul.bf16.gmra.mxu0 %v2773
    %v3012 = vpop.f32.mrf.mxu0
    %v3013 = vadd.f32 0.0, %v3012
    %v3014 = vpop.f32.mrf.mxu0
    %v3015 = vadd.f32 0.0, %v3014
    %3016 = vmatmul.bf16.gmra.mxu0 %v2775
    %v3017 = vpop.f32.mrf.mxu0
    %v3018 = vadd.f32 0.0, %v3017
    %v3019 = vpop.f32.mrf.mxu0
    %v3020 = vadd.f32 0.0, %v3019
    %3021 = vdwg.mxu0
    %3022 = vmatpush.bf16.msra.mxu0 %v2969
    %3023 = vmatpush.bf16.msra.mxu0 %v2967
    %3024 = vmatpush.bf16.msra.mxu0 %v2965
    %3025 = vmatpush.bf16.msra.mxu0 %v2963
    %3026 = vmatpush.bf16.msra.mxu0 %v2961
    %3027 = vmatpush.bf16.msra.mxu0 %v2959
    %3028 = vmatpush.bf16.msra.mxu0 %v2957
    %3029 = vmatpush.bf16.msra.mxu0 %v2955
    %3030 = vmatmul.bf16.gmra.mxu0 %v2774
    %v3031 = vpop.f32.mrf.mxu0
    %v3032 = vadd.f32 %v3013, %v3031
    %v3033 = vpop.f32.mrf.mxu0
    %v3034 = vadd.f32 %v3015, %v3033
    %3035 = vmatmul.bf16.gmra.mxu0 %v2776
    %v3036 = vpop.f32.mrf.mxu0
    %v3037 = vadd.f32 %v3018, %v3036
    %v3038 = vpop.f32.mrf.mxu0
    %v3039 = vadd.f32 %v3020, %v3038
    %3040 = vdwg.mxu0
    %3041 = vmatpush.bf16.msra.mxu0 %v2954
    %3042 = vmatpush.bf16.msra.mxu0 %v2952
    %3043 = vmatpush.bf16.msra.mxu0 %v2950
    %3044 = vmatpush.bf16.msra.mxu0 %v2948
    %3045 = vmatpush.bf16.msra.mxu0 %v2946
    %3046 = vmatpush.bf16.msra.mxu0 %v2944
    %3047 = vmatpush.bf16.msra.mxu0 %v2942
    %3048 = vmatpush.bf16.msra.mxu0 %v2940
    %3049 = vmatmul.bf16.gmra.mxu0 %v2773
    %v3050 = vpop.f32.mrf.mxu0
    %v3051 = vadd.f32 0.0, %v3050
    %v3052 = vpop.f32.mrf.mxu0
    %v3053 = vadd.f32 0.0, %v3052
    %3054 = vmatmul.bf16.gmra.mxu0 %v2775
    %v3055 = vpop.f32.mrf.mxu0
    %v3056 = vadd.f32 0.0, %v3055
    %v3057 = vpop.f32.mrf.mxu0
    %v3058 = vadd.f32 0.0, %v3057
    %3059 = vdwg.mxu0
    %3060 = vmatpush.bf16.msra.mxu0 %v2970
    %3061 = vmatpush.bf16.msra.mxu0 %v2968
    %3062 = vmatpush.bf16.msra.mxu0 %v2966
    %3063 = vmatpush.bf16.msra.mxu0 %v2964
    %3064 = vmatpush.bf16.msra.mxu0 %v2962
    %3065 = vmatpush.bf16.msra.mxu0 %v2960
    %3066 = vmatpush.bf16.msra.mxu0 %v2958
    %3067 = vmatpush.bf16.msra.mxu0 %v2956
    %3068 = vmatmul.bf16.gmra.mxu0 %v2774
    %v3069 = vpop.f32.mrf.mxu0
    %v3070 = vadd.f32 %v3051, %v3069
    %v3071 = vpop.f32.mrf.mxu0
    %v3072 = vadd.f32 %v3053, %v3071
    %3073 = vmatmul.bf16.gmra.mxu0 %v2776
    %v3074 = vpop.f32.mrf.mxu0
    %v3075 = vadd.f32 %v3056, %v3074
    %v3076 = vpop.f32.mrf.mxu0
    %v3077 = vadd.f32 %v3058, %v3076
    %3078 = vdwg.mxu0
    %v3111 = vunpack.c.l.b16 %v2778
    %v3112 = vunpack.c.h.b16 %v2778
    %v3113 = vunpack.c.l.b16 %v2779
    %v3114 = vunpack.c.h.b16 %v2779
    %v3115 = vunpack.c.l.b16 %v2780
    %v3116 = vunpack.c.h.b16 %v2780
    %v3117 = vunpack.c.l.b16 %v2781
    %v3118 = vunpack.c.h.b16 %v2781
    %v3119 = vunpack.c.l.b16 %v2782
    %v3120 = vunpack.c.h.b16 %v2782
    %v3121 = vunpack.c.l.b16 %v2783
    %v3122 = vunpack.c.h.b16 %v2783
    %v3123 = vunpack.c.l.b16 %v2784
    %v3124 = vunpack.c.h.b16 %v2784
    %v3125 = vunpack.c.l.b16 %v2785
    %v3126 = vunpack.c.h.b16 %v2785
    %v3127 = vunpack.c.l.b16 %v2786
    %v3128 = vunpack.c.h.b16 %v2786
    %v3129 = vunpack.c.l.b16 %v2787
    %v3130 = vunpack.c.h.b16 %v2787
    %v3131 = vunpack.c.l.b16 %v2788
    %v3132 = vunpack.c.h.b16 %v2788
    %v3133 = vunpack.c.l.b16 %v2789
    %v3134 = vunpack.c.h.b16 %v2789
    %v3135 = vunpack.c.l.b16 %v2790
    %v3136 = vunpack.c.h.b16 %v2790
    %v3137 = vunpack.c.l.b16 %v2791
    %v3138 = vunpack.c.h.b16 %v2791
    %v3139 = vunpack.c.l.b16 %v2792
    %v3140 = vunpack.c.h.b16 %v2792
    %v3141 = vunpack.c.l.b16 %v2793
    %v3142 = vunpack.c.h.b16 %v2793
    %v3143 = vunpack.c.l.b16 %v2794
    %v3144 = vunpack.c.h.b16 %v2794
    %v3145 = vunpack.c.l.b16 %v2795
    %v3146 = vunpack.c.h.b16 %v2795
    %v3147 = vunpack.c.l.b16 %v2796
    %v3148 = vunpack.c.h.b16 %v2796
    %v3149 = vunpack.c.l.b16 %v2797
    %v3150 = vunpack.c.h.b16 %v2797
    %v3151 = vunpack.c.l.b16 %v2798
    %v3152 = vunpack.c.h.b16 %v2798
    %v3153 = vunpack.c.l.b16 %v2799
    %v3154 = vunpack.c.h.b16 %v2799
    %v3155 = vunpack.c.l.b16 %v2800
    %v3156 = vunpack.c.h.b16 %v2800
    %v3157 = vunpack.c.l.b16 %v2801
    %v3158 = vunpack.c.h.b16 %v2801
    %v3159 = vunpack.c.l.b16 %v2802
    %v3160 = vunpack.c.h.b16 %v2802
    %v3161 = vunpack.c.l.b16 %v2803
    %v3162 = vunpack.c.h.b16 %v2803
    %v3163 = vunpack.c.l.b16 %v2804
    %v3164 = vunpack.c.h.b16 %v2804
    %v3165 = vunpack.c.l.b16 %v2805
    %v3166 = vunpack.c.h.b16 %v2805
    %v3167 = vunpack.c.l.b16 %v2806
    %v3168 = vunpack.c.h.b16 %v2806
    %v3169 = vunpack.c.l.b16 %v2807
    %v3170 = vunpack.c.h.b16 %v2807
    %v3171 = vunpack.c.l.b16 %v2808
    %v3172 = vunpack.c.h.b16 %v2808
    %v3173 = vunpack.c.l.b16 %v2809
    %v3174 = vunpack.c.h.b16 %v2809
    %v3175 = vpack.c.b16 %v3113, %v3111
    %v3176 = vpack.c.b16 %v3114, %v3112
    %v3177 = vpack.c.b16 %v3117, %v3115
    %v3178 = vpack.c.b16 %v3118, %v3116
    %v3179 = vpack.c.b16 %v3121, %v3119
    %v3180 = vpack.c.b16 %v3122, %v3120
    %v3181 = vpack.c.b16 %v3125, %v3123
    %v3182 = vpack.c.b16 %v3126, %v3124
    %v3183 = vpack.c.b16 %v3129, %v3127
    %v3184 = vpack.c.b16 %v3130, %v3128
    %v3185 = vpack.c.b16 %v3133, %v3131
    %v3186 = vpack.c.b16 %v3134, %v3132
    %v3187 = vpack.c.b16 %v3137, %v3135
    %v3188 = vpack.c.b16 %v3138, %v3136
    %v3189 = vpack.c.b16 %v3141, %v3139
    %v3190 = vpack.c.b16 %v3142, %v3140
    %v3191 = vpack.c.b16 %v3145, %v3143
    %v3192 = vpack.c.b16 %v3146, %v3144
    %v3193 = vpack.c.b16 %v3149, %v3147
    %v3194 = vpack.c.b16 %v3150, %v3148
    %v3195 = vpack.c.b16 %v3153, %v3151
    %v3196 = vpack.c.b16 %v3154, %v3152
    %v3197 = vpack.c.b16 %v3157, %v3155
    %v3198 = vpack.c.b16 %v3158, %v3156
    %v3199 = vpack.c.b16 %v3161, %v3159
    %v3200 = vpack.c.b16 %v3162, %v3160
    %v3201 = vpack.c.b16 %v3165, %v3163
    %v3202 = vpack.c.b16 %v3166, %v3164
    %v3203 = vpack.c.b16 %v3169, %v3167
    %v3204 = vpack.c.b16 %v3170, %v3168
    %v3205 = vpack.c.b16 %v3173, %v3171
    %v3206 = vpack.c.b16 %v3174, %v3172
    %3239 = vmatpush.bf16.msra.mxu0 %v3189
    %3240 = vmatpush.bf16.msra.mxu0 %v3187
    %3241 = vmatpush.bf16.msra.mxu0 %v3185
    %3242 = vmatpush.bf16.msra.mxu0 %v3183
    %3243 = vmatpush.bf16.msra.mxu0 %v3181
    %3244 = vmatpush.bf16.msra.mxu0 %v3179
    %3245 = vmatpush.bf16.msra.mxu0 %v3177
    %3246 = vmatpush.bf16.msra.mxu0 %v3175
    %3247 = vmatmul.bf16.gmra.mxu0 %v2741
    %v3248 = vpop.f32.mrf.mxu0
    %v3249 = vadd.f32 %v3032, %v3248
    %v3250 = vpop.f32.mrf.mxu0
    %v3251 = vadd.f32 %v3034, %v3250
    %3252 = vmatmul.bf16.gmra.mxu0 %v2743
    %v3253 = vpop.f32.mrf.mxu0
    %v3254 = vadd.f32 %v3037, %v3253
    %v3255 = vpop.f32.mrf.mxu0
    %v3256 = vadd.f32 %v3039, %v3255
    %3257 = vdwg.mxu0
    %3258 = vmatpush.bf16.msra.mxu0 %v3205
    %3259 = vmatpush.bf16.msra.mxu0 %v3203
    %3260 = vmatpush.bf16.msra.mxu0 %v3201
    %3261 = vmatpush.bf16.msra.mxu0 %v3199
    %3262 = vmatpush.bf16.msra.mxu0 %v3197
    %3263 = vmatpush.bf16.msra.mxu0 %v3195
    %3264 = vmatpush.bf16.msra.mxu0 %v3193
    %3265 = vmatpush.bf16.msra.mxu0 %v3191
    %3266 = vmatmul.bf16.gmra.mxu0 %v2742
    %v3267 = vpop.f32.mrf.mxu0
    %v3268 = vadd.f32 %v3249, %v3267
    %v3269 = vpop.f32.mrf.mxu0
    %v3270 = vadd.f32 %v3251, %v3269
    %3271 = vmatmul.bf16.gmra.mxu0 %v2744
    %v3272 = vpop.f32.mrf.mxu0
    %v3273 = vadd.f32 %v3254, %v3272
    %v3274 = vpop.f32.mrf.mxu0
    %v3275 = vadd.f32 %v3256, %v3274
    %3276 = vdwg.mxu0
    %3277 = vmatpush.bf16.msra.mxu0 %v3190
    %3278 = vmatpush.bf16.msra.mxu0 %v3188
    %3279 = vmatpush.bf16.msra.mxu0 %v3186
    %3280 = vmatpush.bf16.msra.mxu0 %v3184
    %3281 = vmatpush.bf16.msra.mxu0 %v3182
    %3282 = vmatpush.bf16.msra.mxu0 %v3180
    %3283 = vmatpush.bf16.msra.mxu0 %v3178
    %3284 = vmatpush.bf16.msra.mxu0 %v3176
    %3285 = vmatmul.bf16.gmra.mxu0 %v2741
    %v3286 = vpop.f32.mrf.mxu0
    %v3287 = vadd.f32 %v3070, %v3286
    %v3288 = vpop.f32.mrf.mxu0
    %v3289 = vadd.f32 %v3072, %v3288
    %3290 = vmatmul.bf16.gmra.mxu0 %v2743
    %v3291 = vpop.f32.mrf.mxu0
    %v3292 = vadd.f32 %v3075, %v3291
    %v3293 = vpop.f32.mrf.mxu0
    %v3294 = vadd.f32 %v3077, %v3293
    %3295 = vdwg.mxu0
    %3296 = vmatpush.bf16.msra.mxu0 %v3206
    %3297 = vmatpush.bf16.msra.mxu0 %v3204
    %3298 = vmatpush.bf16.msra.mxu0 %v3202
    %3299 = vmatpush.bf16.msra.mxu0 %v3200
    %3300 = vmatpush.bf16.msra.mxu0 %v3198
    %3301 = vmatpush.bf16.msra.mxu0 %v3196
    %3302 = vmatpush.bf16.msra.mxu0 %v3194
    %3303 = vmatpush.bf16.msra.mxu0 %v3192
    %3304 = vmatmul.bf16.gmra.mxu0 %v2742
    %v3305 = vpop.f32.mrf.mxu0
    %v3306 = vadd.f32 %v3287, %v3305
    %v3307 = vpop.f32.mrf.mxu0
    %v3308 = vadd.f32 %v3289, %v3307
    %3309 = vmatmul.bf16.gmra.mxu0 %v2744
    %v3310 = vpop.f32.mrf.mxu0
    %v3311 = vadd.f32 %v3292, %v3310
    %v3312 = vpop.f32.mrf.mxu0
    %v3313 = vadd.f32 %v3294, %v3312
    %3314 = vdwg.mxu0
    %s3315 = scalar_lea.vmem [#allocation4], 1280
    %v3316 = vld [vmem:[%s3315] sm:$0xff]
    %v3317 = vld [vmem:[%s3315 + $0x8] sm:$0xff]
    %v3318 = vld [vmem:[%s3315 + $0x10] sm:$0xff]
    %v3319 = vld [vmem:[%s3315 + $0x18] sm:$0xff]
    %v3320 = vld [vmem:[%s3315 + $0x20] sm:$0xff]
    %v3321 = vld [vmem:[%s3315 + $0x28] sm:$0xff]
    %v3322 = vld [vmem:[%s3315 + $0x30] sm:$0xff]
    %v3323 = vld [vmem:[%s3315 + $0x38] sm:$0xff]
    %v3324 = vld [vmem:[%s3315 + $0x40] sm:$0xff]
    %v3325 = vld [vmem:[%s3315 + $0x48] sm:$0xff]
    %v3326 = vld [vmem:[%s3315 + $0x50] sm:$0xff]
    %v3327 = vld [vmem:[%s3315 + $0x58] sm:$0xff]
    %v3328 = vld [vmem:[%s3315 + $0x60] sm:$0xff]
    %v3329 = vld [vmem:[%s3315 + $0x68] sm:$0xff]
    %v3330 = vld [vmem:[%s3315 + $0x70] sm:$0xff]
    %v3331 = vld [vmem:[%s3315 + $0x78] sm:$0xff]
    %v3332 = vld [vmem:[%s3315 + $0x80] sm:$0xff]
    %v3333 = vld [vmem:[%s3315 + $0x88] sm:$0xff]
    %v3334 = vld [vmem:[%s3315 + $0x90] sm:$0xff]
    %v3335 = vld [vmem:[%s3315 + $0x98] sm:$0xff]
    %v3336 = vld [vmem:[%s3315 + $0xa0] sm:$0xff]
    %v3337 = vld [vmem:[%s3315 + $0xa8] sm:$0xff]
    %v3338 = vld [vmem:[%s3315 + $0xb0] sm:$0xff]
    %v3339 = vld [vmem:[%s3315 + $0xb8] sm:$0xff]
    %v3340 = vld [vmem:[%s3315 + $0xc0] sm:$0xff]
    %v3341 = vld [vmem:[%s3315 + $0xc8] sm:$0xff]
    %v3342 = vld [vmem:[%s3315 + $0xd0] sm:$0xff]
    %v3343 = vld [vmem:[%s3315 + $0xd8] sm:$0xff]
    %v3344 = vld [vmem:[%s3315 + $0xe0] sm:$0xff]
    %v3345 = vld [vmem:[%s3315 + $0xe8] sm:$0xff]
    %v3346 = vld [vmem:[%s3315 + $0xf0] sm:$0xff]
    %v3347 = vld [vmem:[%s3315 + $0xf8] sm:$0xff]
    %v3380 = vunpack.c.l.b16 %v3316
    %v3381 = vunpack.c.h.b16 %v3316
    %v3382 = vunpack.c.l.b16 %v3317
    %v3383 = vunpack.c.h.b16 %v3317
    %v3384 = vunpack.c.l.b16 %v3318
    %v3385 = vunpack.c.h.b16 %v3318
    %v3386 = vunpack.c.l.b16 %v3319
    %v3387 = vunpack.c.h.b16 %v3319
    %v3388 = vunpack.c.l.b16 %v3320
    %v3389 = vunpack.c.h.b16 %v3320
    %v3390 = vunpack.c.l.b16 %v3321
    %v3391 = vunpack.c.h.b16 %v3321
    %v3392 = vunpack.c.l.b16 %v3322
    %v3393 = vunpack.c.h.b16 %v3322
    %v3394 = vunpack.c.l.b16 %v3323
    %v3395 = vunpack.c.h.b16 %v3323
    %v3396 = vunpack.c.l.b16 %v3324
    %v3397 = vunpack.c.h.b16 %v3324
    %v3398 = vunpack.c.l.b16 %v3325
    %v3399 = vunpack.c.h.b16 %v3325
    %v3400 = vunpack.c.l.b16 %v3326
    %v3401 = vunpack.c.h.b16 %v3326
    %v3402 = vunpack.c.l.b16 %v3327
    %v3403 = vunpack.c.h.b16 %v3327
    %v3404 = vunpack.c.l.b16 %v3328
    %v3405 = vunpack.c.h.b16 %v3328
    %v3406 = vunpack.c.l.b16 %v3329
    %v3407 = vunpack.c.h.b16 %v3329
    %v3408 = vunpack.c.l.b16 %v3330
    %v3409 = vunpack.c.h.b16 %v3330
    %v3410 = vunpack.c.l.b16 %v3331
    %v3411 = vunpack.c.h.b16 %v3331
    %v3412 = vunpack.c.l.b16 %v3332
    %v3413 = vunpack.c.h.b16 %v3332
    %v3414 = vunpack.c.l.b16 %v3333
    %v3415 = vunpack.c.h.b16 %v3333
    %v3416 = vunpack.c.l.b16 %v3334
    %v3417 = vunpack.c.h.b16 %v3334
    %v3418 = vunpack.c.l.b16 %v3335
    %v3419 = vunpack.c.h.b16 %v3335
    %v3420 = vunpack.c.l.b16 %v3336
    %v3421 = vunpack.c.h.b16 %v3336
    %v3422 = vunpack.c.l.b16 %v3337
    %v3423 = vunpack.c.h.b16 %v3337
    %v3424 = vunpack.c.l.b16 %v3338
    %v3425 = vunpack.c.h.b16 %v3338
    %v3426 = vunpack.c.l.b16 %v3339
    %v3427 = vunpack.c.h.b16 %v3339
    %v3428 = vunpack.c.l.b16 %v3340
    %v3429 = vunpack.c.h.b16 %v3340
    %v3430 = vunpack.c.l.b16 %v3341
    %v3431 = vunpack.c.h.b16 %v3341
    %v3432 = vunpack.c.l.b16 %v3342
    %v3433 = vunpack.c.h.b16 %v3342
    %v3434 = vunpack.c.l.b16 %v3343
    %v3435 = vunpack.c.h.b16 %v3343
    %v3436 = vunpack.c.l.b16 %v3344
    %v3437 = vunpack.c.h.b16 %v3344
    %v3438 = vunpack.c.l.b16 %v3345
    %v3439 = vunpack.c.h.b16 %v3345
    %v3440 = vunpack.c.l.b16 %v3346
    %v3441 = vunpack.c.h.b16 %v3346
    %v3442 = vunpack.c.l.b16 %v3347
    %v3443 = vunpack.c.h.b16 %v3347
    %v3444 = vpack.c.b16 %v3382, %v3380
    %v3445 = vpack.c.b16 %v3383, %v3381
    %v3446 = vpack.c.b16 %v3386, %v3384
    %v3447 = vpack.c.b16 %v3387, %v3385
    %v3448 = vpack.c.b16 %v3390, %v3388
    %v3449 = vpack.c.b16 %v3391, %v3389
    %v3450 = vpack.c.b16 %v3394, %v3392
    %v3451 = vpack.c.b16 %v3395, %v3393
    %v3452 = vpack.c.b16 %v3398, %v3396
    %v3453 = vpack.c.b16 %v3399, %v3397
    %v3454 = vpack.c.b16 %v3402, %v3400
    %v3455 = vpack.c.b16 %v3403, %v3401
    %v3456 = vpack.c.b16 %v3406, %v3404
    %v3457 = vpack.c.b16 %v3407, %v3405
    %v3458 = vpack.c.b16 %v3410, %v3408
    %v3459 = vpack.c.b16 %v3411, %v3409
    %v3460 = vpack.c.b16 %v3414, %v3412
    %v3461 = vpack.c.b16 %v3415, %v3413
    %v3462 = vpack.c.b16 %v3418, %v3416
    %v3463 = vpack.c.b16 %v3419, %v3417
    %v3464 = vpack.c.b16 %v3422, %v3420
    %v3465 = vpack.c.b16 %v3423, %v3421
    %v3466 = vpack.c.b16 %v3426, %v3424
    %v3467 = vpack.c.b16 %v3427, %v3425
    %v3468 = vpack.c.b16 %v3430, %v3428
    %v3469 = vpack.c.b16 %v3431, %v3429
    %v3470 = vpack.c.b16 %v3434, %v3432
    %v3471 = vpack.c.b16 %v3435, %v3433
    %v3472 = vpack.c.b16 %v3438, %v3436
    %v3473 = vpack.c.b16 %v3439, %v3437
    %v3474 = vpack.c.b16 %v3442, %v3440
    %v3475 = vpack.c.b16 %v3443, %v3441
    %3508 = vmatpush.bf16.msra.mxu0 %v3458
    %3509 = vmatpush.bf16.msra.mxu0 %v3456
    %3510 = vmatpush.bf16.msra.mxu0 %v3454
    %3511 = vmatpush.bf16.msra.mxu0 %v3452
    %3512 = vmatpush.bf16.msra.mxu0 %v3450
    %3513 = vmatpush.bf16.msra.mxu0 %v3448
    %3514 = vmatpush.bf16.msra.mxu0 %v3446
    %3515 = vmatpush.bf16.msra.mxu0 %v3444
    %3516 = vmatmul.bf16.gmra.mxu0 %v2769
    %v3517 = vpop.f32.mrf.mxu0
    %v3518 = vadd.f32 0.0, %v3517
    %v3519 = vpop.f32.mrf.mxu0
    %v3520 = vadd.f32 0.0, %v3519
    %3521 = vmatmul.bf16.gmra.mxu0 %v2771
    %v3522 = vpop.f32.mrf.mxu0
    %v3523 = vadd.f32 0.0, %v3522
    %v3524 = vpop.f32.mrf.mxu0
    %v3525 = vadd.f32 0.0, %v3524
    %3526 = vdwg.mxu0
    %3527 = vmatpush.bf16.msra.mxu0 %v3474
    %3528 = vmatpush.bf16.msra.mxu0 %v3472
    %3529 = vmatpush.bf16.msra.mxu0 %v3470
    %3530 = vmatpush.bf16.msra.mxu0 %v3468
    %3531 = vmatpush.bf16.msra.mxu0 %v3466
    %3532 = vmatpush.bf16.msra.mxu0 %v3464
    %3533 = vmatpush.bf16.msra.mxu0 %v3462
    %3534 = vmatpush.bf16.msra.mxu0 %v3460
    %3535 = vmatmul.bf16.gmra.mxu0 %v2770
    %v3536 = vpop.f32.mrf.mxu0
    %v3537 = vadd.f32 %v3518, %v3536
    %v3538 = vpop.f32.mrf.mxu0
    %v3539 = vadd.f32 %v3520, %v3538
    %3540 = vmatmul.bf16.gmra.mxu0 %v2772
    %v3541 = vpop.f32.mrf.mxu0
    %v3542 = vadd.f32 %v3523, %v3541
    %v3543 = vpop.f32.mrf.mxu0
    %v3544 = vadd.f32 %v3525, %v3543
    %3545 = vdwg.mxu0
    %3546 = vmatpush.bf16.msra.mxu0 %v3459
    %3547 = vmatpush.bf16.msra.mxu0 %v3457
    %3548 = vmatpush.bf16.msra.mxu0 %v3455
    %3549 = vmatpush.bf16.msra.mxu0 %v3453
    %3550 = vmatpush.bf16.msra.mxu0 %v3451
    %3551 = vmatpush.bf16.msra.mxu0 %v3449
    %3552 = vmatpush.bf16.msra.mxu0 %v3447
    %3553 = vmatpush.bf16.msra.mxu0 %v3445
    %3554 = vmatmul.bf16.gmra.mxu0 %v2769
    %v3555 = vpop.f32.mrf.mxu0
    %v3556 = vadd.f32 0.0, %v3555
    %v3557 = vpop.f32.mrf.mxu0
    %v3558 = vadd.f32 0.0, %v3557
    %3559 = vmatmul.bf16.gmra.mxu0 %v2771
    %v3560 = vpop.f32.mrf.mxu0
    %v3561 = vadd.f32 0.0, %v3560
    %v3562 = vpop.f32.mrf.mxu0
    %v3563 = vadd.f32 0.0, %v3562
    %3564 = vdwg.mxu0
    %3565 = vmatpush.bf16.msra.mxu0 %v3475
    %3566 = vmatpush.bf16.msra.mxu0 %v3473
    %3567 = vmatpush.bf16.msra.mxu0 %v3471
    %3568 = vmatpush.bf16.msra.mxu0 %v3469
    %3569 = vmatpush.bf16.msra.mxu0 %v3467
    %3570 = vmatpush.bf16.msra.mxu0 %v3465
    %3571 = vmatpush.bf16.msra.mxu0 %v3463
    %3572 = vmatpush.bf16.msra.mxu0 %v3461
    %3573 = vmatmul.bf16.gmra.mxu0 %v2770
    %v3574 = vpop.f32.mrf.mxu0
    %v3575 = vadd.f32 %v3556, %v3574
    %v3576 = vpop.f32.mrf.mxu0
    %v3577 = vadd.f32 %v3558, %v3576
    %3578 = vmatmul.bf16.gmra.mxu0 %v2772
    %v3579 = vpop.f32.mrf.mxu0
    %v3580 = vadd.f32 %v3561, %v3579
    %v3581 = vpop.f32.mrf.mxu0
    %v3582 = vadd.f32 %v3563, %v3581
    %3583 = vdwg.mxu0
    %v3584 = vadd.f32 %v3268, %v3537
    %v3585 = vadd.f32 %v3306, %v3575
    %v3586 = vadd.f32 %v3270, %v3539
    %v3587 = vadd.f32 %v3308, %v3577
    %v3588 = vadd.f32 %v3273, %v3542
    %v3589 = vadd.f32 %v3311, %v3580
    %v3590 = vadd.f32 %v3275, %v3544
    %v3591 = vadd.f32 %v3313, %v3582
    %s3592 = scalar_lea.vmem [#allocation6], 2
    %v3593 = vld [vmem:[%s3592] ss:$4 sm:$0x3]
    %v3595 = vperm.slane %v3593, 0
    %v3596 = vperm.slane %v3593, 1
    %v3599 = vadd.f32 %v3584, %v3595
    %v3600 = vadd.f32 %v3585, %v3596
    %v3601 = vadd.f32 %v3586, %v3595
    %v3602 = vadd.f32 %v3587, %v3596
    %v3603 = vadd.f32 %v3588, %v3595
    %v3604 = vadd.f32 %v3589, %v3596
    %v3605 = vadd.f32 %v3590, %v3595
    %v3606 = vadd.f32 %v3591, %v3596
    %v3607 = vadd.f32 %v3599, %v3601
    %v3608 = vrot.slane %v3607, 4
    %v3609 = vadd.f32 %v3607, %v3608
    %v3610 = vrot.slane %v3609, 2
    %v3611 = vadd.f32 %v3609, %v3610
    %v3612 = vrot.slane %v3611, 1
    %v3613 = vadd.f32 %v3611, %v3612
    %v3614 = vadd.f32 %v3600, %v3602
    %v3615 = vrot.slane %v3614, 4
    %v3616 = vadd.f32 %v3614, %v3615
    %v3617 = vrot.slane %v3616, 2
    %v3618 = vadd.f32 %v3616, %v3617
    %v3619 = vrot.slane %v3618, 1
    %v3620 = vadd.f32 %v3618, %v3619
    %v3621 = vadd.f32 %v3603, %v3605
    %v3622 = vrot.slane %v3621, 4
    %v3623 = vadd.f32 %v3621, %v3622
    %v3624 = vrot.slane %v3623, 2
    %v3625 = vadd.f32 %v3623, %v3624
    %v3626 = vrot.slane %v3625, 1
    %v3627 = vadd.f32 %v3625, %v3626
    %v3628 = vadd.f32 %v3604, %v3606
    %v3629 = vrot.slane %v3628, 4
    %v3630 = vadd.f32 %v3628, %v3629
    %v3631 = vrot.slane %v3630, 2
    %v3632 = vadd.f32 %v3630, %v3631
    %v3633 = vrot.slane %v3632, 1
    %v3634 = vadd.f32 %v3632, %v3633
    %v3635 = vmul.f32 %v3599, %v3599
    %v3636 = vmul.f32 %v3600, %v3600
    %v3637 = vmul.f32 %v3601, %v3601
    %v3638 = vmul.f32 %v3602, %v3602
    %v3639 = vmul.f32 %v3603, %v3603
    %v3640 = vmul.f32 %v3604, %v3604
    %v3641 = vmul.f32 %v3605, %v3605
    %v3642 = vmul.f32 %v3606, %v3606
    %v3643 = vadd.f32 %v3635, %v3637
    %v3644 = vrot.slane %v3643, 4
    %v3645 = vadd.f32 %v3643, %v3644
    %v3646 = vrot.slane %v3645, 2
    %v3647 = vadd.f32 %v3645, %v3646
    %v3648 = vrot.slane %v3647, 1
    %v3649 = vadd.f32 %v3647, %v3648
    %v3650 = vadd.f32 %v3636, %v3638
    %v3651 = vrot.slane %v3650, 4
    %v3652 = vadd.f32 %v3650, %v3651
    %v3653 = vrot.slane %v3652, 2
    %v3654 = vadd.f32 %v3652, %v3653
    %v3655 = vrot.slane %v3654, 1
    %v3656 = vadd.f32 %v3654, %v3655
    %v3657 = vadd.f32 %v3639, %v3641
    %v3658 = vrot.slane %v3657, 4
    %v3659 = vadd.f32 %v3657, %v3658
    %v3660 = vrot.slane %v3659, 2
    %v3661 = vadd.f32 %v3659, %v3660
    %v3662 = vrot.slane %v3661, 1
    %v3663 = vadd.f32 %v3661, %v3662
    %v3664 = vadd.f32 %v3640, %v3642
    %v3665 = vrot.slane %v3664, 4
    %v3666 = vadd.f32 %v3664, %v3665
    %v3667 = vrot.slane %v3666, 2
    %v3668 = vadd.f32 %v3666, %v3667
    %v3669 = vrot.slane %v3668, 1
    %v3670 = vadd.f32 %v3668, %v3669
    %v3675 = vsel %vm924, %v3627, %v3613
    %v3676 = vsel %vm924, %v3634, %v3620
    %v3683 = vsel %vm933, %v3663, %v3649
    %v3684 = vsel %vm933, %v3670, %v3656
    %v3687 = vsel %vm938, %v3675, %v3683
    %v3688 = vsel %vm938, %v3676, %v3684
    %3689 = vmatpush.msra.mxu0 %v971
    %3690 = vmatpush.msra.mxu0 %v969
    %3691 = vmatpush.msra.mxu0 %v967
    %3692 = vmatpush.msra.mxu0 %v965
    %3693 = vmatpush.msra.mxu0 %v963
    %3694 = vmatpush.msra.mxu0 %v961
    %3695 = vmatpush.msra.mxu0 %v959
    %3696 = vmatpush.msra.mxu0 %v957
    %3697 = vmatpush.msra.mxu0 %v955
    %3698 = vmatpush.msra.mxu0 %v953
    %3699 = vmatpush.msra.mxu0 %v951
    %3700 = vmatpush.msra.mxu0 %v949
    %3701 = vmatpush.msra.mxu0 %v947
    %3702 = vmatpush.msra.mxu0 %v945
    %3703 = vmatpush.msra.mxu0 %v943
    %3704 = vmatpush.msra.mxu0 %v941
    %3705 = vmatmul.f32.gmra.mxu0 %v3687
    %v3706 = vpop.f32.mrf.mxu0
    %v3707 = vadd.f32 0.0, %v3706
    %3708 = vdwg.mxu0
    %3709 = vmatpush.msra.mxu0 %v1003
    %3710 = vmatpush.msra.mxu0 %v1001
    %3711 = vmatpush.msra.mxu0 %v999
    %3712 = vmatpush.msra.mxu0 %v997
    %3713 = vmatpush.msra.mxu0 %v995
    %3714 = vmatpush.msra.mxu0 %v993
    %3715 = vmatpush.msra.mxu0 %v991
    %3716 = vmatpush.msra.mxu0 %v989
    %3717 = vmatpush.msra.mxu0 %v987
    %3718 = vmatpush.msra.mxu0 %v985
    %3719 = vmatpush.msra.mxu0 %v983
    %3720 = vmatpush.msra.mxu0 %v981
    %3721 = vmatpush.msra.mxu0 %v979
    %3722 = vmatpush.msra.mxu0 %v977
    %3723 = vmatpush.msra.mxu0 %v975
    %3724 = vmatpush.msra.mxu0 %v973
    %3725 = vmatmul.f32.gmra.mxu0 %v3688
    %v3726 = vpop.f32.mrf.mxu0
    %v3727 = vadd.f32 %v3707, %v3726
    %3728 = vdwg.mxu0
    %3729 = vmatpush.msra.mxu0 %v972
    %3730 = vmatpush.msra.mxu0 %v970
    %3731 = vmatpush.msra.mxu0 %v968
    %3732 = vmatpush.msra.mxu0 %v966
    %3733 = vmatpush.msra.mxu0 %v964
    %3734 = vmatpush.msra.mxu0 %v962
    %3735 = vmatpush.msra.mxu0 %v960
    %3736 = vmatpush.msra.mxu0 %v958
    %3737 = vmatpush.msra.mxu0 %v956
    %3738 = vmatpush.msra.mxu0 %v954
    %3739 = vmatpush.msra.mxu0 %v952
    %3740 = vmatpush.msra.mxu0 %v950
    %3741 = vmatpush.msra.mxu0 %v948
    %3742 = vmatpush.msra.mxu0 %v946
    %3743 = vmatpush.msra.mxu0 %v944
    %3744 = vmatpush.msra.mxu0 %v942
    %3745 = vmatmul.f32.gmra.mxu0 %v3687
    %v3746 = vpop.f32.mrf.mxu0
    %v3747 = vadd.f32 0.0, %v3746
    %3748 = vdwg.mxu0
    %3749 = vmatpush.msra.mxu0 %v1004
    %3750 = vmatpush.msra.mxu0 %v1002
    %3751 = vmatpush.msra.mxu0 %v1000
    %3752 = vmatpush.msra.mxu0 %v998
    %3753 = vmatpush.msra.mxu0 %v996
    %3754 = vmatpush.msra.mxu0 %v994
    %3755 = vmatpush.msra.mxu0 %v992
    %3756 = vmatpush.msra.mxu0 %v990
    %3757 = vmatpush.msra.mxu0 %v988
    %3758 = vmatpush.msra.mxu0 %v986
    %3759 = vmatpush.msra.mxu0 %v984
    %3760 = vmatpush.msra.mxu0 %v982
    %3761 = vmatpush.msra.mxu0 %v980
    %3762 = vmatpush.msra.mxu0 %v978
    %3763 = vmatpush.msra.mxu0 %v976
    %3764 = vmatpush.msra.mxu0 %v974
    %3765 = vmatmul.f32.gmra.mxu0 %v3688
    %v3766 = vpop.f32.mrf.mxu0
    %v3767 = vadd.f32 %v3747, %v3766
    %3768 = vdwg.mxu0
    %v3771 = vrot.slane %v3767, 7
    %v3772 = vsel %vm1088, %v3727, %v3771
    %v3773 = vsel %vm924, %v3727, %v3771
    %v3774 = vrot.slane %v3773, 1
    %3777 = vst [vmem:[#allocation1] sm:$0xff] %v3727
    %3778 = vst [vmem:[#allocation1 + $0x9] sm:$0xff] %v3767
    %s3779 = scalar_lea.vmem [#allocation1], 2
    %v3780 = vld [vmem:[%s3779] ss:$9 sm:$0xff]
    %s3781 = scalar_lea.vmem [#allocation1], 3
    %v3782 = vld [vmem:[%s3781] ss:$9 sm:$0xff]
    %v3785 = vmul.f32 %v3772, %v3772
    %v3786 = vmul.f32 %v3774, %v3774
    %v3787 = vsub.f32 %v3780, %v3785
    %v3788 = vsub.f32 %v3782, %v3786
    %v3789 = vadd.f32 %v3787, 1e-05
    %v3790 = vadd.f32 %v3788, 1e-05
    %v3791 = vrsqrt.pop %v3789
    %v3792 = vmul.f32 %v3791, %v3789
    %v3793 = vmul.f32 %v3792, %v3791
    %v3794 = vmul.f32 0.5, %v3793
    %v3795 = vsub.f32 1.5, %v3794
    %v3796 = vmul.f32 %v3791, %v3795
    %vm3797 = vweird.f32 %v3789
    %vm3798 = vweird.f32 %v3791
    %vm3799 = vmor %vm3797, %vm3798
    %v3800 = vsel %vm3799, %v3791, %v3796
    %v3801 = vrsqrt.pop %v3790
    %v3802 = vmul.f32 %v3801, %v3790
    %v3803 = vmul.f32 %v3802, %v3801
    %v3804 = vmul.f32 0.5, %v3803
    %v3805 = vsub.f32 1.5, %v3804
    %v3806 = vmul.f32 %v3801, %v3805
    %vm3807 = vweird.f32 %v3790
    %vm3808 = vweird.f32 %v3801
    %vm3809 = vmor %vm3807, %vm3808
    %v3810 = vsel %vm3809, %v3801, %v3806
    %v3811 = vperm.slane %v3772, 0
    %v3812 = vperm.slane %v3772, 1
    %v3813 = vperm.slane %v3774, 0
    %v3814 = vperm.slane %v3774, 1
    %v3819 = vsub.f32 %v3599, %v3811
    %v3820 = vsub.f32 %v3600, %v3812
    %v3821 = vsub.f32 %v3601, %v3811
    %v3822 = vsub.f32 %v3602, %v3812
    %v3823 = vsub.f32 %v3603, %v3813
    %v3824 = vsub.f32 %v3604, %v3814
    %v3825 = vsub.f32 %v3605, %v3813
    %v3826 = vsub.f32 %v3606, %v3814
    %s3827 = scalar_lea.vmem [#allocation7], 2
    %v3828 = vld [vmem:[%s3827] ss:$4 sm:$0x3]
    %v3829 = vmul.f32 %v3800, %v3828
    %v3830 = vmul.f32 %v3810, %v3828
    %v3833 = vperm.slane %v3829, 0
    %v3834 = vperm.slane %v3829, 1
    %v3835 = vperm.slane %v3830, 0
    %v3836 = vperm.slane %v3830, 1
    %v3841 = vmul.f32 %v3819, %v3833
    %v3842 = vmul.f32 %v3820, %v3834
    %v3843 = vmul.f32 %v3821, %v3833
    %v3844 = vmul.f32 %v3822, %v3834
    %v3845 = vmul.f32 %v3823, %v3835
    %v3846 = vmul.f32 %v3824, %v3836
    %v3847 = vmul.f32 %v3825, %v3835
    %v3848 = vmul.f32 %v3826, %v3836
    %s3849 = scalar_lea.vmem [#allocation9], 2
    %v3850 = vld [vmem:[%s3849] ss:$4 sm:$0x3]
    %v3852 = vperm.slane %v3850, 0
    %v3853 = vperm.slane %v3850, 1
    %v3856 = vadd.f32 %v3841, %v3852
    %v3857 = vadd.f32 %v3842, %v3853
    %v3858 = vadd.f32 %v3843, %v3852
    %v3859 = vadd.f32 %v3844, %v3853
    %v3860 = vadd.f32 %v3845, %v3852
    %v3861 = vadd.f32 %v3846, %v3853
    %v3862 = vadd.f32 %v3847, %v3852
    %v3863 = vadd.f32 %v3848, %v3853
    %v3864 = vxor.u32 %v3856, 2147483648
    %v3865 = vxor.u32 %v3857, 2147483648
    %v3866 = vxor.u32 %v3858, 2147483648
    %v3867 = vxor.u32 %v3859, 2147483648
    %v3868 = vxor.u32 %v3860, 2147483648
    %v3869 = vxor.u32 %v3861, 2147483648
    %v3870 = vxor.u32 %v3862, 2147483648
    %v3871 = vxor.u32 %v3863, 2147483648
    %v3872 = vmul.f32 %v3864, 1.442695
    %v3873 = vpow.pop %v3872
    %v3874 = vmul.f32 %v3865, 1.442695
    %v3875 = vpow.pop %v3874
    %v3876 = vmul.f32 %v3866, 1.442695
    %v3877 = vpow.pop %v3876
    %v3878 = vmul.f32 %v3867, 1.442695
    %v3879 = vpow.pop %v3878
    %v3880 = vmul.f32 %v3868, 1.442695
    %v3881 = vpow.pop %v3880
    %v3882 = vmul.f32 %v3869, 1.442695
    %v3883 = vpow.pop %v3882
    %v3884 = vmul.f32 %v3870, 1.442695
    %v3885 = vpow.pop %v3884
    %v3886 = vmul.f32 %v3871, 1.442695
    %v3887 = vpow.pop %v3886
    %v3888 = vadd.f32 %v3873, 1.0
    %v3889 = vadd.f32 %v3875, 1.0
    %v3890 = vadd.f32 %v3877, 1.0
    %v3891 = vadd.f32 %v3879, 1.0
    %v3892 = vadd.f32 %v3881, 1.0
    %v3893 = vadd.f32 %v3883, 1.0
    %v3894 = vadd.f32 %v3885, 1.0
    %v3895 = vadd.f32 %v3887, 1.0
    %v3896 = vrcp.pop %v3888
    %v3897 = vmul.f32 %v3888, %v3896
    %v3898 = vsub.f32 1.0, %v3897
    %v3899 = vmul.f32 %v3896, %v3898
    %v3900 = vadd.f32 %v3896, %v3899
    %vm3901 = vweird.f32 %v3888
    %vm3902 = vweird.f32 %v3896
    %vm3903 = vmor %vm3901, %vm3902
    %v3904 = vsel %vm3903, %v3896, %v3900
    %v3905 = vand.u32 2147483647, %v3888
    %vm3906 = vcmp.eq.f32.partialorder %v3905, 8.507059e+37
    %v3907 = vand.u32 %v3888, 2147483648
    %v3908 = vor.u32 1.1754944e-38, %v3907
    %v3909 = vsel %vm3906, %v3908, %v3904
    %v3910 = vmul.f32 1.0, %v3909
    %v3911 = vrcp.pop %v3889
    %v3912 = vmul.f32 %v3889, %v3911
    %v3913 = vsub.f32 1.0, %v3912
    %v3914 = vmul.f32 %v3911, %v3913
    %v3915 = vadd.f32 %v3911, %v3914
    %vm3916 = vweird.f32 %v3889
    %vm3917 = vweird.f32 %v3911
    %vm3918 = vmor %vm3916, %vm3917
    %v3919 = vsel %vm3918, %v3911, %v3915
    %v3920 = vand.u32 2147483647, %v3889
    %vm3921 = vcmp.eq.f32.partialorder %v3920, 8.507059e+37
    %v3922 = vand.u32 %v3889, 2147483648
    %v3923 = vor.u32 1.1754944e-38, %v3922
    %v3924 = vsel %vm3921, %v3923, %v3919
    %v3925 = vmul.f32 1.0, %v3924
    %v3926 = vrcp.pop %v3890
    %v3927 = vmul.f32 %v3890, %v3926
    %v3928 = vsub.f32 1.0, %v3927
    %v3929 = vmul.f32 %v3926, %v3928
    %v3930 = vadd.f32 %v3926, %v3929
    %vm3931 = vweird.f32 %v3890
    %vm3932 = vweird.f32 %v3926
    %vm3933 = vmor %vm3931, %vm3932
    %v3934 = vsel %vm3933, %v3926, %v3930
    %v3935 = vand.u32 2147483647, %v3890
    %vm3936 = vcmp.eq.f32.partialorder %v3935, 8.507059e+37
    %v3937 = vand.u32 %v3890, 2147483648
    %v3938 = vor.u32 1.1754944e-38, %v3937
    %v3939 = vsel %vm3936, %v3938, %v3934
    %v3940 = vmul.f32 1.0, %v3939
    %v3941 = vrcp.pop %v3891
    %v3942 = vmul.f32 %v3891, %v3941
    %v3943 = vsub.f32 1.0, %v3942
    %v3944 = vmul.f32 %v3941, %v3943
    %v3945 = vadd.f32 %v3941, %v3944
    %vm3946 = vweird.f32 %v3891
    %vm3947 = vweird.f32 %v3941
    %vm3948 = vmor %vm3946, %vm3947
    %v3949 = vsel %vm3948, %v3941, %v3945
    %v3950 = vand.u32 2147483647, %v3891
    %vm3951 = vcmp.eq.f32.partialorder %v3950, 8.507059e+37
    %v3952 = vand.u32 %v3891, 2147483648
    %v3953 = vor.u32 1.1754944e-38, %v3952
    %v3954 = vsel %vm3951, %v3953, %v3949
    %v3955 = vmul.f32 1.0, %v3954
    %v3956 = vrcp.pop %v3892
    %v3957 = vmul.f32 %v3892, %v3956
    %v3958 = vsub.f32 1.0, %v3957
    %v3959 = vmul.f32 %v3956, %v3958
    %v3960 = vadd.f32 %v3956, %v3959
    %vm3961 = vweird.f32 %v3892
    %vm3962 = vweird.f32 %v3956
    %vm3963 = vmor %vm3961, %vm3962
    %v3964 = vsel %vm3963, %v3956, %v3960
    %v3965 = vand.u32 2147483647, %v3892
    %vm3966 = vcmp.eq.f32.partialorder %v3965, 8.507059e+37
    %v3967 = vand.u32 %v3892, 2147483648
    %v3968 = vor.u32 1.1754944e-38, %v3967
    %v3969 = vsel %vm3966, %v3968, %v3964
    %v3970 = vmul.f32 1.0, %v3969
    %v3971 = vrcp.pop %v3893
    %v3972 = vmul.f32 %v3893, %v3971
    %v3973 = vsub.f32 1.0, %v3972
    %v3974 = vmul.f32 %v3971, %v3973
    %v3975 = vadd.f32 %v3971, %v3974
    %vm3976 = vweird.f32 %v3893
    %vm3977 = vweird.f32 %v3971
    %vm3978 = vmor %vm3976, %vm3977
    %v3979 = vsel %vm3978, %v3971, %v3975
    %v3980 = vand.u32 2147483647, %v3893
    %vm3981 = vcmp.eq.f32.partialorder %v3980, 8.507059e+37
    %v3982 = vand.u32 %v3893, 2147483648
    %v3983 = vor.u32 1.1754944e-38, %v3982
    %v3984 = vsel %vm3981, %v3983, %v3979
    %v3985 = vmul.f32 1.0, %v3984
    %v3986 = vrcp.pop %v3894
    %v3987 = vmul.f32 %v3894, %v3986
    %v3988 = vsub.f32 1.0, %v3987
    %v3989 = vmul.f32 %v3986, %v3988
    %v3990 = vadd.f32 %v3986, %v3989
    %vm3991 = vweird.f32 %v3894
    %vm3992 = vweird.f32 %v3986
    %vm3993 = vmor %vm3991, %vm3992
    %v3994 = vsel %vm3993, %v3986, %v3990
    %v3995 = vand.u32 2147483647, %v3894
    %vm3996 = vcmp.eq.f32.partialorder %v3995, 8.507059e+37
    %v3997 = vand.u32 %v3894, 2147483648
    %v3998 = vor.u32 1.1754944e-38, %v3997
    %v3999 = vsel %vm3996, %v3998, %v3994
    %v4000 = vmul.f32 1.0, %v3999
    %v4001 = vrcp.pop %v3895
    %v4002 = vmul.f32 %v3895, %v4001
    %v4003 = vsub.f32 1.0, %v4002
    %v4004 = vmul.f32 %v4001, %v4003
    %v4005 = vadd.f32 %v4001, %v4004
    %vm4006 = vweird.f32 %v3895
    %vm4007 = vweird.f32 %v4001
    %vm4008 = vmor %vm4006, %vm4007
    %v4009 = vsel %vm4008, %v4001, %v4005
    %v4010 = vand.u32 2147483647, %v3895
    %vm4011 = vcmp.eq.f32.partialorder %v4010, 8.507059e+37
    %v4012 = vand.u32 %v3895, 2147483648
    %v4013 = vor.u32 1.1754944e-38, %v4012
    %v4014 = vsel %vm4011, %v4013, %v4009
    %v4015 = vmul.f32 1.0, %v4014
    %v4016 = vmul.f32 %v3856, %v3910
    %v4017 = vmul.f32 %v3857, %v3925
    %v4018 = vmul.f32 %v3858, %v3940
    %v4019 = vmul.f32 %v3859, %v3955
    %v4020 = vmul.f32 %v3860, %v3970
    %v4021 = vmul.f32 %v3861, %v3985
    %v4022 = vmul.f32 %v3862, %v4000
    %v4023 = vmul.f32 %v3863, %v4015
    %v4024 = vrot.slane %v4016, 7
    %v4025 = vrot.slane %v4017, 7
    %v4026 = vrot.slane %v4018, 7
    %v4027 = vrot.slane %v4019, 7
    %v4028 = vrot.slane %v4020, 7
    %v4029 = vrot.slane %v4021, 7
    %v4030 = vrot.slane %v4022, 7
    %v4031 = vrot.slane %v4023, 7
    %v4032 = vsel %vm147, %v4028, %v4030
    %v4033 = vsel %vm147, %v4029, %v4031
    %v4034 = vsel %vm147, %v4026, %v4028
    %v4035 = vsel %vm147, %v4027, %v4029
    %v4036 = vsel %vm147, %v4024, %v4026
    %v4037 = vsel %vm147, %v4025, %v4027
    %v4038 = vsel %vm147, %v4030, %v4024
    %v4039 = vsel %vm147, %v4031, %v4025
    %v4040 = vsel %vm1415, %v4038, 0.0
    %v4041 = vsel %vm1415, %v4039, 0.0
    %v4042 = vsel %vm1416, %v4036, 0.0
    %v4043 = vsel %vm1416, %v4037, 0.0
    %v4044 = vsel %vm1417, %v4034, 0.0
    %v4045 = vsel %vm1417, %v4035, 0.0
    %v4046 = vsel %vm1418, %v4032, 0.0
    %v4047 = vsel %vm1418, %v4033, 0.0
    %v4048 = vpack.c.bf16 %v4042, %v4040
    %v4049 = vpack.c.bf16 %v4043, %v4041
    %v4050 = vpack.c.bf16 %v4046, %v4044
    %v4051 = vpack.c.bf16 %v4047, %v4045
    %v4052 = vrot.slane %v4016, 1
    %v4053 = vrot.slane %v4017, 1
    %v4054 = vrot.slane %v4018, 1
    %v4055 = vrot.slane %v4019, 1
    %v4056 = vrot.slane %v4020, 1
    %v4057 = vrot.slane %v4021, 1
    %v4058 = vrot.slane %v4022, 1
    %v4059 = vrot.slane %v4023, 1
    %v4060 = vsel %vm161, %v4056, %v4058
    %v4061 = vsel %vm161, %v4057, %v4059
    %v4062 = vsel %vm161, %v4054, %v4056
    %v4063 = vsel %vm161, %v4055, %v4057
    %v4064 = vsel %vm161, %v4052, %v4054
    %v4065 = vsel %vm161, %v4053, %v4055
    %v4066 = vsel %vm161, %v4058, %v4052
    %v4067 = vsel %vm161, %v4059, %v4053
    %v4068 = vsel %vm1451, %v4064, 0.0
    %v4069 = vsel %vm1451, %v4065, 0.0
    %v4070 = vsel %vm1452, %v4062, 0.0
    %v4071 = vsel %vm1452, %v4063, 0.0
    %v4072 = vsel %vm1453, %v4060, 0.0
    %v4073 = vsel %vm1453, %v4061, 0.0
    %v4074 = vsel %vm1454, %v4066, 0.0
    %v4075 = vsel %vm1454, %v4067, 0.0
    %v4076 = vpack.c.bf16 %v4070, %v4068
    %v4077 = vpack.c.bf16 %v4071, %v4069
    %v4078 = vpack.c.bf16 %v4074, %v4072
    %v4079 = vpack.c.bf16 %v4075, %v4073
    %v4080 = vpack.c.bf16 %v4018, %v4016
    %v4081 = vpack.c.bf16 %v4019, %v4017
    %v4082 = vpack.c.bf16 %v4022, %v4020
    %v4083 = vpack.c.bf16 %v4023, %v4021
    %s4084 = scalar_lea.vmem [#allocation4], 1536
    %v4085 = vld [vmem:[%s4084] sm:$0xff]
    %v4086 = vld [vmem:[%s4084 + $0x8] sm:$0xff]
    %v4087 = vld [vmem:[%s4084 + $0x10] sm:$0xff]
    %v4088 = vld [vmem:[%s4084 + $0x18] sm:$0xff]
    %v4089 = vld [vmem:[%s4084 + $0x20] sm:$0xff]
    %v4090 = vld [vmem:[%s4084 + $0x28] sm:$0xff]
    %v4091 = vld [vmem:[%s4084 + $0x30] sm:$0xff]
    %v4092 = vld [vmem:[%s4084 + $0x38] sm:$0xff]
    %v4093 = vld [vmem:[%s4084 + $0x40] sm:$0xff]
    %v4094 = vld [vmem:[%s4084 + $0x48] sm:$0xff]
    %v4095 = vld [vmem:[%s4084 + $0x50] sm:$0xff]
    %v4096 = vld [vmem:[%s4084 + $0x58] sm:$0xff]
    %v4097 = vld [vmem:[%s4084 + $0x60] sm:$0xff]
    %v4098 = vld [vmem:[%s4084 + $0x68] sm:$0xff]
    %v4099 = vld [vmem:[%s4084 + $0x70] sm:$0xff]
    %v4100 = vld [vmem:[%s4084 + $0x78] sm:$0xff]
    %v4101 = vld [vmem:[%s4084 + $0x80] sm:$0xff]
    %v4102 = vld [vmem:[%s4084 + $0x88] sm:$0xff]
    %v4103 = vld [vmem:[%s4084 + $0x90] sm:$0xff]
    %v4104 = vld [vmem:[%s4084 + $0x98] sm:$0xff]
    %v4105 = vld [vmem:[%s4084 + $0xa0] sm:$0xff]
    %v4106 = vld [vmem:[%s4084 + $0xa8] sm:$0xff]
    %v4107 = vld [vmem:[%s4084 + $0xb0] sm:$0xff]
    %v4108 = vld [vmem:[%s4084 + $0xb8] sm:$0xff]
    %v4109 = vld [vmem:[%s4084 + $0xc0] sm:$0xff]
    %v4110 = vld [vmem:[%s4084 + $0xc8] sm:$0xff]
    %v4111 = vld [vmem:[%s4084 + $0xd0] sm:$0xff]
    %v4112 = vld [vmem:[%s4084 + $0xd8] sm:$0xff]
    %v4113 = vld [vmem:[%s4084 + $0xe0] sm:$0xff]
    %v4114 = vld [vmem:[%s4084 + $0xe8] sm:$0xff]
    %v4115 = vld [vmem:[%s4084 + $0xf0] sm:$0xff]
    %v4116 = vld [vmem:[%s4084 + $0xf8] sm:$0xff]
    %s4117 = scalar_lea.vmem [#allocation4], 1792
    %v4118 = vld [vmem:[%s4117] sm:$0xff]
    %v4119 = vld [vmem:[%s4117 + $0x8] sm:$0xff]
    %v4120 = vld [vmem:[%s4117 + $0x10] sm:$0xff]
    %v4121 = vld [vmem:[%s4117 + $0x18] sm:$0xff]
    %v4122 = vld [vmem:[%s4117 + $0x20] sm:$0xff]
    %v4123 = vld [vmem:[%s4117 + $0x28] sm:$0xff]
    %v4124 = vld [vmem:[%s4117 + $0x30] sm:$0xff]
    %v4125 = vld [vmem:[%s4117 + $0x38] sm:$0xff]
    %v4126 = vld [vmem:[%s4117 + $0x40] sm:$0xff]
    %v4127 = vld [vmem:[%s4117 + $0x48] sm:$0xff]
    %v4128 = vld [vmem:[%s4117 + $0x50] sm:$0xff]
    %v4129 = vld [vmem:[%s4117 + $0x58] sm:$0xff]
    %v4130 = vld [vmem:[%s4117 + $0x60] sm:$0xff]
    %v4131 = vld [vmem:[%s4117 + $0x68] sm:$0xff]
    %v4132 = vld [vmem:[%s4117 + $0x70] sm:$0xff]
    %v4133 = vld [vmem:[%s4117 + $0x78] sm:$0xff]
    %v4134 = vld [vmem:[%s4117 + $0x80] sm:$0xff]
    %v4135 = vld [vmem:[%s4117 + $0x88] sm:$0xff]
    %v4136 = vld [vmem:[%s4117 + $0x90] sm:$0xff]
    %v4137 = vld [vmem:[%s4117 + $0x98] sm:$0xff]
    %v4138 = vld [vmem:[%s4117 + $0xa0] sm:$0xff]
    %v4139 = vld [vmem:[%s4117 + $0xa8] sm:$0xff]
    %v4140 = vld [vmem:[%s4117 + $0xb0] sm:$0xff]
    %v4141 = vld [vmem:[%s4117 + $0xb8] sm:$0xff]
    %v4142 = vld [vmem:[%s4117 + $0xc0] sm:$0xff]
    %v4143 = vld [vmem:[%s4117 + $0xc8] sm:$0xff]
    %v4144 = vld [vmem:[%s4117 + $0xd0] sm:$0xff]
    %v4145 = vld [vmem:[%s4117 + $0xd8] sm:$0xff]
    %v4146 = vld [vmem:[%s4117 + $0xe0] sm:$0xff]
    %v4147 = vld [vmem:[%s4117 + $0xe8] sm:$0xff]
    %v4148 = vld [vmem:[%s4117 + $0xf0] sm:$0xff]
    %v4149 = vld [vmem:[%s4117 + $0xf8] sm:$0xff]
    %v4182 = vunpack.c.l.b16 %v4118
    %v4183 = vunpack.c.h.b16 %v4118
    %v4184 = vunpack.c.l.b16 %v4119
    %v4185 = vunpack.c.h.b16 %v4119
    %v4186 = vunpack.c.l.b16 %v4120
    %v4187 = vunpack.c.h.b16 %v4120
    %v4188 = vunpack.c.l.b16 %v4121
    %v4189 = vunpack.c.h.b16 %v4121
    %v4190 = vunpack.c.l.b16 %v4122
    %v4191 = vunpack.c.h.b16 %v4122
    %v4192 = vunpack.c.l.b16 %v4123
    %v4193 = vunpack.c.h.b16 %v4123
    %v4194 = vunpack.c.l.b16 %v4124
    %v4195 = vunpack.c.h.b16 %v4124
    %v4196 = vunpack.c.l.b16 %v4125
    %v4197 = vunpack.c.h.b16 %v4125
    %v4198 = vunpack.c.l.b16 %v4126
    %v4199 = vunpack.c.h.b16 %v4126
    %v4200 = vunpack.c.l.b16 %v4127
    %v4201 = vunpack.c.h.b16 %v4127
    %v4202 = vunpack.c.l.b16 %v4128
    %v4203 = vunpack.c.h.b16 %v4128
    %v4204 = vunpack.c.l.b16 %v4129
    %v4205 = vunpack.c.h.b16 %v4129
    %v4206 = vunpack.c.l.b16 %v4130
    %v4207 = vunpack.c.h.b16 %v4130
    %v4208 = vunpack.c.l.b16 %v4131
    %v4209 = vunpack.c.h.b16 %v4131
    %v4210 = vunpack.c.l.b16 %v4132
    %v4211 = vunpack.c.h.b16 %v4132
    %v4212 = vunpack.c.l.b16 %v4133
    %v4213 = vunpack.c.h.b16 %v4133
    %v4214 = vunpack.c.l.b16 %v4134
    %v4215 = vunpack.c.h.b16 %v4134
    %v4216 = vunpack.c.l.b16 %v4135
    %v4217 = vunpack.c.h.b16 %v4135
    %v4218 = vunpack.c.l.b16 %v4136
    %v4219 = vunpack.c.h.b16 %v4136
    %v4220 = vunpack.c.l.b16 %v4137
    %v4221 = vunpack.c.h.b16 %v4137
    %v4222 = vunpack.c.l.b16 %v4138
    %v4223 = vunpack.c.h.b16 %v4138
    %v4224 = vunpack.c.l.b16 %v4139
    %v4225 = vunpack.c.h.b16 %v4139
    %v4226 = vunpack.c.l.b16 %v4140
    %v4227 = vunpack.c.h.b16 %v4140
    %v4228 = vunpack.c.l.b16 %v4141
    %v4229 = vunpack.c.h.b16 %v4141
    %v4230 = vunpack.c.l.b16 %v4142
    %v4231 = vunpack.c.h.b16 %v4142
    %v4232 = vunpack.c.l.b16 %v4143
    %v4233 = vunpack.c.h.b16 %v4143
    %v4234 = vunpack.c.l.b16 %v4144
    %v4235 = vunpack.c.h.b16 %v4144
    %v4236 = vunpack.c.l.b16 %v4145
    %v4237 = vunpack.c.h.b16 %v4145
    %v4238 = vunpack.c.l.b16 %v4146
    %v4239 = vunpack.c.h.b16 %v4146
    %v4240 = vunpack.c.l.b16 %v4147
    %v4241 = vunpack.c.h.b16 %v4147
    %v4242 = vunpack.c.l.b16 %v4148
    %v4243 = vunpack.c.h.b16 %v4148
    %v4244 = vunpack.c.l.b16 %v4149
    %v4245 = vunpack.c.h.b16 %v4149
    %v4246 = vpack.c.b16 %v4184, %v4182
    %v4247 = vpack.c.b16 %v4185, %v4183
    %v4248 = vpack.c.b16 %v4188, %v4186
    %v4249 = vpack.c.b16 %v4189, %v4187
    %v4250 = vpack.c.b16 %v4192, %v4190
    %v4251 = vpack.c.b16 %v4193, %v4191
    %v4252 = vpack.c.b16 %v4196, %v4194
    %v4253 = vpack.c.b16 %v4197, %v4195
    %v4254 = vpack.c.b16 %v4200, %v4198
    %v4255 = vpack.c.b16 %v4201, %v4199
    %v4256 = vpack.c.b16 %v4204, %v4202
    %v4257 = vpack.c.b16 %v4205, %v4203
    %v4258 = vpack.c.b16 %v4208, %v4206
    %v4259 = vpack.c.b16 %v4209, %v4207
    %v4260 = vpack.c.b16 %v4212, %v4210
    %v4261 = vpack.c.b16 %v4213, %v4211
    %v4262 = vpack.c.b16 %v4216, %v4214
    %v4263 = vpack.c.b16 %v4217, %v4215
    %v4264 = vpack.c.b16 %v4220, %v4218
    %v4265 = vpack.c.b16 %v4221, %v4219
    %v4266 = vpack.c.b16 %v4224, %v4222
    %v4267 = vpack.c.b16 %v4225, %v4223
    %v4268 = vpack.c.b16 %v4228, %v4226
    %v4269 = vpack.c.b16 %v4229, %v4227
    %v4270 = vpack.c.b16 %v4232, %v4230
    %v4271 = vpack.c.b16 %v4233, %v4231
    %v4272 = vpack.c.b16 %v4236, %v4234
    %v4273 = vpack.c.b16 %v4237, %v4235
    %v4274 = vpack.c.b16 %v4240, %v4238
    %v4275 = vpack.c.b16 %v4241, %v4239
    %v4276 = vpack.c.b16 %v4244, %v4242
    %v4277 = vpack.c.b16 %v4245, %v4243
    %4310 = vmatpush.bf16.msra.mxu0 %v4260
    %4311 = vmatpush.bf16.msra.mxu0 %v4258
    %4312 = vmatpush.bf16.msra.mxu0 %v4256
    %4313 = vmatpush.bf16.msra.mxu0 %v4254
    %4314 = vmatpush.bf16.msra.mxu0 %v4252
    %4315 = vmatpush.bf16.msra.mxu0 %v4250
    %4316 = vmatpush.bf16.msra.mxu0 %v4248
    %4317 = vmatpush.bf16.msra.mxu0 %v4246
    %4318 = vmatmul.bf16.gmra.mxu0 %v4080
    %v4319 = vpop.f32.mrf.mxu0
    %v4320 = vadd.f32 0.0, %v4319
    %v4321 = vpop.f32.mrf.mxu0
    %v4322 = vadd.f32 0.0, %v4321
    %4323 = vmatmul.bf16.gmra.mxu0 %v4082
    %v4324 = vpop.f32.mrf.mxu0
    %v4325 = vadd.f32 0.0, %v4324
    %v4326 = vpop.f32.mrf.mxu0
    %v4327 = vadd.f32 0.0, %v4326
    %4328 = vdwg.mxu0
    %4329 = vmatpush.bf16.msra.mxu0 %v4276
    %4330 = vmatpush.bf16.msra.mxu0 %v4274
    %4331 = vmatpush.bf16.msra.mxu0 %v4272
    %4332 = vmatpush.bf16.msra.mxu0 %v4270
    %4333 = vmatpush.bf16.msra.mxu0 %v4268
    %4334 = vmatpush.bf16.msra.mxu0 %v4266
    %4335 = vmatpush.bf16.msra.mxu0 %v4264
    %4336 = vmatpush.bf16.msra.mxu0 %v4262
    %4337 = vmatmul.bf16.gmra.mxu0 %v4081
    %v4338 = vpop.f32.mrf.mxu0
    %v4339 = vadd.f32 %v4320, %v4338
    %v4340 = vpop.f32.mrf.mxu0
    %v4341 = vadd.f32 %v4322, %v4340
    %4342 = vmatmul.bf16.gmra.mxu0 %v4083
    %v4343 = vpop.f32.mrf.mxu0
    %v4344 = vadd.f32 %v4325, %v4343
    %v4345 = vpop.f32.mrf.mxu0
    %v4346 = vadd.f32 %v4327, %v4345
    %4347 = vdwg.mxu0
    %4348 = vmatpush.bf16.msra.mxu0 %v4261
    %4349 = vmatpush.bf16.msra.mxu0 %v4259
    %4350 = vmatpush.bf16.msra.mxu0 %v4257
    %4351 = vmatpush.bf16.msra.mxu0 %v4255
    %4352 = vmatpush.bf16.msra.mxu0 %v4253
    %4353 = vmatpush.bf16.msra.mxu0 %v4251
    %4354 = vmatpush.bf16.msra.mxu0 %v4249
    %4355 = vmatpush.bf16.msra.mxu0 %v4247
    %4356 = vmatmul.bf16.gmra.mxu0 %v4080
    %v4357 = vpop.f32.mrf.mxu0
    %v4358 = vadd.f32 0.0, %v4357
    %v4359 = vpop.f32.mrf.mxu0
    %v4360 = vadd.f32 0.0, %v4359
    %4361 = vmatmul.bf16.gmra.mxu0 %v4082
    %v4362 = vpop.f32.mrf.mxu0
    %v4363 = vadd.f32 0.0, %v4362
    %v4364 = vpop.f32.mrf.mxu0
    %v4365 = vadd.f32 0.0, %v4364
    %4366 = vdwg.mxu0
    %4367 = vmatpush.bf16.msra.mxu0 %v4277
    %4368 = vmatpush.bf16.msra.mxu0 %v4275
    %4369 = vmatpush.bf16.msra.mxu0 %v4273
    %4370 = vmatpush.bf16.msra.mxu0 %v4271
    %4371 = vmatpush.bf16.msra.mxu0 %v4269
    %4372 = vmatpush.bf16.msra.mxu0 %v4267
    %4373 = vmatpush.bf16.msra.mxu0 %v4265
    %4374 = vmatpush.bf16.msra.mxu0 %v4263
    %4375 = vmatmul.bf16.gmra.mxu0 %v4081
    %v4376 = vpop.f32.mrf.mxu0
    %v4377 = vadd.f32 %v4358, %v4376
    %v4378 = vpop.f32.mrf.mxu0
    %v4379 = vadd.f32 %v4360, %v4378
    %4380 = vmatmul.bf16.gmra.mxu0 %v4083
    %v4381 = vpop.f32.mrf.mxu0
    %v4382 = vadd.f32 %v4363, %v4381
    %v4383 = vpop.f32.mrf.mxu0
    %v4384 = vadd.f32 %v4365, %v4383
    %4385 = vdwg.mxu0
    %v4418 = vunpack.c.l.b16 %v4085
    %v4419 = vunpack.c.h.b16 %v4085
    %v4420 = vunpack.c.l.b16 %v4086
    %v4421 = vunpack.c.h.b16 %v4086
    %v4422 = vunpack.c.l.b16 %v4087
    %v4423 = vunpack.c.h.b16 %v4087
    %v4424 = vunpack.c.l.b16 %v4088
    %v4425 = vunpack.c.h.b16 %v4088
    %v4426 = vunpack.c.l.b16 %v4089
    %v4427 = vunpack.c.h.b16 %v4089
    %v4428 = vunpack.c.l.b16 %v4090
    %v4429 = vunpack.c.h.b16 %v4090
    %v4430 = vunpack.c.l.b16 %v4091
    %v4431 = vunpack.c.h.b16 %v4091
    %v4432 = vunpack.c.l.b16 %v4092
    %v4433 = vunpack.c.h.b16 %v4092
    %v4434 = vunpack.c.l.b16 %v4093
    %v4435 = vunpack.c.h.b16 %v4093
    %v4436 = vunpack.c.l.b16 %v4094
    %v4437 = vunpack.c.h.b16 %v4094
    %v4438 = vunpack.c.l.b16 %v4095
    %v4439 = vunpack.c.h.b16 %v4095
    %v4440 = vunpack.c.l.b16 %v4096
    %v4441 = vunpack.c.h.b16 %v4096
    %v4442 = vunpack.c.l.b16 %v4097
    %v4443 = vunpack.c.h.b16 %v4097
    %v4444 = vunpack.c.l.b16 %v4098
    %v4445 = vunpack.c.h.b16 %v4098
    %v4446 = vunpack.c.l.b16 %v4099
    %v4447 = vunpack.c.h.b16 %v4099
    %v4448 = vunpack.c.l.b16 %v4100
    %v4449 = vunpack.c.h.b16 %v4100
    %v4450 = vunpack.c.l.b16 %v4101
    %v4451 = vunpack.c.h.b16 %v4101
    %v4452 = vunpack.c.l.b16 %v4102
    %v4453 = vunpack.c.h.b16 %v4102
    %v4454 = vunpack.c.l.b16 %v4103
    %v4455 = vunpack.c.h.b16 %v4103
    %v4456 = vunpack.c.l.b16 %v4104
    %v4457 = vunpack.c.h.b16 %v4104
    %v4458 = vunpack.c.l.b16 %v4105
    %v4459 = vunpack.c.h.b16 %v4105
    %v4460 = vunpack.c.l.b16 %v4106
    %v4461 = vunpack.c.h.b16 %v4106
    %v4462 = vunpack.c.l.b16 %v4107
    %v4463 = vunpack.c.h.b16 %v4107
    %v4464 = vunpack.c.l.b16 %v4108
    %v4465 = vunpack.c.h.b16 %v4108
    %v4466 = vunpack.c.l.b16 %v4109
    %v4467 = vunpack.c.h.b16 %v4109
    %v4468 = vunpack.c.l.b16 %v4110
    %v4469 = vunpack.c.h.b16 %v4110
    %v4470 = vunpack.c.l.b16 %v4111
    %v4471 = vunpack.c.h.b16 %v4111
    %v4472 = vunpack.c.l.b16 %v4112
    %v4473 = vunpack.c.h.b16 %v4112
    %v4474 = vunpack.c.l.b16 %v4113
    %v4475 = vunpack.c.h.b16 %v4113
    %v4476 = vunpack.c.l.b16 %v4114
    %v4477 = vunpack.c.h.b16 %v4114
    %v4478 = vunpack.c.l.b16 %v4115
    %v4479 = vunpack.c.h.b16 %v4115
    %v4480 = vunpack.c.l.b16 %v4116
    %v4481 = vunpack.c.h.b16 %v4116
    %v4482 = vpack.c.b16 %v4420, %v4418
    %v4483 = vpack.c.b16 %v4421, %v4419
    %v4484 = vpack.c.b16 %v4424, %v4422
    %v4485 = vpack.c.b16 %v4425, %v4423
    %v4486 = vpack.c.b16 %v4428, %v4426
    %v4487 = vpack.c.b16 %v4429, %v4427
    %v4488 = vpack.c.b16 %v4432, %v4430
    %v4489 = vpack.c.b16 %v4433, %v4431
    %v4490 = vpack.c.b16 %v4436, %v4434
    %v4491 = vpack.c.b16 %v4437, %v4435
    %v4492 = vpack.c.b16 %v4440, %v4438
    %v4493 = vpack.c.b16 %v4441, %v4439
    %v4494 = vpack.c.b16 %v4444, %v4442
    %v4495 = vpack.c.b16 %v4445, %v4443
    %v4496 = vpack.c.b16 %v4448, %v4446
    %v4497 = vpack.c.b16 %v4449, %v4447
    %v4498 = vpack.c.b16 %v4452, %v4450
    %v4499 = vpack.c.b16 %v4453, %v4451
    %v4500 = vpack.c.b16 %v4456, %v4454
    %v4501 = vpack.c.b16 %v4457, %v4455
    %v4502 = vpack.c.b16 %v4460, %v4458
    %v4503 = vpack.c.b16 %v4461, %v4459
    %v4504 = vpack.c.b16 %v4464, %v4462
    %v4505 = vpack.c.b16 %v4465, %v4463
    %v4506 = vpack.c.b16 %v4468, %v4466
    %v4507 = vpack.c.b16 %v4469, %v4467
    %v4508 = vpack.c.b16 %v4472, %v4470
    %v4509 = vpack.c.b16 %v4473, %v4471
    %v4510 = vpack.c.b16 %v4476, %v4474
    %v4511 = vpack.c.b16 %v4477, %v4475
    %v4512 = vpack.c.b16 %v4480, %v4478
    %v4513 = vpack.c.b16 %v4481, %v4479
    %4546 = vmatpush.bf16.msra.mxu0 %v4496
    %4547 = vmatpush.bf16.msra.mxu0 %v4494
    %4548 = vmatpush.bf16.msra.mxu0 %v4492
    %4549 = vmatpush.bf16.msra.mxu0 %v4490
    %4550 = vmatpush.bf16.msra.mxu0 %v4488
    %4551 = vmatpush.bf16.msra.mxu0 %v4486
    %4552 = vmatpush.bf16.msra.mxu0 %v4484
    %4553 = vmatpush.bf16.msra.mxu0 %v4482
    %4554 = vmatmul.bf16.gmra.mxu0 %v4048
    %v4555 = vpop.f32.mrf.mxu0
    %v4556 = vadd.f32 %v4339, %v4555
    %v4557 = vpop.f32.mrf.mxu0
    %v4558 = vadd.f32 %v4341, %v4557
    %4559 = vmatmul.bf16.gmra.mxu0 %v4050
    %v4560 = vpop.f32.mrf.mxu0
    %v4561 = vadd.f32 %v4344, %v4560
    %v4562 = vpop.f32.mrf.mxu0
    %v4563 = vadd.f32 %v4346, %v4562
    %4564 = vdwg.mxu0
    %4565 = vmatpush.bf16.msra.mxu0 %v4512
    %4566 = vmatpush.bf16.msra.mxu0 %v4510
    %4567 = vmatpush.bf16.msra.mxu0 %v4508
    %4568 = vmatpush.bf16.msra.mxu0 %v4506
    %4569 = vmatpush.bf16.msra.mxu0 %v4504
    %4570 = vmatpush.bf16.msra.mxu0 %v4502
    %4571 = vmatpush.bf16.msra.mxu0 %v4500
    %4572 = vmatpush.bf16.msra.mxu0 %v4498
    %4573 = vmatmul.bf16.gmra.mxu0 %v4049
    %v4574 = vpop.f32.mrf.mxu0
    %v4575 = vadd.f32 %v4556, %v4574
    %v4576 = vpop.f32.mrf.mxu0
    %v4577 = vadd.f32 %v4558, %v4576
    %4578 = vmatmul.bf16.gmra.mxu0 %v4051
    %v4579 = vpop.f32.mrf.mxu0
    %v4580 = vadd.f32 %v4561, %v4579
    %v4581 = vpop.f32.mrf.mxu0
    %v4582 = vadd.f32 %v4563, %v4581
    %4583 = vdwg.mxu0
    %4584 = vmatpush.bf16.msra.mxu0 %v4497
    %4585 = vmatpush.bf16.msra.mxu0 %v4495
    %4586 = vmatpush.bf16.msra.mxu0 %v4493
    %4587 = vmatpush.bf16.msra.mxu0 %v4491
    %4588 = vmatpush.bf16.msra.mxu0 %v4489
    %4589 = vmatpush.bf16.msra.mxu0 %v4487
    %4590 = vmatpush.bf16.msra.mxu0 %v4485
    %4591 = vmatpush.bf16.msra.mxu0 %v4483
    %4592 = vmatmul.bf16.gmra.mxu0 %v4048
    %v4593 = vpop.f32.mrf.mxu0
    %v4594 = vadd.f32 %v4377, %v4593
    %v4595 = vpop.f32.mrf.mxu0
    %v4596 = vadd.f32 %v4379, %v4595
    %4597 = vmatmul.bf16.gmra.mxu0 %v4050
    %v4598 = vpop.f32.mrf.mxu0
    %v4599 = vadd.f32 %v4382, %v4598
    %v4600 = vpop.f32.mrf.mxu0
    %v4601 = vadd.f32 %v4384, %v4600
    %4602 = vdwg.mxu0
    %4603 = vmatpush.bf16.msra.mxu0 %v4513
    %4604 = vmatpush.bf16.msra.mxu0 %v4511
    %4605 = vmatpush.bf16.msra.mxu0 %v4509
    %4606 = vmatpush.bf16.msra.mxu0 %v4507
    %4607 = vmatpush.bf16.msra.mxu0 %v4505
    %4608 = vmatpush.bf16.msra.mxu0 %v4503
    %4609 = vmatpush.bf16.msra.mxu0 %v4501
    %4610 = vmatpush.bf16.msra.mxu0 %v4499
    %4611 = vmatmul.bf16.gmra.mxu0 %v4049
    %v4612 = vpop.f32.mrf.mxu0
    %v4613 = vadd.f32 %v4594, %v4612
    %v4614 = vpop.f32.mrf.mxu0
    %v4615 = vadd.f32 %v4596, %v4614
    %4616 = vmatmul.bf16.gmra.mxu0 %v4051
    %v4617 = vpop.f32.mrf.mxu0
    %v4618 = vadd.f32 %v4599, %v4617
    %v4619 = vpop.f32.mrf.mxu0
    %v4620 = vadd.f32 %v4601, %v4619
    %4621 = vdwg.mxu0
    %s4622 = scalar_lea.vmem [#allocation4], 2048
    %v4623 = vld [vmem:[%s4622] sm:$0xff]
    %v4624 = vld [vmem:[%s4622 + $0x8] sm:$0xff]
    %v4625 = vld [vmem:[%s4622 + $0x10] sm:$0xff]
    %v4626 = vld [vmem:[%s4622 + $0x18] sm:$0xff]
    %v4627 = vld [vmem:[%s4622 + $0x20] sm:$0xff]
    %v4628 = vld [vmem:[%s4622 + $0x28] sm:$0xff]
    %v4629 = vld [vmem:[%s4622 + $0x30] sm:$0xff]
    %v4630 = vld [vmem:[%s4622 + $0x38] sm:$0xff]
    %v4631 = vld [vmem:[%s4622 + $0x40] sm:$0xff]
    %v4632 = vld [vmem:[%s4622 + $0x48] sm:$0xff]
    %v4633 = vld [vmem:[%s4622 + $0x50] sm:$0xff]
    %v4634 = vld [vmem:[%s4622 + $0x58] sm:$0xff]
    %v4635 = vld [vmem:[%s4622 + $0x60] sm:$0xff]
    %v4636 = vld [vmem:[%s4622 + $0x68] sm:$0xff]
    %v4637 = vld [vmem:[%s4622 + $0x70] sm:$0xff]
    %v4638 = vld [vmem:[%s4622 + $0x78] sm:$0xff]
    %v4639 = vld [vmem:[%s4622 + $0x80] sm:$0xff]
    %v4640 = vld [vmem:[%s4622 + $0x88] sm:$0xff]
    %v4641 = vld [vmem:[%s4622 + $0x90] sm:$0xff]
    %v4642 = vld [vmem:[%s4622 + $0x98] sm:$0xff]
    %v4643 = vld [vmem:[%s4622 + $0xa0] sm:$0xff]
    %v4644 = vld [vmem:[%s4622 + $0xa8] sm:$0xff]
    %v4645 = vld [vmem:[%s4622 + $0xb0] sm:$0xff]
    %v4646 = vld [vmem:[%s4622 + $0xb8] sm:$0xff]
    %v4647 = vld [vmem:[%s4622 + $0xc0] sm:$0xff]
    %v4648 = vld [vmem:[%s4622 + $0xc8] sm:$0xff]
    %v4649 = vld [vmem:[%s4622 + $0xd0] sm:$0xff]
    %v4650 = vld [vmem:[%s4622 + $0xd8] sm:$0xff]
    %v4651 = vld [vmem:[%s4622 + $0xe0] sm:$0xff]
    %v4652 = vld [vmem:[%s4622 + $0xe8] sm:$0xff]
    %v4653 = vld [vmem:[%s4622 + $0xf0] sm:$0xff]
    %v4654 = vld [vmem:[%s4622 + $0xf8] sm:$0xff]
    %v4687 = vunpack.c.l.b16 %v4623
    %v4688 = vunpack.c.h.b16 %v4623
    %v4689 = vunpack.c.l.b16 %v4624
    %v4690 = vunpack.c.h.b16 %v4624
    %v4691 = vunpack.c.l.b16 %v4625
    %v4692 = vunpack.c.h.b16 %v4625
    %v4693 = vunpack.c.l.b16 %v4626
    %v4694 = vunpack.c.h.b16 %v4626
    %v4695 = vunpack.c.l.b16 %v4627
    %v4696 = vunpack.c.h.b16 %v4627
    %v4697 = vunpack.c.l.b16 %v4628
    %v4698 = vunpack.c.h.b16 %v4628
    %v4699 = vunpack.c.l.b16 %v4629
    %v4700 = vunpack.c.h.b16 %v4629
    %v4701 = vunpack.c.l.b16 %v4630
    %v4702 = vunpack.c.h.b16 %v4630
    %v4703 = vunpack.c.l.b16 %v4631
    %v4704 = vunpack.c.h.b16 %v4631
    %v4705 = vunpack.c.l.b16 %v4632
    %v4706 = vunpack.c.h.b16 %v4632
    %v4707 = vunpack.c.l.b16 %v4633
    %v4708 = vunpack.c.h.b16 %v4633
    %v4709 = vunpack.c.l.b16 %v4634
    %v4710 = vunpack.c.h.b16 %v4634
    %v4711 = vunpack.c.l.b16 %v4635
    %v4712 = vunpack.c.h.b16 %v4635
    %v4713 = vunpack.c.l.b16 %v4636
    %v4714 = vunpack.c.h.b16 %v4636
    %v4715 = vunpack.c.l.b16 %v4637
    %v4716 = vunpack.c.h.b16 %v4637
    %v4717 = vunpack.c.l.b16 %v4638
    %v4718 = vunpack.c.h.b16 %v4638
    %v4719 = vunpack.c.l.b16 %v4639
    %v4720 = vunpack.c.h.b16 %v4639
    %v4721 = vunpack.c.l.b16 %v4640
    %v4722 = vunpack.c.h.b16 %v4640
    %v4723 = vunpack.c.l.b16 %v4641
    %v4724 = vunpack.c.h.b16 %v4641
    %v4725 = vunpack.c.l.b16 %v4642
    %v4726 = vunpack.c.h.b16 %v4642
    %v4727 = vunpack.c.l.b16 %v4643
    %v4728 = vunpack.c.h.b16 %v4643
    %v4729 = vunpack.c.l.b16 %v4644
    %v4730 = vunpack.c.h.b16 %v4644
    %v4731 = vunpack.c.l.b16 %v4645
    %v4732 = vunpack.c.h.b16 %v4645
    %v4733 = vunpack.c.l.b16 %v4646
    %v4734 = vunpack.c.h.b16 %v4646
    %v4735 = vunpack.c.l.b16 %v4647
    %v4736 = vunpack.c.h.b16 %v4647
    %v4737 = vunpack.c.l.b16 %v4648
    %v4738 = vunpack.c.h.b16 %v4648
    %v4739 = vunpack.c.l.b16 %v4649
    %v4740 = vunpack.c.h.b16 %v4649
    %v4741 = vunpack.c.l.b16 %v4650
    %v4742 = vunpack.c.h.b16 %v4650
    %v4743 = vunpack.c.l.b16 %v4651
    %v4744 = vunpack.c.h.b16 %v4651
    %v4745 = vunpack.c.l.b16 %v4652
    %v4746 = vunpack.c.h.b16 %v4652
    %v4747 = vunpack.c.l.b16 %v4653
    %v4748 = vunpack.c.h.b16 %v4653
    %v4749 = vunpack.c.l.b16 %v4654
    %v4750 = vunpack.c.h.b16 %v4654
    %v4751 = vpack.c.b16 %v4689, %v4687
    %v4752 = vpack.c.b16 %v4690, %v4688
    %v4753 = vpack.c.b16 %v4693, %v4691
    %v4754 = vpack.c.b16 %v4694, %v4692
    %v4755 = vpack.c.b16 %v4697, %v4695
    %v4756 = vpack.c.b16 %v4698, %v4696
    %v4757 = vpack.c.b16 %v4701, %v4699
    %v4758 = vpack.c.b16 %v4702, %v4700
    %v4759 = vpack.c.b16 %v4705, %v4703
    %v4760 = vpack.c.b16 %v4706, %v4704
    %v4761 = vpack.c.b16 %v4709, %v4707
    %v4762 = vpack.c.b16 %v4710, %v4708
    %v4763 = vpack.c.b16 %v4713, %v4711
    %v4764 = vpack.c.b16 %v4714, %v4712
    %v4765 = vpack.c.b16 %v4717, %v4715
    %v4766 = vpack.c.b16 %v4718, %v4716
    %v4767 = vpack.c.b16 %v4721, %v4719
    %v4768 = vpack.c.b16 %v4722, %v4720
    %v4769 = vpack.c.b16 %v4725, %v4723
    %v4770 = vpack.c.b16 %v4726, %v4724
    %v4771 = vpack.c.b16 %v4729, %v4727
    %v4772 = vpack.c.b16 %v4730, %v4728
    %v4773 = vpack.c.b16 %v4733, %v4731
    %v4774 = vpack.c.b16 %v4734, %v4732
    %v4775 = vpack.c.b16 %v4737, %v4735
    %v4776 = vpack.c.b16 %v4738, %v4736
    %v4777 = vpack.c.b16 %v4741, %v4739
    %v4778 = vpack.c.b16 %v4742, %v4740
    %v4779 = vpack.c.b16 %v4745, %v4743
    %v4780 = vpack.c.b16 %v4746, %v4744
    %v4781 = vpack.c.b16 %v4749, %v4747
    %v4782 = vpack.c.b16 %v4750, %v4748
    %4815 = vmatpush.bf16.msra.mxu0 %v4765
    %4816 = vmatpush.bf16.msra.mxu0 %v4763
    %4817 = vmatpush.bf16.msra.mxu0 %v4761
    %4818 = vmatpush.bf16.msra.mxu0 %v4759
    %4819 = vmatpush.bf16.msra.mxu0 %v4757
    %4820 = vmatpush.bf16.msra.mxu0 %v4755
    %4821 = vmatpush.bf16.msra.mxu0 %v4753
    %4822 = vmatpush.bf16.msra.mxu0 %v4751
    %4823 = vmatmul.bf16.gmra.mxu0 %v4076
    %v4824 = vpop.f32.mrf.mxu0
    %v4825 = vadd.f32 0.0, %v4824
    %v4826 = vpop.f32.mrf.mxu0
    %v4827 = vadd.f32 0.0, %v4826
    %4828 = vmatmul.bf16.gmra.mxu0 %v4078
    %v4829 = vpop.f32.mrf.mxu0
    %v4830 = vadd.f32 0.0, %v4829
    %v4831 = vpop.f32.mrf.mxu0
    %v4832 = vadd.f32 0.0, %v4831
    %4833 = vdwg.mxu0
    %4834 = vmatpush.bf16.msra.mxu0 %v4781
    %4835 = vmatpush.bf16.msra.mxu0 %v4779
    %4836 = vmatpush.bf16.msra.mxu0 %v4777
    %4837 = vmatpush.bf16.msra.mxu0 %v4775
    %4838 = vmatpush.bf16.msra.mxu0 %v4773
    %4839 = vmatpush.bf16.msra.mxu0 %v4771
    %4840 = vmatpush.bf16.msra.mxu0 %v4769
    %4841 = vmatpush.bf16.msra.mxu0 %v4767
    %4842 = vmatmul.bf16.gmra.mxu0 %v4077
    %v4843 = vpop.f32.mrf.mxu0
    %v4844 = vadd.f32 %v4825, %v4843
    %v4845 = vpop.f32.mrf.mxu0
    %v4846 = vadd.f32 %v4827, %v4845
    %4847 = vmatmul.bf16.gmra.mxu0 %v4079
    %v4848 = vpop.f32.mrf.mxu0
    %v4849 = vadd.f32 %v4830, %v4848
    %v4850 = vpop.f32.mrf.mxu0
    %v4851 = vadd.f32 %v4832, %v4850
    %4852 = vdwg.mxu0
    %4853 = vmatpush.bf16.msra.mxu0 %v4766
    %4854 = vmatpush.bf16.msra.mxu0 %v4764
    %4855 = vmatpush.bf16.msra.mxu0 %v4762
    %4856 = vmatpush.bf16.msra.mxu0 %v4760
    %4857 = vmatpush.bf16.msra.mxu0 %v4758
    %4858 = vmatpush.bf16.msra.mxu0 %v4756
    %4859 = vmatpush.bf16.msra.mxu0 %v4754
    %4860 = vmatpush.bf16.msra.mxu0 %v4752
    %4861 = vmatmul.bf16.gmra.mxu0 %v4076
    %v4862 = vpop.f32.mrf.mxu0
    %v4863 = vadd.f32 0.0, %v4862
    %v4864 = vpop.f32.mrf.mxu0
    %v4865 = vadd.f32 0.0, %v4864
    %4866 = vmatmul.bf16.gmra.mxu0 %v4078
    %v4867 = vpop.f32.mrf.mxu0
    %v4868 = vadd.f32 0.0, %v4867
    %v4869 = vpop.f32.mrf.mxu0
    %v4870 = vadd.f32 0.0, %v4869
    %4871 = vdwg.mxu0
    %4872 = vmatpush.bf16.msra.mxu0 %v4782
    %4873 = vmatpush.bf16.msra.mxu0 %v4780
    %4874 = vmatpush.bf16.msra.mxu0 %v4778
    %4875 = vmatpush.bf16.msra.mxu0 %v4776
    %4876 = vmatpush.bf16.msra.mxu0 %v4774
    %4877 = vmatpush.bf16.msra.mxu0 %v4772
    %4878 = vmatpush.bf16.msra.mxu0 %v4770
    %4879 = vmatpush.bf16.msra.mxu0 %v4768
    %4880 = vmatmul.bf16.gmra.mxu0 %v4077
    %v4881 = vpop.f32.mrf.mxu0
    %v4882 = vadd.f32 %v4863, %v4881
    %v4883 = vpop.f32.mrf.mxu0
    %v4884 = vadd.f32 %v4865, %v4883
    %4885 = vmatmul.bf16.gmra.mxu0 %v4079
    %v4886 = vpop.f32.mrf.mxu0
    %v4887 = vadd.f32 %v4868, %v4886
    %v4888 = vpop.f32.mrf.mxu0
    %v4889 = vadd.f32 %v4870, %v4888
    %4890 = vdwg.mxu0
    %v4891 = vadd.f32 %v4575, %v4844
    %v4892 = vadd.f32 %v4613, %v4882
    %v4893 = vadd.f32 %v4577, %v4846
    %v4894 = vadd.f32 %v4615, %v4884
    %v4895 = vadd.f32 %v4580, %v4849
    %v4896 = vadd.f32 %v4618, %v4887
    %v4897 = vadd.f32 %v4582, %v4851
    %v4898 = vadd.f32 %v4620, %v4889
    %s4899 = scalar_lea.vmem [#allocation6], 3
    %v4900 = vld [vmem:[%s4899] ss:$4 sm:$0x3]
    %v4902 = vperm.slane %v4900, 0
    %v4903 = vperm.slane %v4900, 1
    %v4906 = vadd.f32 %v4891, %v4902
    %v4907 = vadd.f32 %v4892, %v4903
    %v4908 = vadd.f32 %v4893, %v4902
    %v4909 = vadd.f32 %v4894, %v4903
    %v4910 = vadd.f32 %v4895, %v4902
    %v4911 = vadd.f32 %v4896, %v4903
    %v4912 = vadd.f32 %v4897, %v4902
    %v4913 = vadd.f32 %v4898, %v4903
    %v4914 = vadd.f32 %v4906, %v4908
    %v4915 = vrot.slane %v4914, 4
    %v4916 = vadd.f32 %v4914, %v4915
    %v4917 = vrot.slane %v4916, 2
    %v4918 = vadd.f32 %v4916, %v4917
    %v4919 = vrot.slane %v4918, 1
    %v4920 = vadd.f32 %v4918, %v4919
    %v4921 = vadd.f32 %v4907, %v4909
    %v4922 = vrot.slane %v4921, 4
    %v4923 = vadd.f32 %v4921, %v4922
    %v4924 = vrot.slane %v4923, 2
    %v4925 = vadd.f32 %v4923, %v4924
    %v4926 = vrot.slane %v4925, 1
    %v4927 = vadd.f32 %v4925, %v4926
    %v4928 = vadd.f32 %v4910, %v4912
    %v4929 = vrot.slane %v4928, 4
    %v4930 = vadd.f32 %v4928, %v4929
    %v4931 = vrot.slane %v4930, 2
    %v4932 = vadd.f32 %v4930, %v4931
    %v4933 = vrot.slane %v4932, 1
    %v4934 = vadd.f32 %v4932, %v4933
    %v4935 = vadd.f32 %v4911, %v4913
    %v4936 = vrot.slane %v4935, 4
    %v4937 = vadd.f32 %v4935, %v4936
    %v4938 = vrot.slane %v4937, 2
    %v4939 = vadd.f32 %v4937, %v4938
    %v4940 = vrot.slane %v4939, 1
    %v4941 = vadd.f32 %v4939, %v4940
    %v4942 = vmul.f32 %v4906, %v4906
    %v4943 = vmul.f32 %v4907, %v4907
    %v4944 = vmul.f32 %v4908, %v4908
    %v4945 = vmul.f32 %v4909, %v4909
    %v4946 = vmul.f32 %v4910, %v4910
    %v4947 = vmul.f32 %v4911, %v4911
    %v4948 = vmul.f32 %v4912, %v4912
    %v4949 = vmul.f32 %v4913, %v4913
    %v4950 = vadd.f32 %v4942, %v4944
    %v4951 = vrot.slane %v4950, 4
    %v4952 = vadd.f32 %v4950, %v4951
    %v4953 = vrot.slane %v4952, 2
    %v4954 = vadd.f32 %v4952, %v4953
    %v4955 = vrot.slane %v4954, 1
    %v4956 = vadd.f32 %v4954, %v4955
    %v4957 = vadd.f32 %v4943, %v4945
    %v4958 = vrot.slane %v4957, 4
    %v4959 = vadd.f32 %v4957, %v4958
    %v4960 = vrot.slane %v4959, 2
    %v4961 = vadd.f32 %v4959, %v4960
    %v4962 = vrot.slane %v4961, 1
    %v4963 = vadd.f32 %v4961, %v4962
    %v4964 = vadd.f32 %v4946, %v4948
    %v4965 = vrot.slane %v4964, 4
    %v4966 = vadd.f32 %v4964, %v4965
    %v4967 = vrot.slane %v4966, 2
    %v4968 = vadd.f32 %v4966, %v4967
    %v4969 = vrot.slane %v4968, 1
    %v4970 = vadd.f32 %v4968, %v4969
    %v4971 = vadd.f32 %v4947, %v4949
    %v4972 = vrot.slane %v4971, 4
    %v4973 = vadd.f32 %v4971, %v4972
    %v4974 = vrot.slane %v4973, 2
    %v4975 = vadd.f32 %v4973, %v4974
    %v4976 = vrot.slane %v4975, 1
    %v4977 = vadd.f32 %v4975, %v4976
    %v4982 = vsel %vm924, %v4934, %v4920
    %v4983 = vsel %vm924, %v4941, %v4927
    %v4990 = vsel %vm933, %v4970, %v4956
    %v4991 = vsel %vm933, %v4977, %v4963
    %v4994 = vsel %vm938, %v4982, %v4990
    %v4995 = vsel %vm938, %v4983, %v4991
    %4996 = vmatpush.msra.mxu0 %v971
    %4997 = vmatpush.msra.mxu0 %v969
    %4998 = vmatpush.msra.mxu0 %v967
    %4999 = vmatpush.msra.mxu0 %v965
    %5000 = vmatpush.msra.mxu0 %v963
    %5001 = vmatpush.msra.mxu0 %v961
    %5002 = vmatpush.msra.mxu0 %v959
    %5003 = vmatpush.msra.mxu0 %v957
    %5004 = vmatpush.msra.mxu0 %v955
    %5005 = vmatpush.msra.mxu0 %v953
    %5006 = vmatpush.msra.mxu0 %v951
    %5007 = vmatpush.msra.mxu0 %v949
    %5008 = vmatpush.msra.mxu0 %v947
    %5009 = vmatpush.msra.mxu0 %v945
    %5010 = vmatpush.msra.mxu0 %v943
    %5011 = vmatpush.msra.mxu0 %v941
    %5012 = vmatmul.f32.gmra.mxu0 %v4994
    %v5013 = vpop.f32.mrf.mxu0
    %v5014 = vadd.f32 0.0, %v5013
    %5015 = vdwg.mxu0
    %5016 = vmatpush.msra.mxu0 %v1003
    %5017 = vmatpush.msra.mxu0 %v1001
    %5018 = vmatpush.msra.mxu0 %v999
    %5019 = vmatpush.msra.mxu0 %v997
    %5020 = vmatpush.msra.mxu0 %v995
    %5021 = vmatpush.msra.mxu0 %v993
    %5022 = vmatpush.msra.mxu0 %v991
    %5023 = vmatpush.msra.mxu0 %v989
    %5024 = vmatpush.msra.mxu0 %v987
    %5025 = vmatpush.msra.mxu0 %v985
    %5026 = vmatpush.msra.mxu0 %v983
    %5027 = vmatpush.msra.mxu0 %v981
    %5028 = vmatpush.msra.mxu0 %v979
    %5029 = vmatpush.msra.mxu0 %v977
    %5030 = vmatpush.msra.mxu0 %v975
    %5031 = vmatpush.msra.mxu0 %v973
    %5032 = vmatmul.f32.gmra.mxu0 %v4995
    %v5033 = vpop.f32.mrf.mxu0
    %v5034 = vadd.f32 %v5014, %v5033
    %5035 = vdwg.mxu0
    %5036 = vmatpush.msra.mxu0 %v972
    %5037 = vmatpush.msra.mxu0 %v970
    %5038 = vmatpush.msra.mxu0 %v968
    %5039 = vmatpush.msra.mxu0 %v966
    %5040 = vmatpush.msra.mxu0 %v964
    %5041 = vmatpush.msra.mxu0 %v962
    %5042 = vmatpush.msra.mxu0 %v960
    %5043 = vmatpush.msra.mxu0 %v958
    %5044 = vmatpush.msra.mxu0 %v956
    %5045 = vmatpush.msra.mxu0 %v954
    %5046 = vmatpush.msra.mxu0 %v952
    %5047 = vmatpush.msra.mxu0 %v950
    %5048 = vmatpush.msra.mxu0 %v948
    %5049 = vmatpush.msra.mxu0 %v946
    %5050 = vmatpush.msra.mxu0 %v944
    %5051 = vmatpush.msra.mxu0 %v942
    %5052 = vmatmul.f32.gmra.mxu0 %v4994
    %v5053 = vpop.f32.mrf.mxu0
    %v5054 = vadd.f32 0.0, %v5053
    %5055 = vdwg.mxu0
    %5056 = vmatpush.msra.mxu0 %v1004
    %5057 = vmatpush.msra.mxu0 %v1002
    %5058 = vmatpush.msra.mxu0 %v1000
    %5059 = vmatpush.msra.mxu0 %v998
    %5060 = vmatpush.msra.mxu0 %v996
    %5061 = vmatpush.msra.mxu0 %v994
    %5062 = vmatpush.msra.mxu0 %v992
    %5063 = vmatpush.msra.mxu0 %v990
    %5064 = vmatpush.msra.mxu0 %v988
    %5065 = vmatpush.msra.mxu0 %v986
    %5066 = vmatpush.msra.mxu0 %v984
    %5067 = vmatpush.msra.mxu0 %v982
    %5068 = vmatpush.msra.mxu0 %v980
    %5069 = vmatpush.msra.mxu0 %v978
    %5070 = vmatpush.msra.mxu0 %v976
    %5071 = vmatpush.msra.mxu0 %v974
    %5072 = vmatmul.f32.gmra.mxu0 %v4995
    %v5073 = vpop.f32.mrf.mxu0
    %v5074 = vadd.f32 %v5054, %v5073
    %5075 = vdwg.mxu0
    %v5078 = vrot.slane %v5074, 7
    %v5079 = vsel %vm1088, %v5034, %v5078
    %v5080 = vsel %vm924, %v5034, %v5078
    %v5081 = vrot.slane %v5080, 1
    %5084 = vst [vmem:[#allocation1] sm:$0xff] %v5034
    %5085 = vst [vmem:[#allocation1 + $0x9] sm:$0xff] %v5074
    %s5086 = scalar_lea.vmem [#allocation1], 2
    %v5087 = vld [vmem:[%s5086] ss:$9 sm:$0xff]
    %s5088 = scalar_lea.vmem [#allocation1], 3
    %v5089 = vld [vmem:[%s5088] ss:$9 sm:$0xff]
    %v5092 = vmul.f32 %v5079, %v5079
    %v5093 = vmul.f32 %v5081, %v5081
    %v5094 = vsub.f32 %v5087, %v5092
    %v5095 = vsub.f32 %v5089, %v5093
    %v5096 = vadd.f32 %v5094, 1e-05
    %v5097 = vadd.f32 %v5095, 1e-05
    %v5098 = vrsqrt.pop %v5096
    %v5099 = vmul.f32 %v5098, %v5096
    %v5100 = vmul.f32 %v5099, %v5098
    %v5101 = vmul.f32 0.5, %v5100
    %v5102 = vsub.f32 1.5, %v5101
    %v5103 = vmul.f32 %v5098, %v5102
    %vm5104 = vweird.f32 %v5096
    %vm5105 = vweird.f32 %v5098
    %vm5106 = vmor %vm5104, %vm5105
    %v5107 = vsel %vm5106, %v5098, %v5103
    %v5108 = vrsqrt.pop %v5097
    %v5109 = vmul.f32 %v5108, %v5097
    %v5110 = vmul.f32 %v5109, %v5108
    %v5111 = vmul.f32 0.5, %v5110
    %v5112 = vsub.f32 1.5, %v5111
    %v5113 = vmul.f32 %v5108, %v5112
    %vm5114 = vweird.f32 %v5097
    %vm5115 = vweird.f32 %v5108
    %vm5116 = vmor %vm5114, %vm5115
    %v5117 = vsel %vm5116, %v5108, %v5113
    %v5118 = vperm.slane %v5079, 0
    %v5119 = vperm.slane %v5079, 1
    %v5120 = vperm.slane %v5081, 0
    %v5121 = vperm.slane %v5081, 1
    %v5126 = vsub.f32 %v4906, %v5118
    %v5127 = vsub.f32 %v4907, %v5119
    %v5128 = vsub.f32 %v4908, %v5118
    %v5129 = vsub.f32 %v4909, %v5119
    %v5130 = vsub.f32 %v4910, %v5120
    %v5131 = vsub.f32 %v4911, %v5121
    %v5132 = vsub.f32 %v4912, %v5120
    %v5133 = vsub.f32 %v4913, %v5121
    %s5134 = scalar_lea.vmem [#allocation7], 3
    %v5135 = vld [vmem:[%s5134] ss:$4 sm:$0x3]
    %v5136 = vmul.f32 %v5107, %v5135
    %v5137 = vmul.f32 %v5117, %v5135
    %v5140 = vperm.slane %v5136, 0
    %v5141 = vperm.slane %v5136, 1
    %v5142 = vperm.slane %v5137, 0
    %v5143 = vperm.slane %v5137, 1
    %v5148 = vmul.f32 %v5126, %v5140
    %v5149 = vmul.f32 %v5127, %v5141
    %v5150 = vmul.f32 %v5128, %v5140
    %v5151 = vmul.f32 %v5129, %v5141
    %v5152 = vmul.f32 %v5130, %v5142
    %v5153 = vmul.f32 %v5131, %v5143
    %v5154 = vmul.f32 %v5132, %v5142
    %v5155 = vmul.f32 %v5133, %v5143
    %s5156 = scalar_lea.vmem [#allocation9], 3
    %v5157 = vld [vmem:[%s5156] ss:$4 sm:$0x3]
    %v5159 = vperm.slane %v5157, 0
    %v5160 = vperm.slane %v5157, 1
    %v5163 = vadd.f32 %v5148, %v5159
    %v5164 = vadd.f32 %v5149, %v5160
    %v5165 = vadd.f32 %v5150, %v5159
    %v5166 = vadd.f32 %v5151, %v5160
    %v5167 = vadd.f32 %v5152, %v5159
    %v5168 = vadd.f32 %v5153, %v5160
    %v5169 = vadd.f32 %v5154, %v5159
    %v5170 = vadd.f32 %v5155, %v5160
    %v5171 = vxor.u32 %v5163, 2147483648
    %v5172 = vxor.u32 %v5164, 2147483648
    %v5173 = vxor.u32 %v5165, 2147483648
    %v5174 = vxor.u32 %v5166, 2147483648
    %v5175 = vxor.u32 %v5167, 2147483648
    %v5176 = vxor.u32 %v5168, 2147483648
    %v5177 = vxor.u32 %v5169, 2147483648
    %v5178 = vxor.u32 %v5170, 2147483648
    %v5179 = vmul.f32 %v5171, 1.442695
    %v5180 = vpow.pop %v5179
    %v5181 = vmul.f32 %v5172, 1.442695
    %v5182 = vpow.pop %v5181
    %v5183 = vmul.f32 %v5173, 1.442695
    %v5184 = vpow.pop %v5183
    %v5185 = vmul.f32 %v5174, 1.442695
    %v5186 = vpow.pop %v5185
    %v5187 = vmul.f32 %v5175, 1.442695
    %v5188 = vpow.pop %v5187
    %v5189 = vmul.f32 %v5176, 1.442695
    %v5190 = vpow.pop %v5189
    %v5191 = vmul.f32 %v5177, 1.442695
    %v5192 = vpow.pop %v5191
    %v5193 = vmul.f32 %v5178, 1.442695
    %v5194 = vpow.pop %v5193
    %v5195 = vadd.f32 %v5180, 1.0
    %v5196 = vadd.f32 %v5182, 1.0
    %v5197 = vadd.f32 %v5184, 1.0
    %v5198 = vadd.f32 %v5186, 1.0
    %v5199 = vadd.f32 %v5188, 1.0
    %v5200 = vadd.f32 %v5190, 1.0
    %v5201 = vadd.f32 %v5192, 1.0
    %v5202 = vadd.f32 %v5194, 1.0
    %v5203 = vrcp.pop %v5195
    %v5204 = vmul.f32 %v5195, %v5203
    %v5205 = vsub.f32 1.0, %v5204
    %v5206 = vmul.f32 %v5203, %v5205
    %v5207 = vadd.f32 %v5203, %v5206
    %vm5208 = vweird.f32 %v5195
    %vm5209 = vweird.f32 %v5203
    %vm5210 = vmor %vm5208, %vm5209
    %v5211 = vsel %vm5210, %v5203, %v5207
    %v5212 = vand.u32 2147483647, %v5195
    %vm5213 = vcmp.eq.f32.partialorder %v5212, 8.507059e+37
    %v5214 = vand.u32 %v5195, 2147483648
    %v5215 = vor.u32 1.1754944e-38, %v5214
    %v5216 = vsel %vm5213, %v5215, %v5211
    %v5217 = vmul.f32 1.0, %v5216
    %v5218 = vrcp.pop %v5196
    %v5219 = vmul.f32 %v5196, %v5218
    %v5220 = vsub.f32 1.0, %v5219
    %v5221 = vmul.f32 %v5218, %v5220
    %v5222 = vadd.f32 %v5218, %v5221
    %vm5223 = vweird.f32 %v5196
    %vm5224 = vweird.f32 %v5218
    %vm5225 = vmor %vm5223, %vm5224
    %v5226 = vsel %vm5225, %v5218, %v5222
    %v5227 = vand.u32 2147483647, %v5196
    %vm5228 = vcmp.eq.f32.partialorder %v5227, 8.507059e+37
    %v5229 = vand.u32 %v5196, 2147483648
    %v5230 = vor.u32 1.1754944e-38, %v5229
    %v5231 = vsel %vm5228, %v5230, %v5226
    %v5232 = vmul.f32 1.0, %v5231
    %v5233 = vrcp.pop %v5197
    %v5234 = vmul.f32 %v5197, %v5233
    %v5235 = vsub.f32 1.0, %v5234
    %v5236 = vmul.f32 %v5233, %v5235
    %v5237 = vadd.f32 %v5233, %v5236
    %vm5238 = vweird.f32 %v5197
    %vm5239 = vweird.f32 %v5233
    %vm5240 = vmor %vm5238, %vm5239
    %v5241 = vsel %vm5240, %v5233, %v5237
    %v5242 = vand.u32 2147483647, %v5197
    %vm5243 = vcmp.eq.f32.partialorder %v5242, 8.507059e+37
    %v5244 = vand.u32 %v5197, 2147483648
    %v5245 = vor.u32 1.1754944e-38, %v5244
    %v5246 = vsel %vm5243, %v5245, %v5241
    %v5247 = vmul.f32 1.0, %v5246
    %v5248 = vrcp.pop %v5198
    %v5249 = vmul.f32 %v5198, %v5248
    %v5250 = vsub.f32 1.0, %v5249
    %v5251 = vmul.f32 %v5248, %v5250
    %v5252 = vadd.f32 %v5248, %v5251
    %vm5253 = vweird.f32 %v5198
    %vm5254 = vweird.f32 %v5248
    %vm5255 = vmor %vm5253, %vm5254
    %v5256 = vsel %vm5255, %v5248, %v5252
    %v5257 = vand.u32 2147483647, %v5198
    %vm5258 = vcmp.eq.f32.partialorder %v5257, 8.507059e+37
    %v5259 = vand.u32 %v5198, 2147483648
    %v5260 = vor.u32 1.1754944e-38, %v5259
    %v5261 = vsel %vm5258, %v5260, %v5256
    %v5262 = vmul.f32 1.0, %v5261
    %v5263 = vrcp.pop %v5199
    %v5264 = vmul.f32 %v5199, %v5263
    %v5265 = vsub.f32 1.0, %v5264
    %v5266 = vmul.f32 %v5263, %v5265
    %v5267 = vadd.f32 %v5263, %v5266
    %vm5268 = vweird.f32 %v5199
    %vm5269 = vweird.f32 %v5263
    %vm5270 = vmor %vm5268, %vm5269
    %v5271 = vsel %vm5270, %v5263, %v5267
    %v5272 = vand.u32 2147483647, %v5199
    %vm5273 = vcmp.eq.f32.partialorder %v5272, 8.507059e+37
    %v5274 = vand.u32 %v5199, 2147483648
    %v5275 = vor.u32 1.1754944e-38, %v5274
    %v5276 = vsel %vm5273, %v5275, %v5271
    %v5277 = vmul.f32 1.0, %v5276
    %v5278 = vrcp.pop %v5200
    %v5279 = vmul.f32 %v5200, %v5278
    %v5280 = vsub.f32 1.0, %v5279
    %v5281 = vmul.f32 %v5278, %v5280
    %v5282 = vadd.f32 %v5278, %v5281
    %vm5283 = vweird.f32 %v5200
    %vm5284 = vweird.f32 %v5278
    %vm5285 = vmor %vm5283, %vm5284
    %v5286 = vsel %vm5285, %v5278, %v5282
    %v5287 = vand.u32 2147483647, %v5200
    %vm5288 = vcmp.eq.f32.partialorder %v5287, 8.507059e+37
    %v5289 = vand.u32 %v5200, 2147483648
    %v5290 = vor.u32 1.1754944e-38, %v5289
    %v5291 = vsel %vm5288, %v5290, %v5286
    %v5292 = vmul.f32 1.0, %v5291
    %v5293 = vrcp.pop %v5201
    %v5294 = vmul.f32 %v5201, %v5293
    %v5295 = vsub.f32 1.0, %v5294
    %v5296 = vmul.f32 %v5293, %v5295
    %v5297 = vadd.f32 %v5293, %v5296
    %vm5298 = vweird.f32 %v5201
    %vm5299 = vweird.f32 %v5293
    %vm5300 = vmor %vm5298, %vm5299
    %v5301 = vsel %vm5300, %v5293, %v5297
    %v5302 = vand.u32 2147483647, %v5201
    %vm5303 = vcmp.eq.f32.partialorder %v5302, 8.507059e+37
    %v5304 = vand.u32 %v5201, 2147483648
    %v5305 = vor.u32 1.1754944e-38, %v5304
    %v5306 = vsel %vm5303, %v5305, %v5301
    %v5307 = vmul.f32 1.0, %v5306
    %v5308 = vrcp.pop %v5202
    %v5309 = vmul.f32 %v5202, %v5308
    %v5310 = vsub.f32 1.0, %v5309
    %v5311 = vmul.f32 %v5308, %v5310
    %v5312 = vadd.f32 %v5308, %v5311
    %vm5313 = vweird.f32 %v5202
    %vm5314 = vweird.f32 %v5308
    %vm5315 = vmor %vm5313, %vm5314
    %v5316 = vsel %vm5315, %v5308, %v5312
    %v5317 = vand.u32 2147483647, %v5202
    %vm5318 = vcmp.eq.f32.partialorder %v5317, 8.507059e+37
    %v5319 = vand.u32 %v5202, 2147483648
    %v5320 = vor.u32 1.1754944e-38, %v5319
    %v5321 = vsel %vm5318, %v5320, %v5316
    %v5322 = vmul.f32 1.0, %v5321
    %v5323 = vmul.f32 %v5163, %v5217
    %v5324 = vmul.f32 %v5164, %v5232
    %v5325 = vmul.f32 %v5165, %v5247
    %v5326 = vmul.f32 %v5166, %v5262
    %v5327 = vmul.f32 %v5167, %v5277
    %v5328 = vmul.f32 %v5168, %v5292
    %v5329 = vmul.f32 %v5169, %v5307
    %v5330 = vmul.f32 %v5170, %v5322
    %5331 = vst [vmem:[%s7] sm:$0xff] %v5323
    %5332 = vst [vmem:[%s7 + $0x8] sm:$0xff] %v5324
    %5333 = vst [vmem:[%s7 + $0x10] sm:$0xff] %v5325
    %5334 = vst [vmem:[%s7 + $0x18] sm:$0xff] %v5326
    %5335 = vst [vmem:[%s7 + $0x20] sm:$0xff] %v5327
    %5336 = vst [vmem:[%s7 + $0x28] sm:$0xff] %v5328
    %5337 = vst [vmem:[%s7 + $0x30] sm:$0xff] %v5329
    %5338 = vst [vmem:[%s7 + $0x38] sm:$0xff] %v5330
    // Predicated region
    $region54: #{unet_upsample_forward.1} parent=1 // pred_check
      _
    $region55: #{unet_upsample_forward.1} parent=1 // pred_check_branch
      %5340 = sbr.rel (0) target = $region57
    $region56: #{unet_upsample_forward.1} parent=1 // pred_region
      _
    $region57: #{unet_upsample_forward.1} parent=1 // pred_fallthru
      _
    // Predicated region
    $region58: #{unet_upsample_forward.1} parent=1 // pred_check
      _
    $region59: #{unet_upsample_forward.1} parent=1 // pred_check_branch
      %5342 = sbr.rel (0) target = $region61
    $region60: #{unet_upsample_forward.1} parent=1 // pred_region
      _
    $region61: #{unet_upsample_forward.1} parent=1 // pred_fallthru
      _
    %5343 = vsyncpa [#allocation3], 1
    %5344 = vsyncpa [#allocation5], 1
    %5345 = vsyncpa [#allocation8], 1
    %5346 = vsyncpa [#allocation11], 1

</llo_original>
